<compile_context>
chip_gen: v6e
topology: v6e:2x2x1
jax: 0.10.0
libtpu: 0.0.40
codegen_flags: <defaults>
</compile_context>

<pallas_src>
import functools
import math

import jax
import jax.numpy as jnp
from jax import lax
from jax.experimental import pallas as pl
from jax.experimental.pallas import tpu as pltpu

_VMEM_LIMIT = 48 * 1024 * 1024


# ---------------------------------------------------------------------------
# Pallas kernels
# ---------------------------------------------------------------------------

def _matmul_bn_act_kernel(a_ref, b_ref, s_ref, c_ref, o_ref, acc_ref, *, relu):
    """Tiled matmul (bf16 in, f32 acc) with fused per-channel scale/bias (+ReLU)."""
    @pl.when(pl.program_id(2) == 0)
    def _init():
        acc_ref[...] = jnp.zeros_like(acc_ref)

    acc_ref[...] += jnp.dot(a_ref[...], b_ref[...],
                            preferred_element_type=jnp.float32)

    @pl.when(pl.program_id(2) == pl.num_programs(2) - 1)
    def _finalize():
        y = acc_ref[...] * s_ref[...] + c_ref[...]
        if relu:
            y = jnp.maximum(y, 0.0)
        o_ref[...] = y.astype(o_ref.dtype)


def _conv3x3s1_kernel(x_ref, w_ref, s_ref, c_ref, o_ref, acc_ref,
                      *, cin, wp, wo, rows, relu):
    """Stride-1 3x3 'same' conv: 9 shifted matmuls over a VMEM-resident flat image.

    x_ref: (1, (H+3)*(W+2), cin) bf16 - whole padded, flattened image (resident).
    w_ref: (9*cin, cout) bf16, s_ref/c_ref: (1, cout) f32.
    o_ref: (1, rows, W, cout) bf16;  acc_ref: (rows*(W+2), cout) f32 scratch.
    Output flat position q (over an (H, W+2) grid) reads input flat q + di*(W+2)+dj.
    """
    tm = rows * wp
    m0 = pl.program_id(1) * tm
    acc_ref[...] = jnp.zeros_like(acc_ref)
    for k in range(9):
        shift = (k // 3) * wp + (k % 3)
        a = x_ref[0, pl.ds(m0 + shift, tm), :]
        acc_ref[...] += jnp.dot(a, w_ref[k * cin:(k + 1) * cin, :],
                                preferred_element_type=jnp.float32)
    y = acc_ref[...] * s_ref[...] + c_ref[...]
    if relu:
        y = jnp.maximum(y, 0.0)
    y = y.astype(o_ref.dtype)
    # Write only the valid W columns of each padded-width output row (no reshape).
    for r in range(rows):
        o_ref[0, r] = y[r * wp:r * wp + wo, :]


def _global_avgpool_kernel(x_ref, o_ref, *, inv_hw):
    """(1, THW, C) bf16 partial-sum into resident (1, 1, C) f32; finalize with 1/HW."""
    t = pl.program_id(1)
    s = jnp.sum(x_ref[0].astype(jnp.float32), axis=0, keepdims=True)   # (1, C)

    @pl.when(t == 0)
    def _():
        o_ref[0] = s

    @pl.when(t > 0)
    def _():
        o_ref[0] = o_ref[0] + s

    @pl.when(t == pl.num_programs(1) - 1)
    def _():
        o_ref[0] = o_ref[0] * inv_hw


def _se_gate_kernel(p_ref, w1_ref, b1_ref, w2_ref, b2_ref, g_ref):
    """Batched SE excitation: sigmoid(relu(p@w1+b1)@w2+b2) for all images at once."""
    p = p_ref[...].astype(jnp.bfloat16)
    h = jnp.dot(p, w1_ref[...], preferred_element_type=jnp.float32) + b1_ref[...]
    h = jnp.maximum(h, 0.0)
    g = jnp.dot(h.astype(jnp.bfloat16), w2_ref[...],
                preferred_element_type=jnp.float32) + b2_ref[...]
    g_ref[...] = jax.nn.sigmoid(g).astype(g_ref.dtype)


def _scale_residual_relu_kernel(x_ref, g_ref, r_ref, o_ref):
    """relu(x * gate + residual) on one (1, THW, C) slab; gate block is (1, 1, C)."""
    x = x_ref[0].astype(jnp.float32)
    r = r_ref[0].astype(jnp.float32)
    o_ref[0] = jnp.maximum(x * g_ref[0] + r, 0.0).astype(o_ref.dtype)


# ---------------------------------------------------------------------------
# Tile selection helpers
# ---------------------------------------------------------------------------

def _round_up(x, m):
    return (x + m - 1) // m * m


def _pick_tiles(M, K, N):
    """Adaptive tiles: big tiles, ragged-M tolerated (<=15% waste), TK=K when possible."""
    if M <= 1024:
        TM = max(8, _round_up(M, 8))          # single (possibly ragged) M tile
    else:
        TM = 128
        for t in (1024, 512, 256):
            if (-M % t) / M <= 0.15:
                TM = t
                break
    if K <= 2560:
        TK, Kp = K, K                          # one K step, no zero padding
    else:
        TK = 0
        for t in (2304, 2048, 1536, 1280, 1152, 1024, 896, 768, 640, 512, 384, 256, 128):
            if K % t == 0:
                TK = t
                break
        if TK:
            Kp = K
        else:                                  # generic fallback (unused for this net)
            Kp = _round_up(K, 128)
            TK = 128
    if N % 512 == 0 and N >= 1024:
        TN = 512
    elif N % 256 == 0:
        TN = 256
    elif N % 128 == 0:
        TN = 128
    else:
        TN = N                                 # small N (e.g. 64): full-width block
    return TM, TK, TN, Kp


def _pick_rows(H, wp):
    """Largest divisor of H so that rows*(W+2) <= 2048 (conv3x3s1 M tile)."""
    best = 1
    for d in range(1, H + 1):
        if H % d == 0 and d * wp <= 2048:
            best = d
    return best


def _pick_hw_tile(HW):
    """Largest divisor of HW that is <= 1024 and a multiple of 8 (SE slab HW tile)."""
    if HW <= 1024:
        return HW
    best = HW
    for d in range(1, HW + 1):
        if HW % d == 0 and d <= 1024 and d % 8 == 0:
            best = d
    return best


# ---------------------------------------------------------------------------
# pallas_call factories (cached so identical shapes reuse the compiled kernel)
# ---------------------------------------------------------------------------

@functools.lru_cache(maxsize=None)
def _get_matmul_fn(M, Kp, N, TM, TK, TN, relu, out_dtype):
    return pl.pallas_call(
        functools.partial(_matmul_bn_act_kernel, relu=relu),
        out_shape=jax.ShapeDtypeStruct((M, N), out_dtype),
        grid_spec=pltpu.PrefetchScalarGridSpec(
            num_scalar_prefetch=0,
            grid=(pl.cdiv(M, TM), N // TN, Kp // TK),
            in_specs=[
                pl.BlockSpec((TM, TK), lambda i, j, k: (i, k)),
                pl.BlockSpec((TK, TN), lambda i, j, k: (k, j)),
                pl.BlockSpec((1, TN), lambda i, j, k: (0, j)),
                pl.BlockSpec((1, TN), lambda i, j, k: (0, j)),
            ],
            out_specs=pl.BlockSpec((TM, TN), lambda i, j, k: (i, j)),
            scratch_shapes=[pltpu.VMEM((TM, TN), jnp.float32)],
        ),
        compiler_params=pltpu.CompilerParams(
            dimension_semantics=("parallel", "parallel", "arbitrary"),
            vmem_limit_bytes=_VMEM_LIMIT,
        ),
    )


@functools.lru_cache(maxsize=None)
def _get_conv3x3s1_fn(B, H, W, C, Cout, rows, relu):
    wp = W + 2
    lp = (H + 3) * wp
    tm = rows * wp
    n_tiles = H // rows
    return pl.pallas_call(
        functools.partial(_conv3x3s1_kernel, cin=C, wp=wp, wo=W, rows=rows, relu=relu),
        out_shape=jax.ShapeDtypeStruct((B, H, W, Cout), jnp.bfloat16),
        grid_spec=pltpu.PrefetchScalarGridSpec(
            num_scalar_prefetch=0,
            grid=(B, n_tiles),
            in_specs=[
                pl.BlockSpec((1, lp, C), lambda b, r: (b, 0, 0)),      # resident image
                pl.BlockSpec((9 * C, Cout), lambda b, r: (0, 0)),
                pl.BlockSpec((1, Cout), lambda b, r: (0, 0)),
                pl.BlockSpec((1, Cout), lambda b, r: (0, 0)),
            ],
            out_specs=pl.BlockSpec((1, rows, W, Cout), lambda b, r: (b, r, 0, 0)),
            scratch_shapes=[pltpu.VMEM((tm, Cout), jnp.float32)],
        ),
        compiler_params=pltpu.CompilerParams(
            dimension_semantics=("parallel", "parallel"),
            vmem_limit_bytes=_VMEM_LIMIT,
        ),
    )


@functools.lru_cache(maxsize=None)
def _get_avgpool_fn(B, HW, C, THW):
    return pl.pallas_call(
        functools.partial(_global_avgpool_kernel, inv_hw=1.0 / HW),
        out_shape=jax.ShapeDtypeStruct((B, 1, C), jnp.float32),
        grid_spec=pltpu.PrefetchScalarGridSpec(
            num_scalar_prefetch=0,
            grid=(B, HW // THW),
            in_specs=[pl.BlockSpec((1, THW, C), lambda b, t: (b, t, 0))],
            out_specs=pl.BlockSpec((1, 1, C), lambda b, t: (b, 0, 0)),
        ),
        compiler_params=pltpu.CompilerParams(
            dimension_semantics=("parallel", "arbitrary"),
            vmem_limit_bytes=_VMEM_LIMIT,
        ),
    )


@functools.lru_cache(maxsize=None)
def _get_se_gate_fn(B, C, Cr):
    return pl.pallas_call(
        _se_gate_kernel,
        out_shape=jax.ShapeDtypeStruct((B, C), jnp.float32),
        grid_spec=pltpu.PrefetchScalarGridSpec(
            num_scalar_prefetch=0,
            grid=(1,),
            in_specs=[
                pl.BlockSpec((B, C), lambda i: (0, 0)),
                pl.BlockSpec((C, Cr), lambda i: (0, 0)),
                pl.BlockSpec((1, Cr), lambda i: (0, 0)),
                pl.BlockSpec((Cr, C), lambda i: (0, 0)),
                pl.BlockSpec((1, C), lambda i: (0, 0)),
            ],
            out_specs=pl.BlockSpec((B, C), lambda i: (0, 0)),
        ),
        compiler_params=pltpu.CompilerParams(
            dimension_semantics=("arbitrary",),
            vmem_limit_bytes=_VMEM_LIMIT,
        ),
    )


@functools.lru_cache(maxsize=None)
def _get_scale_residual_fn(B, HW, C, THW):
    return pl.pallas_call(
        _scale_residual_relu_kernel,
        out_shape=jax.ShapeDtypeStruct((B, HW, C), jnp.bfloat16),
        grid_spec=pltpu.PrefetchScalarGridSpec(
            num_scalar_prefetch=0,
            grid=(B, HW // THW),
            in_specs=[
                pl.BlockSpec((1, THW, C), lambda b, t: (b, t, 0)),
                pl.BlockSpec((1, 1, C), lambda b, t: (b, 0, 0)),
                pl.BlockSpec((1, THW, C), lambda b, t: (b, t, 0)),
            ],
            out_specs=pl.BlockSpec((1, THW, C), lambda b, t: (b, t, 0)),
        ),
        compiler_params=pltpu.CompilerParams(
            dimension_semantics=("parallel", "parallel"),
            vmem_limit_bytes=_VMEM_LIMIT,
        ),
    )


# ---------------------------------------------------------------------------
# Wrappers (glue: padding, im2col for strided convs, reshapes)
# ---------------------------------------------------------------------------

def matmul_bias_act(a, b, scale, bias, relu, out_dtype=jnp.bfloat16):
    """a: (M, K) bf16, b: (K, N) bf16, scale/bias: (N,) f32 -> act(a@b*scale+bias)."""
    M, K = a.shape
    K2, N = b.shape
    assert K == K2
    TM, TK, TN, Kp = _pick_tiles(M, K, N)
    if Kp != K:   # generic fallback only; never taken for this network
        a = jnp.pad(a, ((0, 0), (0, Kp - K)))
        b = jnp.pad(b, ((0, Kp - K), (0, 0)))
    fn = _get_matmul_fn(M, Kp, N, TM, TK, TN, bool(relu), out_dtype)
    return fn(a, b, scale.reshape(1, N), bias.reshape(1, N))


def _conv3x3_s1_same(x, wm, scale, bias, relu):
    """Stride-1 3x3 pad-1 conv without im2col (shifted-matmul kernel)."""
    B, H, W, C = x.shape
    Cout = wm.shape[1]
    wp = W + 2
    rows = _pick_rows(H, wp)
    xp = jnp.pad(x.astype(jnp.bfloat16),
                 ((0, 0), (1, 2), (1, 1), (0, 0))).reshape(B, (H + 3) * wp, C)
    fn = _get_conv3x3s1_fn(B, H, W, C, Cout, rows, bool(relu))
    return fn(xp, wm, scale.reshape(1, Cout), bias.reshape(1, Cout))


def _conv_single(x, wm, scale, bias, kh, kw, stride, pad, relu):
    """NHWC conv (single group) via Pallas matmul; 1x1 and stride-1 3x3 avoid im2col."""
    B, H, W, C = x.shape
    cout = wm.shape[1]

    if kh == 3 and kw == 3 and stride == 1 and pad == 1:
        return _conv3x3_s1_same(x, wm, scale, bias, relu)

    if kh == 1 and kw == 1 and pad == 0:
        xs = x[:, ::stride, ::stride, :] if stride > 1 else x
        Ho, Wo = xs.shape[1], xs.shape[2]
        a = xs.reshape(B * Ho * Wo, C).astype(jnp.bfloat16)
    else:
        # TODO(synk): strided 3x3 convs still materialize an im2col patch matrix in HBM.
        xp = x.astype(jnp.bfloat16)
        if pad > 0:
            xp = jnp.pad(xp, ((0, 0), (pad, pad), (pad, pad), (0, 0)))
        Hp, Wp = H + 2 * pad, W + 2 * pad
        Ho = (Hp - kh) // stride + 1
        Wo = (Wp - kw) // stride + 1
        patches = []
        for i in range(kh):
            for j in range(kw):
                patches.append(
                    lax.slice(xp,
                              (0, i, j, 0),
                              (B, i + (Ho - 1) * stride + 1,
                               j + (Wo - 1) * stride + 1, C),
                              (1, stride, stride, 1)))
        a = jnp.concatenate(patches, axis=-1).reshape(B * Ho * Wo, kh * kw * C)

    y = matmul_bias_act(a, wm, scale, bias, relu)
    return y.reshape(B, Ho, Wo, cout)


@functools.partial(jax.jit,
                   static_argnames=("kh", "kw", "stride", "pad", "groups", "relu"))
def conv2d_bn_act(x, wm, scale, bias, *, kh, kw, stride, pad, groups=1, relu=True):
    """x: (B,H,W,Cin), wm: (kh*kw*(Cin//groups), Cout) bf16, scale/bias: (Cout,) f32."""
    if groups > 1:
        # TODO(synk): grouped conv via unrolled per-group loop (groups=1 for this config).
        cg = x.shape[3] // groups
        cog = wm.shape[1] // groups
        outs = [
            _conv_single(x[..., g * cg:(g + 1) * cg],
                         wm[:, g * cog:(g + 1) * cog],
                         scale[g * cog:(g + 1) * cog],
                         bias[g * cog:(g + 1) * cog],
                         kh, kw, stride, pad, relu)
            for g in range(groups)
        ]
        return jnp.concatenate(outs, axis=-1)
    return _conv_single(x, wm, scale, bias, kh, kw, stride, pad, relu)


def apply_conv(x, c, relu=True):
    return conv2d_bn_act(x, c["wm"], c["scale"], c["bias"],
                         kh=c["kh"], kw=c["kw"], stride=c["stride"],
                         pad=c["pad"], groups=c["groups"], relu=relu)


@jax.jit
def se_residual_relu(x, residual, w1, b1, w2, b2):
    """relu(sigmoid(fc2(relu(fc1(mean(x))))) * x + residual), all-bf16 activations."""
    B, H, W, C = x.shape
    HW = H * W
    Cr = w1.shape[1]
    thw = _pick_hw_tile(HW)
    x_slab = x.reshape(B, HW, C)
    pooled = _get_avgpool_fn(B, HW, C, thw)(x_slab).reshape(B, C)        # squeeze
    gate = _get_se_gate_fn(B, C, Cr)(pooled, w1, b1, w2, b2)             # excitation
    gate = gate.reshape(B, 1, C)
    out = _get_scale_residual_fn(B, HW, C, thw)(
        x_slab, gate, residual.reshape(B, HW, C))
    return out.reshape(B, H, W, C)


def global_avgpool(x):
    """x: (B, H, W, C) -> (B, C) mean over H*W (AvgPool2d(7,1) on a 7x7 map)."""
    B, H, W, C = x.shape
    HW = H * W
    return _get_avgpool_fn(B, HW, C, _pick_hw_tile(HW))(
        x.reshape(B, HW, C)).reshape(B, C)


def maxpool2d_ceil(x, k=3, s=2):
    # TODO(synk): max-pool kept in plain JAX glue (lax.reduce_window); minor op.
    B, H, W, C = x.shape

    def out_dim(d):
        o = math.ceil((d - k) / s) + 1
        if (o - 1) * s >= d:      # PyTorch ceil_mode: window must start inside input
            o -= 1
        return o

    Ho, Wo = out_dim(H), out_dim(W)
    ph = max(0, (Ho - 1) * s + k - H)
    pw = max(0, (Wo - 1) * s + k - W)
    neg_inf = jnp.asarray(-jnp.inf, dtype=x.dtype)
    return lax.reduce_window(x, neg_inf, lax.max,
                             (1, k, k, 1), (1, s, s, 1),
                             [(0, 0), (0, ph), (0, pw), (0, 0)])


# ---------------------------------------------------------------------------
# Parameter construction (deterministic synthetic weights; eval-mode BN folded;
# conv weights pre-reshaped to matmul form and pre-cast to bf16 once).
# ---------------------------------------------------------------------------

EXPANSION = 4   # SEBottleneck.expansion


def _init_conv(key, kh, kw, cin, cout):
    fan_in = kh * kw * cin
    return jax.random.normal(key, (kh, kw, cin, cout), jnp.float32) * (2.0 / fan_in) ** 0.5


def _init_bn(key, c):
    k1, k2, k3, k4 = jax.random.split(key, 4)
    gamma = 1.0 + 0.1 * jax.random.normal(k1, (c,), jnp.float32)
    beta = 0.1 * jax.random.normal(k2, (c,), jnp.float32)
    mean = 0.1 * jax.random.normal(k3, (c,), jnp.float32)
    var = jnp.abs(1.0 + 0.1 * jax.random.normal(k4, (c,), jnp.float32))
    scale = gamma / jnp.sqrt(var + 1e-5)
    bias = beta - mean * scale
    return scale, bias


def _make_conv(nk, kh, kw, cin, cout, stride, pad, groups=1):
    w = _init_conv(nk(), kh, kw, cin // groups, cout)
    scale, bias = _init_bn(nk(), cout)
    return dict(
        wm=w.reshape(kh * kw * (cin // groups), cout).astype(jnp.bfloat16),
        kh=kh, kw=kw, stride=stride, pad=pad, groups=groups,
        scale=scale, bias=bias)


def make_params(key, layers=(1, 1, 1, 1), groups=1, reduction=16, inplanes=64):
    keys = iter(jax.random.split(key, 256))
    nk = lambda: next(keys)
    p = {"groups": groups}

    # layer0 (input_3x3=True branch): 3x(conv3x3 + bn + relu), then maxpool.
    p["l0"] = [
        _make_conv(nk, 3, 3, 3, 64, 2, 1),
        _make_conv(nk, 3, 3, 64, 64, 1, 1),
        _make_conv(nk, 3, 3, 64, inplanes, 1, 1),
    ]

    blocks = []
    inp = inplanes
    layer_cfg = [
        (64, layers[0], 1, 1, 0),   # layer1: downsample_kernel_size=1, padding=0
        (128, layers[1], 2, 3, 1),  # layer2..4: downsample_kernel_size=3, padding=1
        (256, layers[2], 2, 3, 1),
        (512, layers[3], 2, 3, 1),
    ]
    for planes, nblocks, stride, dks, dpad in layer_cfg:
        layer_blocks = []
        for bi in range(nblocks):
            s = stride if bi == 0 else 1
            need_down = (bi == 0) and (s != 1 or inp != planes * EXPANSION)
            c_out = planes * EXPANSION
            cr = c_out // reduction
            b = {
                "conv1": _make_conv(nk, 1, 1, inp, planes * 2, 1, 0),
                "conv2": _make_conv(nk, 3, 3, planes * 2, c_out, s, 1, groups),
                "conv3": _make_conv(nk, 1, 1, c_out, c_out, 1, 0),
                "se_w1": (jax.random.normal(nk(), (c_out, cr), jnp.float32)
                          * (1.0 / c_out) ** 0.5).astype(jnp.bfloat16),
                "se_b1": jnp.zeros((1, cr), jnp.float32),
                "se_w2": (jax.random.normal(nk(), (cr, c_out), jnp.float32)
                          * (1.0 / cr) ** 0.5).astype(jnp.bfloat16),
                "se_b2": jnp.zeros((1, c_out), jnp.float32),
            }
            if need_down:
                b["down"] = _make_conv(nk, dks, dks, inp, c_out, s, dpad)
            layer_blocks.append(b)
            inp = planes * EXPANSION
        blocks.append(layer_blocks)
    p["blocks"] = blocks

    # head: last_linear (512*expansion -> 1000), last_linear2 (1000 -> 4)
    p["fc1_w"] = jax.random.normal(nk(), (512 * EXPANSION, 1000), jnp.float32) * 0.02
    p["fc1_b"] = jnp.zeros((1000,), jnp.float32)
    p["fc2_w"] = jax.random.normal(nk(), (1000, 4), jnp.float32) * 0.01  # .normal_(0, 0.01)
    p["fc2_b"] = jnp.zeros((4,), jnp.float32)                            # .fill_(0.0)
    return p


# ---------------------------------------------------------------------------
# Forward pass
# ---------------------------------------------------------------------------

def se_bottleneck(x, b):
    out = apply_conv(x, b["conv1"], relu=True)
    out = apply_conv(out, b["conv2"], relu=True)
    out = apply_conv(out, b["conv3"], relu=False)
    residual = apply_conv(x, b["down"], relu=False) if "down" in b else x
    return se_residual_relu(out, residual,
                            b["se_w1"], b["se_b1"], b["se_w2"], b["se_b2"])


def fb_senet_forward(params, x_nchw):
    # layout: accept NCHW (PyTorch convention), compute in NHWC.
    x = jnp.transpose(x_nchw.astype(jnp.float32), (0, 2, 3, 1))

    # layer0
    for c in params["l0"]:
        x = apply_conv(x, c, relu=True)
    x = maxpool2d_ceil(x, 3, 2)

    # layer1..layer4
    for layer_blocks in params["blocks"]:
        for b in layer_blocks:
            x = se_bottleneck(x, b)

    # logits(): AvgPool2d(7, stride=1) on a 7x7 map == global average pool.
    B, H, W, C = x.shape
    assert H == 7 and W == 7, "fb_SENet head requires a 7x7 final feature map (224x224 input)"
    feat = global_avgpool(x).astype(jnp.float32)              # (B, 512*expansion)

    # TODO(synk): dropout implemented as eval-mode identity (no RNG in inference forward).
    # Head FCs are tiny (M=B, N=1000/4): plain jnp.dot beats a padded Pallas matmul.
    y = feat @ params["fc1_w"] + params["fc1_b"]
    y = y @ params["fc2_w"] + params["fc2_b"]
    return y                                                  # (B, 4)


# ---------------------------------------------------------------------------

if __name__ == "__main__":
    key = jax.random.PRNGKey(0)
    pkey, xkey = jax.random.split(key)
    params = make_params(pkey, layers=(1, 1, 1, 1), groups=1, reduction=16, inplanes=64)
    # 224x224 input: the module hard-codes AvgPool2d(7) + Linear(512*expansion, 1000),
    # which requires the layer4 feature map to be exactly 7x7.
    x = jax.random.normal(xkey, (2, 3, 224, 224), jnp.float32)
    out = fb_senet_forward(params, x)
    out = jax.block_until_ready(out)
    assert out.shape == (2, 4), out.shape
    print("KERNEL_OK")
</pallas_src>

<mosaic_0001>
module attributes {stable_mosaic.version = 11 : i64} {
  func.func @_matmul_bn_act_kernel(%arg0: i32, %arg1: i32, %arg2: i32, %arg3: memref<1024x27xbf16, #tpu.memory_space<vmem>>, %arg4: memref<27x64xbf16, #tpu.memory_space<vmem>>, %arg5: memref<1x64xf32, #tpu.memory_space<vmem>>, %arg6: memref<1x64xf32, #tpu.memory_space<vmem>>, %arg7: memref<1024x64xbf16, #tpu.memory_space<vmem>>, %arg8: memref<1024x64xf32, #tpu.memory_space<vmem>>) attributes {dimension_semantics = [#tpu.dimension_semantics<parallel>, #tpu.dimension_semantics<parallel>, #tpu.dimension_semantics<arbitrary>], iteration_bounds = array<i64: 25, 1, 1>, scalar_prefetch = 0 : i64, scratch_operands = 1 : i64, tpu.core_type = #tpu.core_type<tc>, window_params = [{transform_indices = @transform_0, window_bounds = array<i64: 1024, 27>}, {transform_indices = @transform_1, window_bounds = array<i64: 27, 64>}, {transform_indices = @transform_2, window_bounds = array<i64: 1, 64>}, {transform_indices = @transform_3, window_bounds = array<i64: 1, 64>}, {transform_indices = @transform_4, window_bounds = array<i64: 1024, 64>}]} {
    %c0_i32 = arith.constant 0 : i32
    %0 = arith.cmpi eq, %arg2, %c0_i32 : i32
    %1 = arith.extui %0 : i1 to i32
    %c0_i32_0 = arith.constant 0 : i32
    %2 = arith.cmpi ne, %1, %c0_i32_0 : i32
    scf.if %2 {
      %cst_10 = arith.constant 0.000000e+00 : f32
      %12 = vector.broadcast %cst_10 : f32 to vector<1024x64xf32>
      %c0_11 = arith.constant 0 : index
      %c0_12 = arith.constant 0 : index
      %13 = vector.load %arg8[%c0_11, %c0_12] : memref<1024x64xf32, #tpu.memory_space<vmem>>, vector<1024x64xf32>
      tpu.vector_store %arg8[%c0_11, %c0_12], %12 {strides = array<i32>} : memref<1024x64xf32, #tpu.memory_space<vmem>>, vector<1024x64xf32>,
    } else {
    }
    %c0 = arith.constant 0 : index
    %c0_1 = arith.constant 0 : index
    %3 = vector.load %arg8[%c0, %c0_1] : memref<1024x64xf32, #tpu.memory_space<vmem>>, vector<1024x64xf32>
    %c0_2 = arith.constant 0 : index
    %c0_3 = arith.constant 0 : index
    %4 = vector.load %arg3[%c0_2, %c0_3] : memref<1024x27xbf16, #tpu.memory_space<vmem>>, vector<1024x27xbf16>
    %c0_4 = arith.constant 0 : index
    %c0_5 = arith.constant 0 : index
    %5 = vector.load %arg4[%c0_4, %c0_5] : memref<27x64xbf16, #tpu.memory_space<vmem>>, vector<27x64xbf16>
    %cst = arith.constant dense<0.000000e+00> : vector<1024x64xf32>
    %6 = tpu.matmul %4, %5, %cst {dimension_numbers = #tpu.dot_dimension_numbers<[1], [0], [0], [1], [0, 0, 1, 1], [], []>} : vector<1024x27xbf16>, vector<27x64xbf16>, vector<1024x64xf32> -> vector<1024x64xf32>
    %7 = arith.addf %3, %6 : vector<1024x64xf32>
    %c0_6 = arith.constant 0 : index
    %c0_7 = arith.constant 0 : index
    %8 = vector.load %arg8[%c0_6, %c0_7] : memref<1024x64xf32, #tpu.memory_space<vmem>>, vector<1024x64xf32>
    tpu.vector_store %arg8[%c0_6, %c0_7], %7 {strides = array<i32>} : memref<1024x64xf32, #tpu.memory_space<vmem>>, vector<1024x64xf32>,
    %c0_i32_8 = arith.constant 0 : i32
    %9 = arith.cmpi eq, %arg2, %c0_i32_8 : i32
    %10 = arith.extui %9 : i1 to i32
    %c0_i32_9 = arith.constant 0 : i32
    %11 = arith.cmpi ne, %10, %c0_i32_9 : i32
    scf.if %11 {
      %c0_10 = arith.constant 0 : index
      %c0_11 = arith.constant 0 : index
      %12 = vector.load %arg8[%c0_10, %c0_11] : memref<1024x64xf32, #tpu.memory_space<vmem>>, vector<1024x64xf32>
      %c0_12 = arith.constant 0 : index
      %c0_13 = arith.constant 0 : index
      %13 = vector.load %arg5[%c0_12, %c0_13] : memref<1x64xf32, #tpu.memory_space<vmem>>, vector<1x64xf32>
      %14 = vector.broadcast %13 : vector<1x64xf32> to vector<1024x64xf32>
      %15 = arith.mulf %12, %14 : vector<1024x64xf32>
      %c0_14 = arith.constant 0 : index
      %c0_15 = arith.constant 0 : index
      %16 = vector.load %arg6[%c0_14, %c0_15] : memref<1x64xf32, #tpu.memory_space<vmem>>, vector<1x64xf32>
      %17 = vector.broadcast %16 : vector<1x64xf32> to vector<1024x64xf32>
      %18 = arith.addf %15, %17 : vector<1024x64xf32>
      %cst_16 = arith.constant 0.000000e+00 : f32
      %19 = vector.broadcast %cst_16 : f32 to vector<1024x64xf32>
      %20 = arith.maximumf %18, %19 : vector<1024x64xf32>
      %21 = arith.truncf %20 : vector<1024x64xf32> to vector<1024x64xbf16>
      %c0_17 = arith.constant 0 : index
      %c0_18 = arith.constant 0 : index
      %22 = vector.load %arg7[%c0_17, %c0_18] : memref<1024x64xbf16, #tpu.memory_space<vmem>>, vector<1024x64xbf16>
      tpu.vector_store %arg7[%c0_17, %c0_18], %21 {strides = array<i32>} : memref<1024x64xbf16, #tpu.memory_space<vmem>>, vector<1024x64xbf16>,
    } else {
    }
    return
  }
  func.func @transform_0(%arg0: i32, %arg1: i32, %arg2: i32) -> (i32, i32) {
    %c0_i32 = arith.constant 0 : i32
    return %arg0, %arg2 : i32, i32
  }
  func.func @transform_1(%arg0: i32, %arg1: i32, %arg2: i32) -> (i32, i32) {
    %c0_i32 = arith.constant 0 : i32
    return %arg2, %arg1 : i32, i32
  }
  func.func @transform_2(%arg0: i32, %arg1: i32, %arg2: i32) -> (i32, i32) {
    %c0_i32 = arith.constant 0 : i32
    %c0_i32_0 = arith.constant 0 : i32
    return %c0_i32, %arg1 : i32, i32
  }
  func.func @transform_3(%arg0: i32, %arg1: i32, %arg2: i32) -> (i32, i32) {
    %c0_i32 = arith.constant 0 : i32
    %c0_i32_0 = arith.constant 0 : i32
    return %c0_i32, %arg1 : i32, i32
  }
  func.func @transform_4(%arg0: i32, %arg1: i32, %arg2: i32) -> (i32, i32) {
    %c0_i32 = arith.constant 0 : i32
    return %arg0, %arg1 : i32, i32
  }
}

</mosaic_0001>

<llo_original>
// kernel: conv2d_bn_act.1
$region0: #{conv2d_bn_act.1}
  #allocation0 [shape = 'u32[]', space=smem, size = 0x4, offset = 0x4, fixed_abs, tag = 'smem constant byte address 0x4 - core index']
  #allocation1 [shape = 'u32[144,128]{1,0:T(1,128)}', space=vmem, size = 0x12000, scoped, tag = 'internal scratch']
  #allocation2 [shape = 'f32[1024,64]{1,0:T(8,128)}', space=vmem, size = 0x80000, scoped, tag = 'scratch operand']
  %s0 = inlined_call_operand.vmem [shape: bf16[25088,27], index: 0, kind: input, shape index: {}]
  %s1 = inlined_call_operand.vmem [shape: bf16[27,64], index: 1, kind: input, shape index: {}]
  %s2 = inlined_call_operand.vmem [shape: f32[1,64], index: 2, kind: input, shape index: {}]
  %s3 = inlined_call_operand.vmem [shape: f32[1,64], index: 3, kind: input, shape index: {}]
  %s4 = inlined_call_operand.vmem [shape: bf16[25088,64], index: 4, kind: output, shape index: {}]
  %s5 = sld [smem:[#allocation0]]
  $region101: #{conv2d_bn_act.1} parent=0
    _
  %s7 = ssub.s32 1, %s5
  %s8 = scalar_select 0, %s7, %s5
  $region1: #{conv2d_bn_act.1} parent=0
    #allocation3 [shape = 'u8[524288]{0}', space=vmem, size = 0x80000, scoped, tag = 'output window, operand 0']
    loop: start=0, step=1, limit=27
    $region2: #{conv2d_bn_act.1} parent=1 // loop_pre_header
      _
    $region3: #{conv2d_bn_act.1} parent=1 // loop_header
      %s10 = sphi 0, %s14
      %p11 = scmp.ge.s32.totalorder %s10, 27
      %s17 = sphi 0, %s36
      %s18 = sphi 0, %s32
      %s19 = sphi 0, %s28
      %s20 = sphi 0, %s17
      %s21 = sphi 0, %s18
      %s22 = sphi 0, %s19
      %s23 = sphi 0, %s20
      %s24 = sphi 0, %s21
      %s25 = sphi 0, %s22
      %s41 = sphi 0, %s43
      %s44 = sphi 0, %s41
      %s45 = sphi 0, %s44
      %s61 = sphi 0, %s45
      %s69 = sphi 0, %s71
      %s72 = sphi 0, %s69
      %s73 = sphi 0, %s72
      %s89 = sphi 0, %s73
      %s95 = sphi 0, %s97
      %s98 = sphi 0, %s95
      %s99 = sphi 0, %s98
      %s115 = sphi 0, %s99
      %s121 = sphi 0, %s123
      %s124 = sphi 0, %s121
      %s125 = sphi 0, %s124
      %s141 = sphi 0, %s125
      %s149 = sphi 0, %s151
      %s152 = sphi 0, %s149
      %s153 = sphi 0, %s152
      %s169 = sphi 0, %s153
    $region4: #{conv2d_bn_act.1} parent=1 // loop_header_branch
      %13 = sbr.rel (%p11) target = $region8
    $region5: #{conv2d_bn_act.1} parent=1 // loop_body
      %s15 = ssub.s32 %s10, 1
      %s16 = ssub.s32 %s10, 2
      %s26 = sadd.s32 1, %s19
      %p27 = scmp.ge.s32.totalorder %s26, 1
      %s28 = scalar_select %p27, 0, %s26
      %s29 = sadd.s32 1, %s18
      %s30 = scalar_select %p27, %s29, %s18
      %p31 = scmp.ge.s32.totalorder %s30, 1
      %s32 = scalar_select %p31, 0, %s30
      %s33 = sadd.s32 1, %s17
      %s34 = scalar_select %p31, %s33, %s17
      %p35 = scmp.ge.s32.totalorder %s34, 25
      %s36 = scalar_select %p35, 0, %s34
      %s37 = ssub.s32 %s17, %s36
      %s38 = ssub.s32 %s19, %s28
      %s39 = sor.u32 %s37, %s38
      %p40 = scmp.eq.s32.totalorder %s39, 0
      %s42 = sadd.s32 %s41, 1
      %s43 = scalar_select %p40, %s41, %s42
      %p46 = pneg %p40
      %p47 = scmp.eq.s32.totalorder %s10, 24
      %p48 = por %p46, %p47
      %p49 = scmp.ne.s32.totalorder %s41, %s44
      %p50 = scmp.eq.s32.totalorder %s10, 0
      %p51 = por %p49, %p50
      %p52 = scmp.ne.s32.totalorder %s41, %s44
      %p53 = scmp.eq.s32.totalorder %s15, 24
      %p54 = por %p52, %p53
      %p55 = scmp.ne.s32.totalorder %s44, %s45
      %p56 = scmp.eq.s32.totalorder %s15, 0
      %p57 = por %p55, %p56
      %p58 = scmp.ne.s32.totalorder %s44, %s45
      %p59 = scmp.eq.s32.totalorder %s16, 24
      %p60 = por %p58, %p59
      %p62 = scmp.ne.s32.totalorder %s45, %s61
      %p63 = scmp.eq.s32.totalorder %s16, 0
      %p64 = por %p62, %p63
      %s65 = ssub.s32 %s19, %s28
      %s66 = ssub.s32 %s18, %s32
      %s67 = sor.u32 %s65, %s66
      %p68 = scmp.eq.s32.totalorder %s67, 0
      %s70 = sadd.s32 %s69, 1
      %s71 = scalar_select %p68, %s69, %s70
      %p74 = pneg %p68
      %p75 = scmp.eq.s32.totalorder %s10, 24
      %p76 = por %p74, %p75
      %p77 = scmp.ne.s32.totalorder %s69, %s72
      %p78 = scmp.eq.s32.totalorder %s10, 0
      %p79 = por %p77, %p78
      %p80 = scmp.ne.s32.totalorder %s69, %s72
      %p81 = scmp.eq.s32.totalorder %s15, 24
      %p82 = por %p80, %p81
      %p83 = scmp.ne.s32.totalorder %s72, %s73
      %p84 = scmp.eq.s32.totalorder %s15, 0
      %p85 = por %p83, %p84
      %p86 = scmp.ne.s32.totalorder %s72, %s73
      %p87 = scmp.eq.s32.totalorder %s16, 24
      %p88 = por %p86, %p87
      %p90 = scmp.ne.s32.totalorder %s73, %s89
      %p91 = scmp.eq.s32.totalorder %s16, 0
      %p92 = por %p90, %p91
      %s93 = ssub.s32 %s18, %s32
      %p94 = scmp.eq.s32.totalorder %s93, 0
      %s96 = sadd.s32 %s95, 1
      %s97 = scalar_select %p94, %s95, %s96
      %p100 = pneg %p94
      %p101 = scmp.eq.s32.totalorder %s10, 24
      %p102 = por %p100, %p101
      %p103 = scmp.ne.s32.totalorder %s95, %s98
      %p104 = scmp.eq.s32.totalorder %s10, 0
      %p105 = por %p103, %p104
      %p106 = scmp.ne.s32.totalorder %s95, %s98
      %p107 = scmp.eq.s32.totalorder %s15, 24
      %p108 = por %p106, %p107
      %p109 = scmp.ne.s32.totalorder %s98, %s99
      %p110 = scmp.eq.s32.totalorder %s15, 0
      %p111 = por %p109, %p110
      %p112 = scmp.ne.s32.totalorder %s98, %s99
      %p113 = scmp.eq.s32.totalorder %s16, 24
      %p114 = por %p112, %p113
      %p116 = scmp.ne.s32.totalorder %s99, %s115
      %p117 = scmp.eq.s32.totalorder %s16, 0
      %p118 = por %p116, %p117
      %s119 = ssub.s32 %s18, %s32
      %p120 = scmp.eq.s32.totalorder %s119, 0
      %s122 = sadd.s32 %s121, 1
      %s123 = scalar_select %p120, %s121, %s122
      %p126 = pneg %p120
      %p127 = scmp.eq.s32.totalorder %s10, 24
      %p128 = por %p126, %p127
      %p129 = scmp.ne.s32.totalorder %s121, %s124
      %p130 = scmp.eq.s32.totalorder %s10, 0
      %p131 = por %p129, %p130
      %p132 = scmp.ne.s32.totalorder %s121, %s124
      %p133 = scmp.eq.s32.totalorder %s15, 24
      %p134 = por %p132, %p133
      %p135 = scmp.ne.s32.totalorder %s124, %s125
      %p136 = scmp.eq.s32.totalorder %s15, 0
      %p137 = por %p135, %p136
      %p138 = scmp.ne.s32.totalorder %s124, %s125
      %p139 = scmp.eq.s32.totalorder %s16, 24
      %p140 = por %p138, %p139
      %p142 = scmp.ne.s32.totalorder %s125, %s141
      %p143 = scmp.eq.s32.totalorder %s16, 0
      %p144 = por %p142, %p143
      %s145 = ssub.s32 %s17, %s36
      %s146 = ssub.s32 %s18, %s32
      %s147 = sor.u32 %s145, %s146
      %p148 = scmp.eq.s32.totalorder %s147, 0
      %s150 = sadd.s32 %s149, 1
      %s151 = scalar_select %p148, %s149, %s150
      %p154 = pneg %p148
      %p155 = scmp.eq.s32.totalorder %s10, 24
      %p156 = por %p154, %p155
      %p157 = scmp.ne.s32.totalorder %s149, %s152
      %p158 = scmp.eq.s32.totalorder %s10, 0
      %p159 = por %p157, %p158
      %p160 = scmp.ne.s32.totalorder %s149, %s152
      %p161 = scmp.eq.s32.totalorder %s15, 24
      %p162 = por %p160, %p161
      %p163 = scmp.ne.s32.totalorder %s152, %s153
      %p164 = scmp.eq.s32.totalorder %s15, 0
      %p165 = por %p163, %p164
      %p166 = scmp.ne.s32.totalorder %s152, %s153
      %p167 = scmp.eq.s32.totalorder %s16, 24
      %p168 = por %p166, %p167
      %p170 = scmp.ne.s32.totalorder %s153, %s169
      %p171 = scmp.eq.s32.totalorder %s16, 0
      %p172 = por %p170, %p171
      %p173 = scmp.le.s32.totalorder 1, %s10
      %p174 = scmp.lt.s32.totalorder %s10, 26
      %p175 = pnand %p173, %p174
      %p176 = pneg %p175
      // Predicated region
      $region9: #{conv2d_bn_act.1} parent=5 // pred_check
        _
      $region10: #{conv2d_bn_act.1} parent=5 // pred_check_branch
        %178 = sbr.rel (%p175) target = $region12
      $region11: #{conv2d_bn_act.1} parent=5 // pred_region
        %s179 = ssub.s32 %s10, 1
        // Predicated region
        $region13: #{conv2d_bn_act.1} parent=11 // pred_check
          %p180 = pneg %p85
        $region14: #{conv2d_bn_act.1} parent=11 // pred_check_branch
          %182 = sbr.rel (%p180) target = $region16
        $region15: #{conv2d_bn_act.1} parent=11 // pred_region
          %s183 = smul.u32 4, %s22
          %p184 = scmp.lt.s32.totalorder %s183, 3
          %s185 = scalar_select %p184, %s183, 3
          %p186 = scmp.lt.s32.totalorder %s21, 0
          %s187 = scalar_select %p186, %s21, 0
          %s188 = sadd.s32 %s187, %s185
          %s189 = smul.addr %s188, 4
          %s190 = scalar_lea.vmem %s1, %s189
          %s191 = smul.u32 4, %s22
        $region16: #{conv2d_bn_act.1} parent=11 // pred_fallthru
          _
        // Predicated region
        $region17: #{conv2d_bn_act.1} parent=11 // pred_check
          %p192 = pneg %p111
        $region18: #{conv2d_bn_act.1} parent=11 // pred_check_branch
          %194 = sbr.rel (%p192) target = $region20
        $region19: #{conv2d_bn_act.1} parent=11 // pred_region
          %p195 = scmp.lt.s32.totalorder %s21, 0
          %s196 = scalar_select %p195, %s21, 0
          %s197 = scalar_lea.vmem %s2, %s196
        $region20: #{conv2d_bn_act.1} parent=11 // pred_fallthru
          _
        // Predicated region
        $region21: #{conv2d_bn_act.1} parent=11 // pred_check
          %p198 = pneg %p137
        $region22: #{conv2d_bn_act.1} parent=11 // pred_check_branch
          %200 = sbr.rel (%p198) target = $region24
        $region23: #{conv2d_bn_act.1} parent=11 // pred_region
          %p201 = scmp.lt.s32.totalorder %s21, 0
          %s202 = scalar_select %p201, %s21, 0
          %s203 = scalar_lea.vmem %s3, %s202
        $region24: #{conv2d_bn_act.1} parent=11 // pred_fallthru
          _
      $region12: #{conv2d_bn_act.1} parent=5 // pred_fallthru
        _
      %p204 = scmp.lt.s32.totalorder %s10, 25
      // Predicated region
      $region25: #{conv2d_bn_act.1} parent=5 // pred_check
        %p205 = pneg %p204
      $region26: #{conv2d_bn_act.1} parent=5 // pred_check_branch
        %207 = sbr.rel (%p205) target = $region28
      $region27: #{conv2d_bn_act.1} parent=5 // pred_region
        // Predicated region
        $region29: #{conv2d_bn_act.1} parent=27 // pred_check
          %p208 = pneg %p51
        $region30: #{conv2d_bn_act.1} parent=27 // pred_check_branch
          %210 = sbr.rel (%p208) target = $region32
        $region31: #{conv2d_bn_act.1} parent=27 // pred_region
          %s211 = smul.u32 128, %s17
          %s212 = ssub.s32 3136, %s211
          %p213 = scmp.lt.s32.totalorder %s212, 128
          %s214 = scalar_select %p213, %s212, 128
          %s215 = smul.u32 64, %s214
          %p216 = scmp.lt.s32.totalorder %s211, 3135
          %s217 = scalar_select %p216, %s211, 3135
          %p218 = scmp.lt.s32.totalorder %s19, 0
          %s219 = scalar_select %p218, %s19, 0
          %s220 = sadd.s32 %s219, %s217
          %s221 = smul.addr %s220, 4
          %s222 = scalar_lea.vmem %s0, %s221
          %s223 = smul.u32 128, %s17
          %s224 = ssub.s32 3136, %s223
          %p225 = scmp.lt.s32.totalorder %s224, 128
          %s226 = scalar_select %p225, %s224, 128
          %s227 = smul.u32 64, %s226
        $region32: #{conv2d_bn_act.1} parent=27 // pred_fallthru
          _
      $region28: #{conv2d_bn_act.1} parent=5 // pred_fallthru
        _
      %p228 = scmp.le.s32.totalorder 1, %s10
      %p229 = scmp.lt.s32.totalorder %s10, 26
      %p230 = pnand %p228, %p229
      %p231 = pneg %p230
      // Predicated region
      $region33: #{conv2d_bn_act.1} parent=5 // pred_check
        _
      $region34: #{conv2d_bn_act.1} parent=5 // pred_check_branch
        %233 = sbr.rel (%p230) target = $region36
      $region35: #{conv2d_bn_act.1} parent=5 // pred_region
        %s234 = ssub.s32 %s10, 1
        %s235 = smul.u32 128, %s20
        %s236 = ssub.s32 3136, %s235
        %p237 = scmp.lt.s32.totalorder %s236, 128
        %s238 = scalar_select %p237, %s236, 128
        %s239 = smul.u32 64, %s238
        %p240 = scmp.lt.s32.totalorder %s235, 3135
        %s241 = scalar_select %p240, %s235, 3135
        %p242 = scmp.lt.s32.totalorder %s22, 0
        %s243 = scalar_select %p242, %s22, 0
        %s244 = sadd.s32 %s243, %s241
        %s245 = smul.addr %s244, 4
        %s246 = scalar_lea.vmem %s0, %s245
        %p247 = pneg %p57
        %p248 = pneg %p54
        %s249 = smul.u32 4, %s22
        %p250 = scmp.lt.s32.totalorder %s249, 3
        %s251 = scalar_select %p250, %s249, 3
        %p252 = scmp.lt.s32.totalorder %s21, 0
        %s253 = scalar_select %p252, %s21, 0
        %s254 = sadd.s32 %s253, %s251
        %s255 = smul.addr %s254, 4
        %s256 = scalar_lea.vmem %s1, %s255
        %p257 = pneg %p85
        %p258 = pneg %p82
        %p259 = scmp.lt.s32.totalorder %s21, 0
        %s260 = scalar_select %p259, %s21, 0
        %s261 = scalar_lea.vmem %s2, %s260
        %p262 = pneg %p111
        %p263 = pneg %p108
        %p264 = scmp.lt.s32.totalorder %s21, 0
        %s265 = scalar_select %p264, %s21, 0
        %s266 = scalar_lea.vmem %s3, %s265
        %p267 = pneg %p137
        %p268 = pneg %p134
        %p269 = pneg %p165
        %p270 = pneg %p162
        %s271 = sand.u32 %s152, 1
        %s272 = sand.u32 %s152, 1
        %s273 = smul.addr %s272, 512
        %s274 = scalar_lea.vmem [#allocation3], %s273
        %s275 = smul.u32 128, %s20
        %s276 = ssub.s32 3136, %s275
        %p277 = scmp.lt.s32.totalorder %s276, 128
        %s278 = scalar_select %p277, %s276, 128
        %s279 = smul.u32 64, %s278
        %p280 = scmp.lt.s32.totalorder %s275, 3135
        %s281 = scalar_select %p280, %s275, 3135
        %p282 = scmp.lt.s32.totalorder %s22, 0
        %s283 = scalar_select %p282, %s22, 0
        %s284 = sadd.s32 %s283, %s281
        %s285 = smul.addr %s284, 4
        %s286 = scalar_lea.vmem %s0, %s285
        %s287 = smul.u32 128, %s20
        %s288 = ssub.s32 3136, %s287
        %p289 = scmp.lt.s32.totalorder %s288, 128
        %s290 = scalar_select %p289, %s288, 128
        %s291 = smul.u32 64, %s290
        %s292 = smul.u32 4, %s22
        %p293 = scmp.lt.s32.totalorder %s292, 3
        %s294 = scalar_select %p293, %s292, 3
        %p295 = scmp.lt.s32.totalorder %s21, 0
        %s296 = scalar_select %p295, %s21, 0
        %s297 = sadd.s32 %s296, %s294
        %s298 = smul.addr %s297, 4
        %s299 = scalar_lea.vmem %s1, %s298
        %s300 = smul.u32 4, %s22
        %p301 = scmp.lt.s32.totalorder %s21, 0
        %s302 = scalar_select %p301, %s21, 0
        %s303 = scalar_lea.vmem %s2, %s302
        %p304 = scmp.lt.s32.totalorder %s21, 0
        %s305 = scalar_select %p304, %s21, 0
        %s306 = scalar_lea.vmem %s3, %s305
        %s307 = smul.u32 128, %s20
        %s308 = ssub.s32 3136, %s307
        %p309 = scmp.lt.s32.totalorder %s308, 128
        %s310 = scalar_select %p309, %s308, 128
        %s311 = smul.u32 64, %s310
        %p313 = scmp.eq.s32.totalorder %s22, 0
        // Predicated region
        $region37: #{conv2d_bn_act.1} parent=35 // pred_check
          %p314 = pneg %p313
        $region38: #{conv2d_bn_act.1} parent=35 // pred_check_branch
          %316 = sbr.rel (%p314) target = $region40
        $region39: #{conv2d_bn_act.1} parent=35 // pred_region
          %vm317 = vcmask 523264
          %318 = vst.msk [vmem:[#allocation2] sm:$0xff] %vm317, 0.0
          %319 = vst.msk [vmem:[#allocation2 + $0x8] sm:$0xff] %vm317, 0.0
          %320 = vst.msk [vmem:[#allocation2 + $0x10] sm:$0xff] %vm317, 0.0
          %321 = vst.msk [vmem:[#allocation2 + $0x18] sm:$0xff] %vm317, 0.0
          %322 = vst.msk [vmem:[#allocation2 + $0x20] sm:$0xff] %vm317, 0.0
          %323 = vst.msk [vmem:[#allocation2 + $0x28] sm:$0xff] %vm317, 0.0
          %324 = vst.msk [vmem:[#allocation2 + $0x30] sm:$0xff] %vm317, 0.0
          %325 = vst.msk [vmem:[#allocation2 + $0x38] sm:$0xff] %vm317, 0.0
          %326 = vst.msk [vmem:[#allocation2 + $0x40] sm:$0xff] %vm317, 0.0
          %327 = vst.msk [vmem:[#allocation2 + $0x48] sm:$0xff] %vm317, 0.0
          %328 = vst.msk [vmem:[#allocation2 + $0x50] sm:$0xff] %vm317, 0.0
          %329 = vst.msk [vmem:[#allocation2 + $0x58] sm:$0xff] %vm317, 0.0
          %330 = vst.msk [vmem:[#allocation2 + $0x60] sm:$0xff] %vm317, 0.0
          %331 = vst.msk [vmem:[#allocation2 + $0x68] sm:$0xff] %vm317, 0.0
          %332 = vst.msk [vmem:[#allocation2 + $0x70] sm:$0xff] %vm317, 0.0
          %333 = vst.msk [vmem:[#allocation2 + $0x78] sm:$0xff] %vm317, 0.0
          %334 = vst.msk [vmem:[#allocation2 + $0x80] sm:$0xff] %vm317, 0.0
          %335 = vst.msk [vmem:[#allocation2 + $0x88] sm:$0xff] %vm317, 0.0
          %336 = vst.msk [vmem:[#allocation2 + $0x90] sm:$0xff] %vm317, 0.0
          %337 = vst.msk [vmem:[#allocation2 + $0x98] sm:$0xff] %vm317, 0.0
          %338 = vst.msk [vmem:[#allocation2 + $0xa0] sm:$0xff] %vm317, 0.0
          %339 = vst.msk [vmem:[#allocation2 + $0xa8] sm:$0xff] %vm317, 0.0
          %340 = vst.msk [vmem:[#allocation2 + $0xb0] sm:$0xff] %vm317, 0.0
          %341 = vst.msk [vmem:[#allocation2 + $0xb8] sm:$0xff] %vm317, 0.0
          %342 = vst.msk [vmem:[#allocation2 + $0xc0] sm:$0xff] %vm317, 0.0
          %343 = vst.msk [vmem:[#allocation2 + $0xc8] sm:$0xff] %vm317, 0.0
          %344 = vst.msk [vmem:[#allocation2 + $0xd0] sm:$0xff] %vm317, 0.0
          %345 = vst.msk [vmem:[#allocation2 + $0xd8] sm:$0xff] %vm317, 0.0
          %346 = vst.msk [vmem:[#allocation2 + $0xe0] sm:$0xff] %vm317, 0.0
          %347 = vst.msk [vmem:[#allocation2 + $0xe8] sm:$0xff] %vm317, 0.0
          %348 = vst.msk [vmem:[#allocation2 + $0xf0] sm:$0xff] %vm317, 0.0
          %349 = vst.msk [vmem:[#allocation2 + $0xf8] sm:$0xff] %vm317, 0.0
          %350 = vst.msk [vmem:[#allocation2 + $0x100] sm:$0xff] %vm317, 0.0
          %351 = vst.msk [vmem:[#allocation2 + $0x108] sm:$0xff] %vm317, 0.0
          %352 = vst.msk [vmem:[#allocation2 + $0x110] sm:$0xff] %vm317, 0.0
          %353 = vst.msk [vmem:[#allocation2 + $0x118] sm:$0xff] %vm317, 0.0
          %354 = vst.msk [vmem:[#allocation2 + $0x120] sm:$0xff] %vm317, 0.0
          %355 = vst.msk [vmem:[#allocation2 + $0x128] sm:$0xff] %vm317, 0.0
          %356 = vst.msk [vmem:[#allocation2 + $0x130] sm:$0xff] %vm317, 0.0
          %357 = vst.msk [vmem:[#allocation2 + $0x138] sm:$0xff] %vm317, 0.0
          %358 = vst.msk [vmem:[#allocation2 + $0x140] sm:$0xff] %vm317, 0.0
          %359 = vst.msk [vmem:[#allocation2 + $0x148] sm:$0xff] %vm317, 0.0
          %360 = vst.msk [vmem:[#allocation2 + $0x150] sm:$0xff] %vm317, 0.0
          %361 = vst.msk [vmem:[#allocation2 + $0x158] sm:$0xff] %vm317, 0.0
          %362 = vst.msk [vmem:[#allocation2 + $0x160] sm:$0xff] %vm317, 0.0
          %363 = vst.msk [vmem:[#allocation2 + $0x168] sm:$0xff] %vm317, 0.0
          %364 = vst.msk [vmem:[#allocation2 + $0x170] sm:$0xff] %vm317, 0.0
          %365 = vst.msk [vmem:[#allocation2 + $0x178] sm:$0xff] %vm317, 0.0
          %366 = vst.msk [vmem:[#allocation2 + $0x180] sm:$0xff] %vm317, 0.0
          %367 = vst.msk [vmem:[#allocation2 + $0x188] sm:$0xff] %vm317, 0.0
          %368 = vst.msk [vmem:[#allocation2 + $0x190] sm:$0xff] %vm317, 0.0
          %369 = vst.msk [vmem:[#allocation2 + $0x198] sm:$0xff] %vm317, 0.0
          %370 = vst.msk [vmem:[#allocation2 + $0x1a0] sm:$0xff] %vm317, 0.0
          %371 = vst.msk [vmem:[#allocation2 + $0x1a8] sm:$0xff] %vm317, 0.0
          %372 = vst.msk [vmem:[#allocation2 + $0x1b0] sm:$0xff] %vm317, 0.0
          %373 = vst.msk [vmem:[#allocation2 + $0x1b8] sm:$0xff] %vm317, 0.0
          %374 = vst.msk [vmem:[#allocation2 + $0x1c0] sm:$0xff] %vm317, 0.0
          %375 = vst.msk [vmem:[#allocation2 + $0x1c8] sm:$0xff] %vm317, 0.0
          %376 = vst.msk [vmem:[#allocation2 + $0x1d0] sm:$0xff] %vm317, 0.0
          %377 = vst.msk [vmem:[#allocation2 + $0x1d8] sm:$0xff] %vm317, 0.0
          %378 = vst.msk [vmem:[#allocation2 + $0x1e0] sm:$0xff] %vm317, 0.0
          %379 = vst.msk [vmem:[#allocation2 + $0x1e8] sm:$0xff] %vm317, 0.0
          %380 = vst.msk [vmem:[#allocation2 + $0x1f0] sm:$0xff] %vm317, 0.0
          %381 = vst.msk [vmem:[#allocation2 + $0x1f8] sm:$0xff] %vm317, 0.0
          %382 = vst.msk [vmem:[#allocation2 + $0x200] sm:$0xff] %vm317, 0.0
          %383 = vst.msk [vmem:[#allocation2 + $0x208] sm:$0xff] %vm317, 0.0
          %384 = vst.msk [vmem:[#allocation2 + $0x210] sm:$0xff] %vm317, 0.0
          %385 = vst.msk [vmem:[#allocation2 + $0x218] sm:$0xff] %vm317, 0.0
          %386 = vst.msk [vmem:[#allocation2 + $0x220] sm:$0xff] %vm317, 0.0
          %387 = vst.msk [vmem:[#allocation2 + $0x228] sm:$0xff] %vm317, 0.0
          %388 = vst.msk [vmem:[#allocation2 + $0x230] sm:$0xff] %vm317, 0.0
          %389 = vst.msk [vmem:[#allocation2 + $0x238] sm:$0xff] %vm317, 0.0
          %390 = vst.msk [vmem:[#allocation2 + $0x240] sm:$0xff] %vm317, 0.0
          %391 = vst.msk [vmem:[#allocation2 + $0x248] sm:$0xff] %vm317, 0.0
          %392 = vst.msk [vmem:[#allocation2 + $0x250] sm:$0xff] %vm317, 0.0
          %393 = vst.msk [vmem:[#allocation2 + $0x258] sm:$0xff] %vm317, 0.0
          %394 = vst.msk [vmem:[#allocation2 + $0x260] sm:$0xff] %vm317, 0.0
          %395 = vst.msk [vmem:[#allocation2 + $0x268] sm:$0xff] %vm317, 0.0
          %396 = vst.msk [vmem:[#allocation2 + $0x270] sm:$0xff] %vm317, 0.0
          %397 = vst.msk [vmem:[#allocation2 + $0x278] sm:$0xff] %vm317, 0.0
          %398 = vst.msk [vmem:[#allocation2 + $0x280] sm:$0xff] %vm317, 0.0
          %399 = vst.msk [vmem:[#allocation2 + $0x288] sm:$0xff] %vm317, 0.0
          %400 = vst.msk [vmem:[#allocation2 + $0x290] sm:$0xff] %vm317, 0.0
          %401 = vst.msk [vmem:[#allocation2 + $0x298] sm:$0xff] %vm317, 0.0
          %402 = vst.msk [vmem:[#allocation2 + $0x2a0] sm:$0xff] %vm317, 0.0
          %403 = vst.msk [vmem:[#allocation2 + $0x2a8] sm:$0xff] %vm317, 0.0
          %404 = vst.msk [vmem:[#allocation2 + $0x2b0] sm:$0xff] %vm317, 0.0
          %405 = vst.msk [vmem:[#allocation2 + $0x2b8] sm:$0xff] %vm317, 0.0
          %406 = vst.msk [vmem:[#allocation2 + $0x2c0] sm:$0xff] %vm317, 0.0
          %407 = vst.msk [vmem:[#allocation2 + $0x2c8] sm:$0xff] %vm317, 0.0
          %408 = vst.msk [vmem:[#allocation2 + $0x2d0] sm:$0xff] %vm317, 0.0
          %409 = vst.msk [vmem:[#allocation2 + $0x2d8] sm:$0xff] %vm317, 0.0
          %410 = vst.msk [vmem:[#allocation2 + $0x2e0] sm:$0xff] %vm317, 0.0
          %411 = vst.msk [vmem:[#allocation2 + $0x2e8] sm:$0xff] %vm317, 0.0
          %412 = vst.msk [vmem:[#allocation2 + $0x2f0] sm:$0xff] %vm317, 0.0
          %413 = vst.msk [vmem:[#allocation2 + $0x2f8] sm:$0xff] %vm317, 0.0
          %414 = vst.msk [vmem:[#allocation2 + $0x300] sm:$0xff] %vm317, 0.0
          %415 = vst.msk [vmem:[#allocation2 + $0x308] sm:$0xff] %vm317, 0.0
          %416 = vst.msk [vmem:[#allocation2 + $0x310] sm:$0xff] %vm317, 0.0
          %417 = vst.msk [vmem:[#allocation2 + $0x318] sm:$0xff] %vm317, 0.0
          %418 = vst.msk [vmem:[#allocation2 + $0x320] sm:$0xff] %vm317, 0.0
          %419 = vst.msk [vmem:[#allocation2 + $0x328] sm:$0xff] %vm317, 0.0
          %420 = vst.msk [vmem:[#allocation2 + $0x330] sm:$0xff] %vm317, 0.0
          %421 = vst.msk [vmem:[#allocation2 + $0x338] sm:$0xff] %vm317, 0.0
          %422 = vst.msk [vmem:[#allocation2 + $0x340] sm:$0xff] %vm317, 0.0
          %423 = vst.msk [vmem:[#allocation2 + $0x348] sm:$0xff] %vm317, 0.0
          %424 = vst.msk [vmem:[#allocation2 + $0x350] sm:$0xff] %vm317, 0.0
          %425 = vst.msk [vmem:[#allocation2 + $0x358] sm:$0xff] %vm317, 0.0
          %426 = vst.msk [vmem:[#allocation2 + $0x360] sm:$0xff] %vm317, 0.0
          %427 = vst.msk [vmem:[#allocation2 + $0x368] sm:$0xff] %vm317, 0.0
          %428 = vst.msk [vmem:[#allocation2 + $0x370] sm:$0xff] %vm317, 0.0
          %429 = vst.msk [vmem:[#allocation2 + $0x378] sm:$0xff] %vm317, 0.0
          %430 = vst.msk [vmem:[#allocation2 + $0x380] sm:$0xff] %vm317, 0.0
          %431 = vst.msk [vmem:[#allocation2 + $0x388] sm:$0xff] %vm317, 0.0
          %432 = vst.msk [vmem:[#allocation2 + $0x390] sm:$0xff] %vm317, 0.0
          %433 = vst.msk [vmem:[#allocation2 + $0x398] sm:$0xff] %vm317, 0.0
          %434 = vst.msk [vmem:[#allocation2 + $0x3a0] sm:$0xff] %vm317, 0.0
          %435 = vst.msk [vmem:[#allocation2 + $0x3a8] sm:$0xff] %vm317, 0.0
          %436 = vst.msk [vmem:[#allocation2 + $0x3b0] sm:$0xff] %vm317, 0.0
          %437 = vst.msk [vmem:[#allocation2 + $0x3b8] sm:$0xff] %vm317, 0.0
          %438 = vst.msk [vmem:[#allocation2 + $0x3c0] sm:$0xff] %vm317, 0.0
          %439 = vst.msk [vmem:[#allocation2 + $0x3c8] sm:$0xff] %vm317, 0.0
          %440 = vst.msk [vmem:[#allocation2 + $0x3d0] sm:$0xff] %vm317, 0.0
          %441 = vst.msk [vmem:[#allocation2 + $0x3d8] sm:$0xff] %vm317, 0.0
          %442 = vst.msk [vmem:[#allocation2 + $0x3e0] sm:$0xff] %vm317, 0.0
          %443 = vst.msk [vmem:[#allocation2 + $0x3e8] sm:$0xff] %vm317, 0.0
          %444 = vst.msk [vmem:[#allocation2 + $0x3f0] sm:$0xff] %vm317, 0.0
          %445 = vst.msk [vmem:[#allocation2 + $0x3f8] sm:$0xff] %vm317, 0.0
        $region40: #{conv2d_bn_act.1} parent=35 // pred_fallthru
          _
        %v446 = vld [vmem:[#allocation2] sm:$0xff]
        %v447 = vld [vmem:[#allocation2 + $0x8] sm:$0xff]
        %v448 = vld [vmem:[#allocation2 + $0x10] sm:$0xff]
        %v449 = vld [vmem:[#allocation2 + $0x18] sm:$0xff]
        %v450 = vld [vmem:[#allocation2 + $0x20] sm:$0xff]
        %v451 = vld [vmem:[#allocation2 + $0x28] sm:$0xff]
        %v452 = vld [vmem:[#allocation2 + $0x30] sm:$0xff]
        %v453 = vld [vmem:[#allocation2 + $0x38] sm:$0xff]
        %v454 = vld [vmem:[#allocation2 + $0x40] sm:$0xff]
        %v455 = vld [vmem:[#allocation2 + $0x48] sm:$0xff]
        %v456 = vld [vmem:[#allocation2 + $0x50] sm:$0xff]
        %v457 = vld [vmem:[#allocation2 + $0x58] sm:$0xff]
        %v458 = vld [vmem:[#allocation2 + $0x60] sm:$0xff]
        %v459 = vld [vmem:[#allocation2 + $0x68] sm:$0xff]
        %v460 = vld [vmem:[#allocation2 + $0x70] sm:$0xff]
        %v461 = vld [vmem:[#allocation2 + $0x78] sm:$0xff]
        %v462 = vld [vmem:[#allocation2 + $0x80] sm:$0xff]
        %v463 = vld [vmem:[#allocation2 + $0x88] sm:$0xff]
        %v464 = vld [vmem:[#allocation2 + $0x90] sm:$0xff]
        %v465 = vld [vmem:[#allocation2 + $0x98] sm:$0xff]
        %v466 = vld [vmem:[#allocation2 + $0xa0] sm:$0xff]
        %v467 = vld [vmem:[#allocation2 + $0xa8] sm:$0xff]
        %v468 = vld [vmem:[#allocation2 + $0xb0] sm:$0xff]
        %v469 = vld [vmem:[#allocation2 + $0xb8] sm:$0xff]
        %v470 = vld [vmem:[#allocation2 + $0xc0] sm:$0xff]
        %v471 = vld [vmem:[#allocation2 + $0xc8] sm:$0xff]
        %v472 = vld [vmem:[#allocation2 + $0xd0] sm:$0xff]
        %v473 = vld [vmem:[#allocation2 + $0xd8] sm:$0xff]
        %v474 = vld [vmem:[#allocation2 + $0xe0] sm:$0xff]
        %v475 = vld [vmem:[#allocation2 + $0xe8] sm:$0xff]
        %v476 = vld [vmem:[#allocation2 + $0xf0] sm:$0xff]
        %v477 = vld [vmem:[#allocation2 + $0xf8] sm:$0xff]
        %v478 = vld [vmem:[#allocation2 + $0x100] sm:$0xff]
        %v479 = vld [vmem:[#allocation2 + $0x108] sm:$0xff]
        %v480 = vld [vmem:[#allocation2 + $0x110] sm:$0xff]
        %v481 = vld [vmem:[#allocation2 + $0x118] sm:$0xff]
        %v482 = vld [vmem:[#allocation2 + $0x120] sm:$0xff]
        %v483 = vld [vmem:[#allocation2 + $0x128] sm:$0xff]
        %v484 = vld [vmem:[#allocation2 + $0x130] sm:$0xff]
        %v485 = vld [vmem:[#allocation2 + $0x138] sm:$0xff]
        %v486 = vld [vmem:[#allocation2 + $0x140] sm:$0xff]
        %v487 = vld [vmem:[#allocation2 + $0x148] sm:$0xff]
        %v488 = vld [vmem:[#allocation2 + $0x150] sm:$0xff]
        %v489 = vld [vmem:[#allocation2 + $0x158] sm:$0xff]
        %v490 = vld [vmem:[#allocation2 + $0x160] sm:$0xff]
        %v491 = vld [vmem:[#allocation2 + $0x168] sm:$0xff]
        %v492 = vld [vmem:[#allocation2 + $0x170] sm:$0xff]
        %v493 = vld [vmem:[#allocation2 + $0x178] sm:$0xff]
        %v494 = vld [vmem:[#allocation2 + $0x180] sm:$0xff]
        %v495 = vld [vmem:[#allocation2 + $0x188] sm:$0xff]
        %v496 = vld [vmem:[#allocation2 + $0x190] sm:$0xff]
        %v497 = vld [vmem:[#allocation2 + $0x198] sm:$0xff]
        %v498 = vld [vmem:[#allocation2 + $0x1a0] sm:$0xff]
        %v499 = vld [vmem:[#allocation2 + $0x1a8] sm:$0xff]
        %v500 = vld [vmem:[#allocation2 + $0x1b0] sm:$0xff]
        %v501 = vld [vmem:[#allocation2 + $0x1b8] sm:$0xff]
        %v502 = vld [vmem:[#allocation2 + $0x1c0] sm:$0xff]
        %v503 = vld [vmem:[#allocation2 + $0x1c8] sm:$0xff]
        %v504 = vld [vmem:[#allocation2 + $0x1d0] sm:$0xff]
        %v505 = vld [vmem:[#allocation2 + $0x1d8] sm:$0xff]
        %v506 = vld [vmem:[#allocation2 + $0x1e0] sm:$0xff]
        %v507 = vld [vmem:[#allocation2 + $0x1e8] sm:$0xff]
        %v508 = vld [vmem:[#allocation2 + $0x1f0] sm:$0xff]
        %v509 = vld [vmem:[#allocation2 + $0x1f8] sm:$0xff]
        %v510 = vld [vmem:[#allocation2 + $0x200] sm:$0xff]
        %v511 = vld [vmem:[#allocation2 + $0x208] sm:$0xff]
        %v512 = vld [vmem:[#allocation2 + $0x210] sm:$0xff]
        %v513 = vld [vmem:[#allocation2 + $0x218] sm:$0xff]
        %v514 = vld [vmem:[#allocation2 + $0x220] sm:$0xff]
        %v515 = vld [vmem:[#allocation2 + $0x228] sm:$0xff]
        %v516 = vld [vmem:[#allocation2 + $0x230] sm:$0xff]
        %v517 = vld [vmem:[#allocation2 + $0x238] sm:$0xff]
        %v518 = vld [vmem:[#allocation2 + $0x240] sm:$0xff]
        %v519 = vld [vmem:[#allocation2 + $0x248] sm:$0xff]
        %v520 = vld [vmem:[#allocation2 + $0x250] sm:$0xff]
        %v521 = vld [vmem:[#allocation2 + $0x258] sm:$0xff]
        %v522 = vld [vmem:[#allocation2 + $0x260] sm:$0xff]
        %v523 = vld [vmem:[#allocation2 + $0x268] sm:$0xff]
        %v524 = vld [vmem:[#allocation2 + $0x270] sm:$0xff]
        %v525 = vld [vmem:[#allocation2 + $0x278] sm:$0xff]
        %v526 = vld [vmem:[#allocation2 + $0x280] sm:$0xff]
        %v527 = vld [vmem:[#allocation2 + $0x288] sm:$0xff]
        %v528 = vld [vmem:[#allocation2 + $0x290] sm:$0xff]
        %v529 = vld [vmem:[#allocation2 + $0x298] sm:$0xff]
        %v530 = vld [vmem:[#allocation2 + $0x2a0] sm:$0xff]
        %v531 = vld [vmem:[#allocation2 + $0x2a8] sm:$0xff]
        %v532 = vld [vmem:[#allocation2 + $0x2b0] sm:$0xff]
        %v533 = vld [vmem:[#allocation2 + $0x2b8] sm:$0xff]
        %v534 = vld [vmem:[#allocation2 + $0x2c0] sm:$0xff]
        %v535 = vld [vmem:[#allocation2 + $0x2c8] sm:$0xff]
        %v536 = vld [vmem:[#allocation2 + $0x2d0] sm:$0xff]
        %v537 = vld [vmem:[#allocation2 + $0x2d8] sm:$0xff]
        %v538 = vld [vmem:[#allocation2 + $0x2e0] sm:$0xff]
        %v539 = vld [vmem:[#allocation2 + $0x2e8] sm:$0xff]
        %v540 = vld [vmem:[#allocation2 + $0x2f0] sm:$0xff]
        %v541 = vld [vmem:[#allocation2 + $0x2f8] sm:$0xff]
        %v542 = vld [vmem:[#allocation2 + $0x300] sm:$0xff]
        %v543 = vld [vmem:[#allocation2 + $0x308] sm:$0xff]
        %v544 = vld [vmem:[#allocation2 + $0x310] sm:$0xff]
        %v545 = vld [vmem:[#allocation2 + $0x318] sm:$0xff]
        %v546 = vld [vmem:[#allocation2 + $0x320] sm:$0xff]
        %v547 = vld [vmem:[#allocation2 + $0x328] sm:$0xff]
        %v548 = vld [vmem:[#allocation2 + $0x330] sm:$0xff]
        %v549 = vld [vmem:[#allocation2 + $0x338] sm:$0xff]
        %v550 = vld [vmem:[#allocation2 + $0x340] sm:$0xff]
        %v551 = vld [vmem:[#allocation2 + $0x348] sm:$0xff]
        %v552 = vld [vmem:[#allocation2 + $0x350] sm:$0xff]
        %v553 = vld [vmem:[#allocation2 + $0x358] sm:$0xff]
        %v554 = vld [vmem:[#allocation2 + $0x360] sm:$0xff]
        %v555 = vld [vmem:[#allocation2 + $0x368] sm:$0xff]
        %v556 = vld [vmem:[#allocation2 + $0x370] sm:$0xff]
        %v557 = vld [vmem:[#allocation2 + $0x378] sm:$0xff]
        %v558 = vld [vmem:[#allocation2 + $0x380] sm:$0xff]
        %v559 = vld [vmem:[#allocation2 + $0x388] sm:$0xff]
        %v560 = vld [vmem:[#allocation2 + $0x390] sm:$0xff]
        %v561 = vld [vmem:[#allocation2 + $0x398] sm:$0xff]
        %v562 = vld [vmem:[#allocation2 + $0x3a0] sm:$0xff]
        %v563 = vld [vmem:[#allocation2 + $0x3a8] sm:$0xff]
        %v564 = vld [vmem:[#allocation2 + $0x3b0] sm:$0xff]
        %v565 = vld [vmem:[#allocation2 + $0x3b8] sm:$0xff]
        %v566 = vld [vmem:[#allocation2 + $0x3c0] sm:$0xff]
        %v567 = vld [vmem:[#allocation2 + $0x3c8] sm:$0xff]
        %v568 = vld [vmem:[#allocation2 + $0x3d0] sm:$0xff]
        %v569 = vld [vmem:[#allocation2 + $0x3d8] sm:$0xff]
        %v570 = vld [vmem:[#allocation2 + $0x3e0] sm:$0xff]
        %v571 = vld [vmem:[#allocation2 + $0x3e8] sm:$0xff]
        %v572 = vld [vmem:[#allocation2 + $0x3f0] sm:$0xff]
        %v573 = vld [vmem:[#allocation2 + $0x3f8] sm:$0xff]
        %v574 = vld [vmem:[%s286] sm:$0xf]
        %v575 = vld [vmem:[%s286 + $0x4] sm:$0xf]
        %v576 = vld [vmem:[%s286 + $0x8] sm:$0xf]
        %v577 = vld [vmem:[%s286 + $0xc] sm:$0xf]
        %v578 = vld [vmem:[%s286 + $0x10] sm:$0xf]
        %v579 = vld [vmem:[%s286 + $0x14] sm:$0xf]
        %v580 = vld [vmem:[%s286 + $0x18] sm:$0xf]
        %v581 = vld [vmem:[%s286 + $0x1c] sm:$0xf]
        %v582 = vld [vmem:[%s286 + $0x20] sm:$0xf]
        %v583 = vld [vmem:[%s286 + $0x24] sm:$0xf]
        %v584 = vld [vmem:[%s286 + $0x28] sm:$0xf]
        %v585 = vld [vmem:[%s286 + $0x2c] sm:$0xf]
        %v586 = vld [vmem:[%s286 + $0x30] sm:$0xf]
        %v587 = vld [vmem:[%s286 + $0x34] sm:$0xf]
        %v588 = vld [vmem:[%s286 + $0x38] sm:$0xf]
        %v589 = vld [vmem:[%s286 + $0x3c] sm:$0xf]
        %v590 = vld [vmem:[%s286 + $0x40] sm:$0xf]
        %v591 = vld [vmem:[%s286 + $0x44] sm:$0xf]
        %v592 = vld [vmem:[%s286 + $0x48] sm:$0xf]
        %v593 = vld [vmem:[%s286 + $0x4c] sm:$0xf]
        %v594 = vld [vmem:[%s286 + $0x50] sm:$0xf]
        %v595 = vld [vmem:[%s286 + $0x54] sm:$0xf]
        %v596 = vld [vmem:[%s286 + $0x58] sm:$0xf]
        %v597 = vld [vmem:[%s286 + $0x5c] sm:$0xf]
        %v598 = vld [vmem:[%s286 + $0x60] sm:$0xf]
        %v599 = vld [vmem:[%s286 + $0x64] sm:$0xf]
        %v600 = vld [vmem:[%s286 + $0x68] sm:$0xf]
        %v601 = vld [vmem:[%s286 + $0x6c] sm:$0xf]
        %v602 = vld [vmem:[%s286 + $0x70] sm:$0xf]
        %v603 = vld [vmem:[%s286 + $0x74] sm:$0xf]
        %v604 = vld [vmem:[%s286 + $0x78] sm:$0xf]
        %v605 = vld [vmem:[%s286 + $0x7c] sm:$0xf]
        %v606 = vld [vmem:[%s286 + $0x80] sm:$0xf]
        %v607 = vld [vmem:[%s286 + $0x84] sm:$0xf]
        %v608 = vld [vmem:[%s286 + $0x88] sm:$0xf]
        %v609 = vld [vmem:[%s286 + $0x8c] sm:$0xf]
        %v610 = vld [vmem:[%s286 + $0x90] sm:$0xf]
        %v611 = vld [vmem:[%s286 + $0x94] sm:$0xf]
        %v612 = vld [vmem:[%s286 + $0x98] sm:$0xf]
        %v613 = vld [vmem:[%s286 + $0x9c] sm:$0xf]
        %v614 = vld [vmem:[%s286 + $0xa0] sm:$0xf]
        %v615 = vld [vmem:[%s286 + $0xa4] sm:$0xf]
        %v616 = vld [vmem:[%s286 + $0xa8] sm:$0xf]
        %v617 = vld [vmem:[%s286 + $0xac] sm:$0xf]
        %v618 = vld [vmem:[%s286 + $0xb0] sm:$0xf]
        %v619 = vld [vmem:[%s286 + $0xb4] sm:$0xf]
        %v620 = vld [vmem:[%s286 + $0xb8] sm:$0xf]
        %v621 = vld [vmem:[%s286 + $0xbc] sm:$0xf]
        %v622 = vld [vmem:[%s286 + $0xc0] sm:$0xf]
        %v623 = vld [vmem:[%s286 + $0xc4] sm:$0xf]
        %v624 = vld [vmem:[%s286 + $0xc8] sm:$0xf]
        %v625 = vld [vmem:[%s286 + $0xcc] sm:$0xf]
        %v626 = vld [vmem:[%s286 + $0xd0] sm:$0xf]
        %v627 = vld [vmem:[%s286 + $0xd4] sm:$0xf]
        %v628 = vld [vmem:[%s286 + $0xd8] sm:$0xf]
        %v629 = vld [vmem:[%s286 + $0xdc] sm:$0xf]
        %v630 = vld [vmem:[%s286 + $0xe0] sm:$0xf]
        %v631 = vld [vmem:[%s286 + $0xe4] sm:$0xf]
        %v632 = vld [vmem:[%s286 + $0xe8] sm:$0xf]
        %v633 = vld [vmem:[%s286 + $0xec] sm:$0xf]
        %v634 = vld [vmem:[%s286 + $0xf0] sm:$0xf]
        %v635 = vld [vmem:[%s286 + $0xf4] sm:$0xf]
        %v636 = vld [vmem:[%s286 + $0xf8] sm:$0xf]
        %v637 = vld [vmem:[%s286 + $0xfc] sm:$0xf]
        %v638 = vld [vmem:[%s286 + $0x100] sm:$0xf]
        %v639 = vld [vmem:[%s286 + $0x104] sm:$0xf]
        %v640 = vld [vmem:[%s286 + $0x108] sm:$0xf]
        %v641 = vld [vmem:[%s286 + $0x10c] sm:$0xf]
        %v642 = vld [vmem:[%s286 + $0x110] sm:$0xf]
        %v643 = vld [vmem:[%s286 + $0x114] sm:$0xf]
        %v644 = vld [vmem:[%s286 + $0x118] sm:$0xf]
        %v645 = vld [vmem:[%s286 + $0x11c] sm:$0xf]
        %v646 = vld [vmem:[%s286 + $0x120] sm:$0xf]
        %v647 = vld [vmem:[%s286 + $0x124] sm:$0xf]
        %v648 = vld [vmem:[%s286 + $0x128] sm:$0xf]
        %v649 = vld [vmem:[%s286 + $0x12c] sm:$0xf]
        %v650 = vld [vmem:[%s286 + $0x130] sm:$0xf]
        %v651 = vld [vmem:[%s286 + $0x134] sm:$0xf]
        %v652 = vld [vmem:[%s286 + $0x138] sm:$0xf]
        %v653 = vld [vmem:[%s286 + $0x13c] sm:$0xf]
        %v654 = vld [vmem:[%s286 + $0x140] sm:$0xf]
        %v655 = vld [vmem:[%s286 + $0x144] sm:$0xf]
        %v656 = vld [vmem:[%s286 + $0x148] sm:$0xf]
        %v657 = vld [vmem:[%s286 + $0x14c] sm:$0xf]
        %v658 = vld [vmem:[%s286 + $0x150] sm:$0xf]
        %v659 = vld [vmem:[%s286 + $0x154] sm:$0xf]
        %v660 = vld [vmem:[%s286 + $0x158] sm:$0xf]
        %v661 = vld [vmem:[%s286 + $0x15c] sm:$0xf]
        %v662 = vld [vmem:[%s286 + $0x160] sm:$0xf]
        %v663 = vld [vmem:[%s286 + $0x164] sm:$0xf]
        %v664 = vld [vmem:[%s286 + $0x168] sm:$0xf]
        %v665 = vld [vmem:[%s286 + $0x16c] sm:$0xf]
        %v666 = vld [vmem:[%s286 + $0x170] sm:$0xf]
        %v667 = vld [vmem:[%s286 + $0x174] sm:$0xf]
        %v668 = vld [vmem:[%s286 + $0x178] sm:$0xf]
        %v669 = vld [vmem:[%s286 + $0x17c] sm:$0xf]
        %v670 = vld [vmem:[%s286 + $0x180] sm:$0xf]
        %v671 = vld [vmem:[%s286 + $0x184] sm:$0xf]
        %v672 = vld [vmem:[%s286 + $0x188] sm:$0xf]
        %v673 = vld [vmem:[%s286 + $0x18c] sm:$0xf]
        %v674 = vld [vmem:[%s286 + $0x190] sm:$0xf]
        %v675 = vld [vmem:[%s286 + $0x194] sm:$0xf]
        %v676 = vld [vmem:[%s286 + $0x198] sm:$0xf]
        %v677 = vld [vmem:[%s286 + $0x19c] sm:$0xf]
        %v678 = vld [vmem:[%s286 + $0x1a0] sm:$0xf]
        %v679 = vld [vmem:[%s286 + $0x1a4] sm:$0xf]
        %v680 = vld [vmem:[%s286 + $0x1a8] sm:$0xf]
        %v681 = vld [vmem:[%s286 + $0x1ac] sm:$0xf]
        %v682 = vld [vmem:[%s286 + $0x1b0] sm:$0xf]
        %v683 = vld [vmem:[%s286 + $0x1b4] sm:$0xf]
        %v684 = vld [vmem:[%s286 + $0x1b8] sm:$0xf]
        %v685 = vld [vmem:[%s286 + $0x1bc] sm:$0xf]
        %v686 = vld [vmem:[%s286 + $0x1c0] sm:$0xf]
        %v687 = vld [vmem:[%s286 + $0x1c4] sm:$0xf]
        %v688 = vld [vmem:[%s286 + $0x1c8] sm:$0xf]
        %v689 = vld [vmem:[%s286 + $0x1cc] sm:$0xf]
        %v690 = vld [vmem:[%s286 + $0x1d0] sm:$0xf]
        %v691 = vld [vmem:[%s286 + $0x1d4] sm:$0xf]
        %v692 = vld [vmem:[%s286 + $0x1d8] sm:$0xf]
        %v693 = vld [vmem:[%s286 + $0x1dc] sm:$0xf]
        %v694 = vld [vmem:[%s286 + $0x1e0] sm:$0xf]
        %v695 = vld [vmem:[%s286 + $0x1e4] sm:$0xf]
        %v696 = vld [vmem:[%s286 + $0x1e8] sm:$0xf]
        %v697 = vld [vmem:[%s286 + $0x1ec] sm:$0xf]
        %v698 = vld [vmem:[%s286 + $0x1f0] sm:$0xf]
        %v699 = vld [vmem:[%s286 + $0x1f4] sm:$0xf]
        %v700 = vld [vmem:[%s286 + $0x1f8] sm:$0xf]
        %v701 = vld [vmem:[%s286 + $0x1fc] sm:$0xf]
        %v702 = vld [vmem:[%s299] sm:$0xf]
        %v703 = vld [vmem:[%s299 + $0x4] sm:$0xf]
        %v704 = vld [vmem:[%s299 + $0x8] sm:$0xf]
        %v705 = vld [vmem:[%s299 + $0xc] sm:$0x3]
        %v834 = vunpack.c.l.b16 %v574
        %v835 = vunpack.c.l.b16 %v575
        %v836 = vunpack.c.l.b16 %v576
        %v837 = vunpack.c.l.b16 %v577
        %v838 = vunpack.c.l.b16 %v578
        %v839 = vunpack.c.l.b16 %v579
        %v840 = vunpack.c.l.b16 %v580
        %v841 = vunpack.c.l.b16 %v581
        %v842 = vunpack.c.l.b16 %v582
        %v843 = vunpack.c.l.b16 %v583
        %v844 = vunpack.c.l.b16 %v584
        %v845 = vunpack.c.l.b16 %v585
        %v846 = vunpack.c.l.b16 %v586
        %v847 = vunpack.c.l.b16 %v587
        %v848 = vunpack.c.l.b16 %v588
        %v849 = vunpack.c.l.b16 %v589
        %v850 = vunpack.c.l.b16 %v590
        %v851 = vunpack.c.l.b16 %v591
        %v852 = vunpack.c.l.b16 %v592
        %v853 = vunpack.c.l.b16 %v593
        %v854 = vunpack.c.l.b16 %v594
        %v855 = vunpack.c.l.b16 %v595
        %v856 = vunpack.c.l.b16 %v596
        %v857 = vunpack.c.l.b16 %v597
        %v858 = vunpack.c.l.b16 %v598
        %v859 = vunpack.c.l.b16 %v599
        %v860 = vunpack.c.l.b16 %v600
        %v861 = vunpack.c.l.b16 %v601
        %v862 = vunpack.c.l.b16 %v602
        %v863 = vunpack.c.l.b16 %v603
        %v864 = vunpack.c.l.b16 %v604
        %v865 = vunpack.c.l.b16 %v605
        %v866 = vunpack.c.l.b16 %v606
        %v867 = vunpack.c.l.b16 %v607
        %v868 = vunpack.c.l.b16 %v608
        %v869 = vunpack.c.l.b16 %v609
        %v870 = vunpack.c.l.b16 %v610
        %v871 = vunpack.c.l.b16 %v611
        %v872 = vunpack.c.l.b16 %v612
        %v873 = vunpack.c.l.b16 %v613
        %v874 = vunpack.c.l.b16 %v614
        %v875 = vunpack.c.l.b16 %v615
        %v876 = vunpack.c.l.b16 %v616
        %v877 = vunpack.c.l.b16 %v617
        %v878 = vunpack.c.l.b16 %v618
        %v879 = vunpack.c.l.b16 %v619
        %v880 = vunpack.c.l.b16 %v620
        %v881 = vunpack.c.l.b16 %v621
        %v882 = vunpack.c.l.b16 %v622
        %v883 = vunpack.c.l.b16 %v623
        %v884 = vunpack.c.l.b16 %v624
        %v885 = vunpack.c.l.b16 %v625
        %v886 = vunpack.c.l.b16 %v626
        %v887 = vunpack.c.l.b16 %v627
        %v888 = vunpack.c.l.b16 %v628
        %v889 = vunpack.c.l.b16 %v629
        %v890 = vunpack.c.l.b16 %v630
        %v891 = vunpack.c.l.b16 %v631
        %v892 = vunpack.c.l.b16 %v632
        %v893 = vunpack.c.l.b16 %v633
        %v894 = vunpack.c.l.b16 %v634
        %v895 = vunpack.c.l.b16 %v635
        %v896 = vunpack.c.l.b16 %v636
        %v897 = vunpack.c.l.b16 %v637
        %v898 = vunpack.c.l.b16 %v638
        %v899 = vunpack.c.l.b16 %v639
        %v900 = vunpack.c.l.b16 %v640
        %v901 = vunpack.c.l.b16 %v641
        %v902 = vunpack.c.l.b16 %v642
        %v903 = vunpack.c.l.b16 %v643
        %v904 = vunpack.c.l.b16 %v644
        %v905 = vunpack.c.l.b16 %v645
        %v906 = vunpack.c.l.b16 %v646
        %v907 = vunpack.c.l.b16 %v647
        %v908 = vunpack.c.l.b16 %v648
        %v909 = vunpack.c.l.b16 %v649
        %v910 = vunpack.c.l.b16 %v650
        %v911 = vunpack.c.l.b16 %v651
        %v912 = vunpack.c.l.b16 %v652
        %v913 = vunpack.c.l.b16 %v653
        %v914 = vunpack.c.l.b16 %v654
        %v915 = vunpack.c.l.b16 %v655
        %v916 = vunpack.c.l.b16 %v656
        %v917 = vunpack.c.l.b16 %v657
        %v918 = vunpack.c.l.b16 %v658
        %v919 = vunpack.c.l.b16 %v659
        %v920 = vunpack.c.l.b16 %v660
        %v921 = vunpack.c.l.b16 %v661
        %v922 = vunpack.c.l.b16 %v662
        %v923 = vunpack.c.l.b16 %v663
        %v924 = vunpack.c.l.b16 %v664
        %v925 = vunpack.c.l.b16 %v665
        %v926 = vunpack.c.l.b16 %v666
        %v927 = vunpack.c.l.b16 %v667
        %v928 = vunpack.c.l.b16 %v668
        %v929 = vunpack.c.l.b16 %v669
        %v930 = vunpack.c.l.b16 %v670
        %v931 = vunpack.c.l.b16 %v671
        %v932 = vunpack.c.l.b16 %v672
        %v933 = vunpack.c.l.b16 %v673
        %v934 = vunpack.c.l.b16 %v674
        %v935 = vunpack.c.l.b16 %v675
        %v936 = vunpack.c.l.b16 %v676
        %v937 = vunpack.c.l.b16 %v677
        %v938 = vunpack.c.l.b16 %v678
        %v939 = vunpack.c.l.b16 %v679
        %v940 = vunpack.c.l.b16 %v680
        %v941 = vunpack.c.l.b16 %v681
        %v942 = vunpack.c.l.b16 %v682
        %v943 = vunpack.c.l.b16 %v683
        %v944 = vunpack.c.l.b16 %v684
        %v945 = vunpack.c.l.b16 %v685
        %v946 = vunpack.c.l.b16 %v686
        %v947 = vunpack.c.l.b16 %v687
        %v948 = vunpack.c.l.b16 %v688
        %v949 = vunpack.c.l.b16 %v689
        %v950 = vunpack.c.l.b16 %v690
        %v951 = vunpack.c.l.b16 %v691
        %v952 = vunpack.c.l.b16 %v692
        %v953 = vunpack.c.l.b16 %v693
        %v954 = vunpack.c.l.b16 %v694
        %v955 = vunpack.c.l.b16 %v695
        %v956 = vunpack.c.l.b16 %v696
        %v957 = vunpack.c.l.b16 %v697
        %v958 = vunpack.c.l.b16 %v698
        %v959 = vunpack.c.l.b16 %v699
        %v960 = vunpack.c.l.b16 %v700
        %v961 = vunpack.c.l.b16 %v701
        %v962 = vpack.c.b16 %v835, %v834
        %v963 = vpack.c.b16 %v837, %v836
        %v964 = vpack.c.b16 %v839, %v838
        %v965 = vpack.c.b16 %v841, %v840
        %v966 = vpack.c.b16 %v843, %v842
        %v967 = vpack.c.b16 %v845, %v844
        %v968 = vpack.c.b16 %v847, %v846
        %v969 = vpack.c.b16 %v849, %v848
        %v970 = vpack.c.b16 %v851, %v850
        %v971 = vpack.c.b16 %v853, %v852
        %v972 = vpack.c.b16 %v855, %v854
        %v973 = vpack.c.b16 %v857, %v856
        %v974 = vpack.c.b16 %v859, %v858
        %v975 = vpack.c.b16 %v861, %v860
        %v976 = vpack.c.b16 %v863, %v862
        %v977 = vpack.c.b16 %v865, %v864
        %v978 = vpack.c.b16 %v867, %v866
        %v979 = vpack.c.b16 %v869, %v868
        %v980 = vpack.c.b16 %v871, %v870
        %v981 = vpack.c.b16 %v873, %v872
        %v982 = vpack.c.b16 %v875, %v874
        %v983 = vpack.c.b16 %v877, %v876
        %v984 = vpack.c.b16 %v879, %v878
        %v985 = vpack.c.b16 %v881, %v880
        %v986 = vpack.c.b16 %v883, %v882
        %v987 = vpack.c.b16 %v885, %v884
        %v988 = vpack.c.b16 %v887, %v886
        %v989 = vpack.c.b16 %v889, %v888
        %v990 = vpack.c.b16 %v891, %v890
        %v991 = vpack.c.b16 %v893, %v892
        %v992 = vpack.c.b16 %v895, %v894
        %v993 = vpack.c.b16 %v897, %v896
        %v994 = vpack.c.b16 %v899, %v898
        %v995 = vpack.c.b16 %v901, %v900
        %v996 = vpack.c.b16 %v903, %v902
        %v997 = vpack.c.b16 %v905, %v904
        %v998 = vpack.c.b16 %v907, %v906
        %v999 = vpack.c.b16 %v909, %v908
        %v1000 = vpack.c.b16 %v911, %v910
        %v1001 = vpack.c.b16 %v913, %v912
        %v1002 = vpack.c.b16 %v915, %v914
        %v1003 = vpack.c.b16 %v917, %v916
        %v1004 = vpack.c.b16 %v919, %v918
        %v1005 = vpack.c.b16 %v921, %v920
        %v1006 = vpack.c.b16 %v923, %v922
        %v1007 = vpack.c.b16 %v925, %v924
        %v1008 = vpack.c.b16 %v927, %v926
        %v1009 = vpack.c.b16 %v929, %v928
        %v1010 = vpack.c.b16 %v931, %v930
        %v1011 = vpack.c.b16 %v933, %v932
        %v1012 = vpack.c.b16 %v935, %v934
        %v1013 = vpack.c.b16 %v937, %v936
        %v1014 = vpack.c.b16 %v939, %v938
        %v1015 = vpack.c.b16 %v941, %v940
        %v1016 = vpack.c.b16 %v943, %v942
        %v1017 = vpack.c.b16 %v945, %v944
        %v1018 = vpack.c.b16 %v947, %v946
        %v1019 = vpack.c.b16 %v949, %v948
        %v1020 = vpack.c.b16 %v951, %v950
        %v1021 = vpack.c.b16 %v953, %v952
        %v1022 = vpack.c.b16 %v955, %v954
        %v1023 = vpack.c.b16 %v957, %v956
        %v1024 = vpack.c.b16 %v959, %v958
        %v1025 = vpack.c.b16 %v961, %v960
        %v1030 = vunpack.c.l.b16 %v702
        %v1031 = vunpack.c.l.b16 %v703
        %v1032 = vunpack.c.l.b16 %v704
        %v1033 = vunpack.c.l.b16 %v705
        %v1034 = vpack.c.b16 %v1031, %v1030
        %v1035 = vpack.c.b16 %v1033, %v1032
        %vm1037 = vcmask 220160
        %v1039 = vsel %vm1037, %v962, 0
        %v1042 = vsel %vm1037, %v963, 0
        %v1045 = vsel %vm1037, %v964, 0
        %v1048 = vsel %vm1037, %v965, 0
        %v1051 = vsel %vm1037, %v966, 0
        %v1054 = vsel %vm1037, %v967, 0
        %v1057 = vsel %vm1037, %v968, 0
        %v1060 = vsel %vm1037, %v969, 0
        %v1063 = vsel %vm1037, %v970, 0
        %v1066 = vsel %vm1037, %v971, 0
        %v1069 = vsel %vm1037, %v972, 0
        %v1072 = vsel %vm1037, %v973, 0
        %v1075 = vsel %vm1037, %v974, 0
        %v1078 = vsel %vm1037, %v975, 0
        %v1081 = vsel %vm1037, %v976, 0
        %v1084 = vsel %vm1037, %v977, 0
        %v1087 = vsel %vm1037, %v978, 0
        %v1090 = vsel %vm1037, %v979, 0
        %v1093 = vsel %vm1037, %v980, 0
        %v1096 = vsel %vm1037, %v981, 0
        %v1099 = vsel %vm1037, %v982, 0
        %v1102 = vsel %vm1037, %v983, 0
        %v1105 = vsel %vm1037, %v984, 0
        %v1108 = vsel %vm1037, %v985, 0
        %v1111 = vsel %vm1037, %v986, 0
        %v1114 = vsel %vm1037, %v987, 0
        %v1117 = vsel %vm1037, %v988, 0
        %v1120 = vsel %vm1037, %v989, 0
        %v1123 = vsel %vm1037, %v990, 0
        %v1126 = vsel %vm1037, %v991, 0
        %v1129 = vsel %vm1037, %v992, 0
        %v1132 = vsel %vm1037, %v993, 0
        %v1135 = vsel %vm1037, %v994, 0
        %v1138 = vsel %vm1037, %v995, 0
        %v1141 = vsel %vm1037, %v996, 0
        %v1144 = vsel %vm1037, %v997, 0
        %v1147 = vsel %vm1037, %v998, 0
        %v1150 = vsel %vm1037, %v999, 0
        %v1153 = vsel %vm1037, %v1000, 0
        %v1156 = vsel %vm1037, %v1001, 0
        %v1159 = vsel %vm1037, %v1002, 0
        %v1162 = vsel %vm1037, %v1003, 0
        %v1165 = vsel %vm1037, %v1004, 0
        %v1168 = vsel %vm1037, %v1005, 0
        %v1171 = vsel %vm1037, %v1006, 0
        %v1174 = vsel %vm1037, %v1007, 0
        %v1177 = vsel %vm1037, %v1008, 0
        %v1180 = vsel %vm1037, %v1009, 0
        %v1183 = vsel %vm1037, %v1010, 0
        %v1186 = vsel %vm1037, %v1011, 0
        %v1189 = vsel %vm1037, %v1012, 0
        %v1192 = vsel %vm1037, %v1013, 0
        %v1195 = vsel %vm1037, %v1014, 0
        %v1198 = vsel %vm1037, %v1015, 0
        %v1201 = vsel %vm1037, %v1016, 0
        %v1204 = vsel %vm1037, %v1017, 0
        %v1207 = vsel %vm1037, %v1018, 0
        %v1210 = vsel %vm1037, %v1019, 0
        %v1213 = vsel %vm1037, %v1020, 0
        %v1216 = vsel %vm1037, %v1021, 0
        %v1219 = vsel %vm1037, %v1022, 0
        %v1222 = vsel %vm1037, %v1023, 0
        %v1225 = vsel %vm1037, %v1024, 0
        %v1228 = vsel %vm1037, %v1025, 0
        %vm1230 = vcmask 1044480
        %vm1231 = vcmask 1045504
        %v1232 = vsel %vm1230, 4294967295, 65535
        %v1233 = vsel %vm1231, %v1232, 0
        %v1235 = vand.u32 %v1035, %v1233
        %1237 = vmatprep.subr.bf16.mxu0 0
        %1238 = vmatpush1.bf16.msra.mxu0 0
        %1239 = vmatprep.subr.bf16.mxu0 0
        %1240 = vmatpush1.bf16.msra.mxu0 0
        %1241 = vmatprep.subr.bf16.mxu0 0
        %1242 = vmatpush1.bf16.msra.mxu0 0
        %1243 = vmatprep.subr.bf16.mxu0 0
        %1244 = vmatpush1.bf16.msra.mxu0 0
        %1245 = vmatprep.subr.bf16.mxu0 0
        %1246 = vmatpush1.bf16.msra.mxu0 0
        %1247 = vmatprep.subr.bf16.mxu0 0
        %1248 = vmatpush1.bf16.msra.mxu0 0
        %1249 = vmatprep.subr.bf16.mxu0 0
        %1250 = vmatpush1.bf16.msra.mxu0 %v1235
        %1251 = vmatprep.subr.bf16.mxu0 0
        %1252 = vmatpush1.bf16.msra.mxu0 %v1034
        %1253 = vmatprep.subr.bf16.mxu0 0
        %1254 = vmatpush2.bf16.msra.mxu0 0
        %1255 = vmatprep.subr.bf16.mxu0 0
        %1256 = vmatpush2.bf16.msra.mxu0 0
        %1257 = vmatprep.subr.bf16.mxu0 0
        %1258 = vmatpush2.bf16.msra.mxu0 0
        %1259 = vmatprep.subr.bf16.mxu0 0
        %1260 = vmatpush2.bf16.msra.mxu0 0
        %1261 = vmatprep.subr.bf16.mxu0 0
        %1262 = vmatpush2.bf16.msra.mxu0 0
        %1263 = vmatprep.subr.bf16.mxu0 0
        %1264 = vmatpush2.bf16.msra.mxu0 0
        %1265 = vmatprep.subr.bf16.mxu0 0
        %1266 = vmatpush2.bf16.msra.mxu0 0
        %1267 = vmatprep.subr.bf16.mxu0 0
        %1268 = vmatpush2.bf16.msra.mxu0 0
        %1269 = vmatprep.mubr.bf16.mxu0 0
        %1270 = vmatmul.mubr.bf16.gmra.mxu0 %v1039
        %v1271 = vpop.f32.mrf.mxu0
        %v1272 = vadd.f32 0.0, %v1271
        %v1273 = vpop.f32.mrf.mxu0
        %v1274 = vpop.f32.mrf.mxu0
        %v1275 = vadd.f32 0.0, %v1274
        %v1276 = vpop.f32.mrf.mxu0
        %1277 = vmatprep.mubr.bf16.mxu0 0
        %1278 = vmatmul.mubr.bf16.gmra.mxu0 %v1042
        %v1279 = vpop.f32.mrf.mxu0
        %v1280 = vadd.f32 0.0, %v1279
        %v1281 = vpop.f32.mrf.mxu0
        %v1282 = vpop.f32.mrf.mxu0
        %v1283 = vadd.f32 0.0, %v1282
        %v1284 = vpop.f32.mrf.mxu0
        %1285 = vmatprep.mubr.bf16.mxu0 0
        %1286 = vmatmul.mubr.bf16.gmra.mxu0 %v1045
        %v1287 = vpop.f32.mrf.mxu0
        %v1288 = vadd.f32 0.0, %v1287
        %v1289 = vpop.f32.mrf.mxu0
        %v1290 = vpop.f32.mrf.mxu0
        %v1291 = vadd.f32 0.0, %v1290
        %v1292 = vpop.f32.mrf.mxu0
        %1293 = vmatprep.mubr.bf16.mxu0 0
        %1294 = vmatmul.mubr.bf16.gmra.mxu0 %v1048
        %v1295 = vpop.f32.mrf.mxu0
        %v1296 = vadd.f32 0.0, %v1295
        %v1297 = vpop.f32.mrf.mxu0
        %v1298 = vpop.f32.mrf.mxu0
        %v1299 = vadd.f32 0.0, %v1298
        %v1300 = vpop.f32.mrf.mxu0
        %1301 = vmatprep.mubr.bf16.mxu0 0
        %1302 = vmatmul.mubr.bf16.gmra.mxu0 %v1051
        %v1303 = vpop.f32.mrf.mxu0
        %v1304 = vadd.f32 0.0, %v1303
        %v1305 = vpop.f32.mrf.mxu0
        %v1306 = vpop.f32.mrf.mxu0
        %v1307 = vadd.f32 0.0, %v1306
        %v1308 = vpop.f32.mrf.mxu0
        %1309 = vmatprep.mubr.bf16.mxu0 0
        %1310 = vmatmul.mubr.bf16.gmra.mxu0 %v1054
        %v1311 = vpop.f32.mrf.mxu0
        %v1312 = vadd.f32 0.0, %v1311
        %v1313 = vpop.f32.mrf.mxu0
        %v1314 = vpop.f32.mrf.mxu0
        %v1315 = vadd.f32 0.0, %v1314
        %v1316 = vpop.f32.mrf.mxu0
        %1317 = vmatprep.mubr.bf16.mxu0 0
        %1318 = vmatmul.mubr.bf16.gmra.mxu0 %v1057
        %v1319 = vpop.f32.mrf.mxu0
        %v1320 = vadd.f32 0.0, %v1319
        %v1321 = vpop.f32.mrf.mxu0
        %v1322 = vpop.f32.mrf.mxu0
        %v1323 = vadd.f32 0.0, %v1322
        %v1324 = vpop.f32.mrf.mxu0
        %1325 = vmatprep.mubr.bf16.mxu0 0
        %1326 = vmatmul.mubr.bf16.gmra.mxu0 %v1060
        %v1327 = vpop.f32.mrf.mxu0
        %v1328 = vadd.f32 0.0, %v1327
        %v1329 = vpop.f32.mrf.mxu0
        %v1330 = vpop.f32.mrf.mxu0
        %v1331 = vadd.f32 0.0, %v1330
        %v1332 = vpop.f32.mrf.mxu0
        %1333 = vmatprep.mubr.bf16.mxu0 0
        %1334 = vmatmul.mubr.bf16.gmra.mxu0 %v1063
        %v1335 = vpop.f32.mrf.mxu0
        %v1336 = vadd.f32 0.0, %v1335
        %v1337 = vpop.f32.mrf.mxu0
        %v1338 = vpop.f32.mrf.mxu0
        %v1339 = vadd.f32 0.0, %v1338
        %v1340 = vpop.f32.mrf.mxu0
        %1341 = vmatprep.mubr.bf16.mxu0 0
        %1342 = vmatmul.mubr.bf16.gmra.mxu0 %v1066
        %v1343 = vpop.f32.mrf.mxu0
        %v1344 = vadd.f32 0.0, %v1343
        %v1345 = vpop.f32.mrf.mxu0
        %v1346 = vpop.f32.mrf.mxu0
        %v1347 = vadd.f32 0.0, %v1346
        %v1348 = vpop.f32.mrf.mxu0
        %1349 = vmatprep.mubr.bf16.mxu0 0
        %1350 = vmatmul.mubr.bf16.gmra.mxu0 %v1069
        %v1351 = vpop.f32.mrf.mxu0
        %v1352 = vadd.f32 0.0, %v1351
        %v1353 = vpop.f32.mrf.mxu0
        %v1354 = vpop.f32.mrf.mxu0
        %v1355 = vadd.f32 0.0, %v1354
        %v1356 = vpop.f32.mrf.mxu0
        %1357 = vmatprep.mubr.bf16.mxu0 0
        %1358 = vmatmul.mubr.bf16.gmra.mxu0 %v1072
        %v1359 = vpop.f32.mrf.mxu0
        %v1360 = vadd.f32 0.0, %v1359
        %v1361 = vpop.f32.mrf.mxu0
        %v1362 = vpop.f32.mrf.mxu0
        %v1363 = vadd.f32 0.0, %v1362
        %v1364 = vpop.f32.mrf.mxu0
        %1365 = vmatprep.mubr.bf16.mxu0 0
        %1366 = vmatmul.mubr.bf16.gmra.mxu0 %v1075
        %v1367 = vpop.f32.mrf.mxu0
        %v1368 = vadd.f32 0.0, %v1367
        %v1369 = vpop.f32.mrf.mxu0
        %v1370 = vpop.f32.mrf.mxu0
        %v1371 = vadd.f32 0.0, %v1370
        %v1372 = vpop.f32.mrf.mxu0
        %1373 = vmatprep.mubr.bf16.mxu0 0
        %1374 = vmatmul.mubr.bf16.gmra.mxu0 %v1078
        %v1375 = vpop.f32.mrf.mxu0
        %v1376 = vadd.f32 0.0, %v1375
        %v1377 = vpop.f32.mrf.mxu0
        %v1378 = vpop.f32.mrf.mxu0
        %v1379 = vadd.f32 0.0, %v1378
        %v1380 = vpop.f32.mrf.mxu0
        %1381 = vmatprep.mubr.bf16.mxu0 0
        %1382 = vmatmul.mubr.bf16.gmra.mxu0 %v1081
        %v1383 = vpop.f32.mrf.mxu0
        %v1384 = vadd.f32 0.0, %v1383
        %v1385 = vpop.f32.mrf.mxu0
        %v1386 = vpop.f32.mrf.mxu0
        %v1387 = vadd.f32 0.0, %v1386
        %v1388 = vpop.f32.mrf.mxu0
        %1389 = vmatprep.mubr.bf16.mxu0 0
        %1390 = vmatmul.mubr.bf16.gmra.mxu0 %v1084
        %v1391 = vpop.f32.mrf.mxu0
        %v1392 = vadd.f32 0.0, %v1391
        %v1393 = vpop.f32.mrf.mxu0
        %v1394 = vpop.f32.mrf.mxu0
        %v1395 = vadd.f32 0.0, %v1394
        %v1396 = vpop.f32.mrf.mxu0
        %1397 = vmatprep.mubr.bf16.mxu0 0
        %1398 = vmatmul.mubr.bf16.gmra.mxu0 %v1087
        %v1399 = vpop.f32.mrf.mxu0
        %v1400 = vadd.f32 0.0, %v1399
        %v1401 = vpop.f32.mrf.mxu0
        %v1402 = vpop.f32.mrf.mxu0
        %v1403 = vadd.f32 0.0, %v1402
        %v1404 = vpop.f32.mrf.mxu0
        %1405 = vmatprep.mubr.bf16.mxu0 0
        %1406 = vmatmul.mubr.bf16.gmra.mxu0 %v1090
        %v1407 = vpop.f32.mrf.mxu0
        %v1408 = vadd.f32 0.0, %v1407
        %v1409 = vpop.f32.mrf.mxu0
        %v1410 = vpop.f32.mrf.mxu0
        %v1411 = vadd.f32 0.0, %v1410
        %v1412 = vpop.f32.mrf.mxu0
        %1413 = vmatprep.mubr.bf16.mxu0 0
        %1414 = vmatmul.mubr.bf16.gmra.mxu0 %v1093
        %v1415 = vpop.f32.mrf.mxu0
        %v1416 = vadd.f32 0.0, %v1415
        %v1417 = vpop.f32.mrf.mxu0
        %v1418 = vpop.f32.mrf.mxu0
        %v1419 = vadd.f32 0.0, %v1418
        %v1420 = vpop.f32.mrf.mxu0
        %1421 = vmatprep.mubr.bf16.mxu0 0
        %1422 = vmatmul.mubr.bf16.gmra.mxu0 %v1096
        %v1423 = vpop.f32.mrf.mxu0
        %v1424 = vadd.f32 0.0, %v1423
        %v1425 = vpop.f32.mrf.mxu0
        %v1426 = vpop.f32.mrf.mxu0
        %v1427 = vadd.f32 0.0, %v1426
        %v1428 = vpop.f32.mrf.mxu0
        %1429 = vmatprep.mubr.bf16.mxu0 0
        %1430 = vmatmul.mubr.bf16.gmra.mxu0 %v1099
        %v1431 = vpop.f32.mrf.mxu0
        %v1432 = vadd.f32 0.0, %v1431
        %v1433 = vpop.f32.mrf.mxu0
        %v1434 = vpop.f32.mrf.mxu0
        %v1435 = vadd.f32 0.0, %v1434
        %v1436 = vpop.f32.mrf.mxu0
        %1437 = vmatprep.mubr.bf16.mxu0 0
        %1438 = vmatmul.mubr.bf16.gmra.mxu0 %v1102
        %v1439 = vpop.f32.mrf.mxu0
        %v1440 = vadd.f32 0.0, %v1439
        %v1441 = vpop.f32.mrf.mxu0
        %v1442 = vpop.f32.mrf.mxu0
        %v1443 = vadd.f32 0.0, %v1442
        %v1444 = vpop.f32.mrf.mxu0
        %1445 = vmatprep.mubr.bf16.mxu0 0
        %1446 = vmatmul.mubr.bf16.gmra.mxu0 %v1105
        %v1447 = vpop.f32.mrf.mxu0
        %v1448 = vadd.f32 0.0, %v1447
        %v1449 = vpop.f32.mrf.mxu0
        %v1450 = vpop.f32.mrf.mxu0
        %v1451 = vadd.f32 0.0, %v1450
        %v1452 = vpop.f32.mrf.mxu0
        %1453 = vmatprep.mubr.bf16.mxu0 0
        %1454 = vmatmul.mubr.bf16.gmra.mxu0 %v1108
        %v1455 = vpop.f32.mrf.mxu0
        %v1456 = vadd.f32 0.0, %v1455
        %v1457 = vpop.f32.mrf.mxu0
        %v1458 = vpop.f32.mrf.mxu0
        %v1459 = vadd.f32 0.0, %v1458
        %v1460 = vpop.f32.mrf.mxu0
        %1461 = vmatprep.mubr.bf16.mxu0 0
        %1462 = vmatmul.mubr.bf16.gmra.mxu0 %v1111
        %v1463 = vpop.f32.mrf.mxu0
        %v1464 = vadd.f32 0.0, %v1463
        %v1465 = vpop.f32.mrf.mxu0
        %v1466 = vpop.f32.mrf.mxu0
        %v1467 = vadd.f32 0.0, %v1466
        %v1468 = vpop.f32.mrf.mxu0
        %1469 = vmatprep.mubr.bf16.mxu0 0
        %1470 = vmatmul.mubr.bf16.gmra.mxu0 %v1114
        %v1471 = vpop.f32.mrf.mxu0
        %v1472 = vadd.f32 0.0, %v1471
        %v1473 = vpop.f32.mrf.mxu0
        %v1474 = vpop.f32.mrf.mxu0
        %v1475 = vadd.f32 0.0, %v1474
        %v1476 = vpop.f32.mrf.mxu0
        %1477 = vmatprep.mubr.bf16.mxu0 0
        %1478 = vmatmul.mubr.bf16.gmra.mxu0 %v1117
        %v1479 = vpop.f32.mrf.mxu0
        %v1480 = vadd.f32 0.0, %v1479
        %v1481 = vpop.f32.mrf.mxu0
        %v1482 = vpop.f32.mrf.mxu0
        %v1483 = vadd.f32 0.0, %v1482
        %v1484 = vpop.f32.mrf.mxu0
        %1485 = vmatprep.mubr.bf16.mxu0 0
        %1486 = vmatmul.mubr.bf16.gmra.mxu0 %v1120
        %v1487 = vpop.f32.mrf.mxu0
        %v1488 = vadd.f32 0.0, %v1487
        %v1489 = vpop.f32.mrf.mxu0
        %v1490 = vpop.f32.mrf.mxu0
        %v1491 = vadd.f32 0.0, %v1490
        %v1492 = vpop.f32.mrf.mxu0
        %1493 = vmatprep.mubr.bf16.mxu0 0
        %1494 = vmatmul.mubr.bf16.gmra.mxu0 %v1123
        %v1495 = vpop.f32.mrf.mxu0
        %v1496 = vadd.f32 0.0, %v1495
        %v1497 = vpop.f32.mrf.mxu0
        %v1498 = vpop.f32.mrf.mxu0
        %v1499 = vadd.f32 0.0, %v1498
        %v1500 = vpop.f32.mrf.mxu0
        %1501 = vmatprep.mubr.bf16.mxu0 0
        %1502 = vmatmul.mubr.bf16.gmra.mxu0 %v1126
        %v1503 = vpop.f32.mrf.mxu0
        %v1504 = vadd.f32 0.0, %v1503
        %v1505 = vpop.f32.mrf.mxu0
        %v1506 = vpop.f32.mrf.mxu0
        %v1507 = vadd.f32 0.0, %v1506
        %v1508 = vpop.f32.mrf.mxu0
        %1509 = vmatprep.mubr.bf16.mxu0 0
        %1510 = vmatmul.mubr.bf16.gmra.mxu0 %v1129
        %v1511 = vpop.f32.mrf.mxu0
        %v1512 = vadd.f32 0.0, %v1511
        %v1513 = vpop.f32.mrf.mxu0
        %v1514 = vpop.f32.mrf.mxu0
        %v1515 = vadd.f32 0.0, %v1514
        %v1516 = vpop.f32.mrf.mxu0
        %1517 = vmatprep.mubr.bf16.mxu0 0
        %1518 = vmatmul.mubr.bf16.gmra.mxu0 %v1132
        %v1519 = vpop.f32.mrf.mxu0
        %v1520 = vadd.f32 0.0, %v1519
        %v1521 = vpop.f32.mrf.mxu0
        %v1522 = vpop.f32.mrf.mxu0
        %v1523 = vadd.f32 0.0, %v1522
        %v1524 = vpop.f32.mrf.mxu0
        %1525 = vmatprep.mubr.bf16.mxu0 0
        %1526 = vmatmul.mubr.bf16.gmra.mxu0 %v1135
        %v1527 = vpop.f32.mrf.mxu0
        %v1528 = vadd.f32 0.0, %v1527
        %v1529 = vpop.f32.mrf.mxu0
        %v1530 = vpop.f32.mrf.mxu0
        %v1531 = vadd.f32 0.0, %v1530
        %v1532 = vpop.f32.mrf.mxu0
        %1533 = vmatprep.mubr.bf16.mxu0 0
        %1534 = vmatmul.mubr.bf16.gmra.mxu0 %v1138
        %v1535 = vpop.f32.mrf.mxu0
        %v1536 = vadd.f32 0.0, %v1535
        %v1537 = vpop.f32.mrf.mxu0
        %v1538 = vpop.f32.mrf.mxu0
        %v1539 = vadd.f32 0.0, %v1538
        %v1540 = vpop.f32.mrf.mxu0
        %1541 = vmatprep.mubr.bf16.mxu0 0
        %1542 = vmatmul.mubr.bf16.gmra.mxu0 %v1141
        %v1543 = vpop.f32.mrf.mxu0
        %v1544 = vadd.f32 0.0, %v1543
        %v1545 = vpop.f32.mrf.mxu0
        %v1546 = vpop.f32.mrf.mxu0
        %v1547 = vadd.f32 0.0, %v1546
        %v1548 = vpop.f32.mrf.mxu0
        %1549 = vmatprep.mubr.bf16.mxu0 0
        %1550 = vmatmul.mubr.bf16.gmra.mxu0 %v1144
        %v1551 = vpop.f32.mrf.mxu0
        %v1552 = vadd.f32 0.0, %v1551
        %v1553 = vpop.f32.mrf.mxu0
        %v1554 = vpop.f32.mrf.mxu0
        %v1555 = vadd.f32 0.0, %v1554
        %v1556 = vpop.f32.mrf.mxu0
        %1557 = vmatprep.mubr.bf16.mxu0 0
        %1558 = vmatmul.mubr.bf16.gmra.mxu0 %v1147
        %v1559 = vpop.f32.mrf.mxu0
        %v1560 = vadd.f32 0.0, %v1559
        %v1561 = vpop.f32.mrf.mxu0
        %v1562 = vpop.f32.mrf.mxu0
        %v1563 = vadd.f32 0.0, %v1562
        %v1564 = vpop.f32.mrf.mxu0
        %1565 = vmatprep.mubr.bf16.mxu0 0
        %1566 = vmatmul.mubr.bf16.gmra.mxu0 %v1150
        %v1567 = vpop.f32.mrf.mxu0
        %v1568 = vadd.f32 0.0, %v1567
        %v1569 = vpop.f32.mrf.mxu0
        %v1570 = vpop.f32.mrf.mxu0
        %v1571 = vadd.f32 0.0, %v1570
        %v1572 = vpop.f32.mrf.mxu0
        %1573 = vmatprep.mubr.bf16.mxu0 0
        %1574 = vmatmul.mubr.bf16.gmra.mxu0 %v1153
        %v1575 = vpop.f32.mrf.mxu0
        %v1576 = vadd.f32 0.0, %v1575
        %v1577 = vpop.f32.mrf.mxu0
        %v1578 = vpop.f32.mrf.mxu0
        %v1579 = vadd.f32 0.0, %v1578
        %v1580 = vpop.f32.mrf.mxu0
        %1581 = vmatprep.mubr.bf16.mxu0 0
        %1582 = vmatmul.mubr.bf16.gmra.mxu0 %v1156
        %v1583 = vpop.f32.mrf.mxu0
        %v1584 = vadd.f32 0.0, %v1583
        %v1585 = vpop.f32.mrf.mxu0
        %v1586 = vpop.f32.mrf.mxu0
        %v1587 = vadd.f32 0.0, %v1586
        %v1588 = vpop.f32.mrf.mxu0
        %1589 = vmatprep.mubr.bf16.mxu0 0
        %1590 = vmatmul.mubr.bf16.gmra.mxu0 %v1159
        %v1591 = vpop.f32.mrf.mxu0
        %v1592 = vadd.f32 0.0, %v1591
        %v1593 = vpop.f32.mrf.mxu0
        %v1594 = vpop.f32.mrf.mxu0
        %v1595 = vadd.f32 0.0, %v1594
        %v1596 = vpop.f32.mrf.mxu0
        %1597 = vmatprep.mubr.bf16.mxu0 0
        %1598 = vmatmul.mubr.bf16.gmra.mxu0 %v1162
        %v1599 = vpop.f32.mrf.mxu0
        %v1600 = vadd.f32 0.0, %v1599
        %v1601 = vpop.f32.mrf.mxu0
        %v1602 = vpop.f32.mrf.mxu0
        %v1603 = vadd.f32 0.0, %v1602
        %v1604 = vpop.f32.mrf.mxu0
        %1605 = vmatprep.mubr.bf16.mxu0 0
        %1606 = vmatmul.mubr.bf16.gmra.mxu0 %v1165
        %v1607 = vpop.f32.mrf.mxu0
        %v1608 = vadd.f32 0.0, %v1607
        %v1609 = vpop.f32.mrf.mxu0
        %v1610 = vpop.f32.mrf.mxu0
        %v1611 = vadd.f32 0.0, %v1610
        %v1612 = vpop.f32.mrf.mxu0
        %1613 = vmatprep.mubr.bf16.mxu0 0
        %1614 = vmatmul.mubr.bf16.gmra.mxu0 %v1168
        %v1615 = vpop.f32.mrf.mxu0
        %v1616 = vadd.f32 0.0, %v1615
        %v1617 = vpop.f32.mrf.mxu0
        %v1618 = vpop.f32.mrf.mxu0
        %v1619 = vadd.f32 0.0, %v1618
        %v1620 = vpop.f32.mrf.mxu0
        %1621 = vmatprep.mubr.bf16.mxu0 0
        %1622 = vmatmul.mubr.bf16.gmra.mxu0 %v1171
        %v1623 = vpop.f32.mrf.mxu0
        %v1624 = vadd.f32 0.0, %v1623
        %v1625 = vpop.f32.mrf.mxu0
        %v1626 = vpop.f32.mrf.mxu0
        %v1627 = vadd.f32 0.0, %v1626
        %v1628 = vpop.f32.mrf.mxu0
        %1629 = vmatprep.mubr.bf16.mxu0 0
        %1630 = vmatmul.mubr.bf16.gmra.mxu0 %v1174
        %v1631 = vpop.f32.mrf.mxu0
        %v1632 = vadd.f32 0.0, %v1631
        %v1633 = vpop.f32.mrf.mxu0
        %v1634 = vpop.f32.mrf.mxu0
        %v1635 = vadd.f32 0.0, %v1634
        %v1636 = vpop.f32.mrf.mxu0
        %1637 = vmatprep.mubr.bf16.mxu0 0
        %1638 = vmatmul.mubr.bf16.gmra.mxu0 %v1177
        %v1639 = vpop.f32.mrf.mxu0
        %v1640 = vadd.f32 0.0, %v1639
        %v1641 = vpop.f32.mrf.mxu0
        %v1642 = vpop.f32.mrf.mxu0
        %v1643 = vadd.f32 0.0, %v1642
        %v1644 = vpop.f32.mrf.mxu0
        %1645 = vmatprep.mubr.bf16.mxu0 0
        %1646 = vmatmul.mubr.bf16.gmra.mxu0 %v1180
        %v1647 = vpop.f32.mrf.mxu0
        %v1648 = vadd.f32 0.0, %v1647
        %v1649 = vpop.f32.mrf.mxu0
        %v1650 = vpop.f32.mrf.mxu0
        %v1651 = vadd.f32 0.0, %v1650
        %v1652 = vpop.f32.mrf.mxu0
        %1653 = vmatprep.mubr.bf16.mxu0 0
        %1654 = vmatmul.mubr.bf16.gmra.mxu0 %v1183
        %v1655 = vpop.f32.mrf.mxu0
        %v1656 = vadd.f32 0.0, %v1655
        %v1657 = vpop.f32.mrf.mxu0
        %v1658 = vpop.f32.mrf.mxu0
        %v1659 = vadd.f32 0.0, %v1658
        %v1660 = vpop.f32.mrf.mxu0
        %1661 = vmatprep.mubr.bf16.mxu0 0
        %1662 = vmatmul.mubr.bf16.gmra.mxu0 %v1186
        %v1663 = vpop.f32.mrf.mxu0
        %v1664 = vadd.f32 0.0, %v1663
        %v1665 = vpop.f32.mrf.mxu0
        %v1666 = vpop.f32.mrf.mxu0
        %v1667 = vadd.f32 0.0, %v1666
        %v1668 = vpop.f32.mrf.mxu0
        %1669 = vmatprep.mubr.bf16.mxu0 0
        %1670 = vmatmul.mubr.bf16.gmra.mxu0 %v1189
        %v1671 = vpop.f32.mrf.mxu0
        %v1672 = vadd.f32 0.0, %v1671
        %v1673 = vpop.f32.mrf.mxu0
        %v1674 = vpop.f32.mrf.mxu0
        %v1675 = vadd.f32 0.0, %v1674
        %v1676 = vpop.f32.mrf.mxu0
        %1677 = vmatprep.mubr.bf16.mxu0 0
        %1678 = vmatmul.mubr.bf16.gmra.mxu0 %v1192
        %v1679 = vpop.f32.mrf.mxu0
        %v1680 = vadd.f32 0.0, %v1679
        %v1681 = vpop.f32.mrf.mxu0
        %v1682 = vpop.f32.mrf.mxu0
        %v1683 = vadd.f32 0.0, %v1682
        %v1684 = vpop.f32.mrf.mxu0
        %1685 = vmatprep.mubr.bf16.mxu0 0
        %1686 = vmatmul.mubr.bf16.gmra.mxu0 %v1195
        %v1687 = vpop.f32.mrf.mxu0
        %v1688 = vadd.f32 0.0, %v1687
        %v1689 = vpop.f32.mrf.mxu0
        %v1690 = vpop.f32.mrf.mxu0
        %v1691 = vadd.f32 0.0, %v1690
        %v1692 = vpop.f32.mrf.mxu0
        %1693 = vmatprep.mubr.bf16.mxu0 0
        %1694 = vmatmul.mubr.bf16.gmra.mxu0 %v1198
        %v1695 = vpop.f32.mrf.mxu0
        %v1696 = vadd.f32 0.0, %v1695
        %v1697 = vpop.f32.mrf.mxu0
        %v1698 = vpop.f32.mrf.mxu0
        %v1699 = vadd.f32 0.0, %v1698
        %v1700 = vpop.f32.mrf.mxu0
        %1701 = vmatprep.mubr.bf16.mxu0 0
        %1702 = vmatmul.mubr.bf16.gmra.mxu0 %v1201
        %v1703 = vpop.f32.mrf.mxu0
        %v1704 = vadd.f32 0.0, %v1703
        %v1705 = vpop.f32.mrf.mxu0
        %v1706 = vpop.f32.mrf.mxu0
        %v1707 = vadd.f32 0.0, %v1706
        %v1708 = vpop.f32.mrf.mxu0
        %1709 = vmatprep.mubr.bf16.mxu0 0
        %1710 = vmatmul.mubr.bf16.gmra.mxu0 %v1204
        %v1711 = vpop.f32.mrf.mxu0
        %v1712 = vadd.f32 0.0, %v1711
        %v1713 = vpop.f32.mrf.mxu0
        %v1714 = vpop.f32.mrf.mxu0
        %v1715 = vadd.f32 0.0, %v1714
        %v1716 = vpop.f32.mrf.mxu0
        %1717 = vmatprep.mubr.bf16.mxu0 0
        %1718 = vmatmul.mubr.bf16.gmra.mxu0 %v1207
        %v1719 = vpop.f32.mrf.mxu0
        %v1720 = vadd.f32 0.0, %v1719
        %v1721 = vpop.f32.mrf.mxu0
        %v1722 = vpop.f32.mrf.mxu0
        %v1723 = vadd.f32 0.0, %v1722
        %v1724 = vpop.f32.mrf.mxu0
        %1725 = vmatprep.mubr.bf16.mxu0 0
        %1726 = vmatmul.mubr.bf16.gmra.mxu0 %v1210
        %v1727 = vpop.f32.mrf.mxu0
        %v1728 = vadd.f32 0.0, %v1727
        %v1729 = vpop.f32.mrf.mxu0
        %v1730 = vpop.f32.mrf.mxu0
        %v1731 = vadd.f32 0.0, %v1730
        %v1732 = vpop.f32.mrf.mxu0
        %1733 = vmatprep.mubr.bf16.mxu0 0
        %1734 = vmatmul.mubr.bf16.gmra.mxu0 %v1213
        %v1735 = vpop.f32.mrf.mxu0
        %v1736 = vadd.f32 0.0, %v1735
        %v1737 = vpop.f32.mrf.mxu0
        %v1738 = vpop.f32.mrf.mxu0
        %v1739 = vadd.f32 0.0, %v1738
        %v1740 = vpop.f32.mrf.mxu0
        %1741 = vmatprep.mubr.bf16.mxu0 0
        %1742 = vmatmul.mubr.bf16.gmra.mxu0 %v1216
        %v1743 = vpop.f32.mrf.mxu0
        %v1744 = vadd.f32 0.0, %v1743
        %v1745 = vpop.f32.mrf.mxu0
        %v1746 = vpop.f32.mrf.mxu0
        %v1747 = vadd.f32 0.0, %v1746
        %v1748 = vpop.f32.mrf.mxu0
        %1749 = vmatprep.mubr.bf16.mxu0 0
        %1750 = vmatmul.mubr.bf16.gmra.mxu0 %v1219
        %v1751 = vpop.f32.mrf.mxu0
        %v1752 = vadd.f32 0.0, %v1751
        %v1753 = vpop.f32.mrf.mxu0
        %v1754 = vpop.f32.mrf.mxu0
        %v1755 = vadd.f32 0.0, %v1754
        %v1756 = vpop.f32.mrf.mxu0
        %1757 = vmatprep.mubr.bf16.mxu0 0
        %1758 = vmatmul.mubr.bf16.gmra.mxu0 %v1222
        %v1759 = vpop.f32.mrf.mxu0
        %v1760 = vadd.f32 0.0, %v1759
        %v1761 = vpop.f32.mrf.mxu0
        %v1762 = vpop.f32.mrf.mxu0
        %v1763 = vadd.f32 0.0, %v1762
        %v1764 = vpop.f32.mrf.mxu0
        %1765 = vmatprep.mubr.bf16.mxu0 0
        %1766 = vmatmul.mubr.bf16.gmra.mxu0 %v1225
        %v1767 = vpop.f32.mrf.mxu0
        %v1768 = vadd.f32 0.0, %v1767
        %v1769 = vpop.f32.mrf.mxu0
        %v1770 = vpop.f32.mrf.mxu0
        %v1771 = vadd.f32 0.0, %v1770
        %v1772 = vpop.f32.mrf.mxu0
        %1773 = vmatprep.mubr.bf16.mxu0 0
        %1774 = vmatmul.mubr.bf16.gmra.mxu0 %v1228
        %v1775 = vpop.f32.mrf.mxu0
        %v1776 = vadd.f32 0.0, %v1775
        %v1777 = vpop.f32.mrf.mxu0
        %v1778 = vpop.f32.mrf.mxu0
        %v1779 = vadd.f32 0.0, %v1778
        %v1780 = vpop.f32.mrf.mxu0
        %1781 = vdwg.mxu0
        %v1782 = vadd.f32 %v446, %v1272
        %v1783 = vadd.f32 %v447, %v1275
        %v1784 = vadd.f32 %v448, %v1280
        %v1785 = vadd.f32 %v449, %v1283
        %v1786 = vadd.f32 %v450, %v1288
        %v1787 = vadd.f32 %v451, %v1291
        %v1788 = vadd.f32 %v452, %v1296
        %v1789 = vadd.f32 %v453, %v1299
        %v1790 = vadd.f32 %v454, %v1304
        %v1791 = vadd.f32 %v455, %v1307
        %v1792 = vadd.f32 %v456, %v1312
        %v1793 = vadd.f32 %v457, %v1315
        %v1794 = vadd.f32 %v458, %v1320
        %v1795 = vadd.f32 %v459, %v1323
        %v1796 = vadd.f32 %v460, %v1328
        %v1797 = vadd.f32 %v461, %v1331
        %v1798 = vadd.f32 %v462, %v1336
        %v1799 = vadd.f32 %v463, %v1339
        %v1800 = vadd.f32 %v464, %v1344
        %v1801 = vadd.f32 %v465, %v1347
        %v1802 = vadd.f32 %v466, %v1352
        %v1803 = vadd.f32 %v467, %v1355
        %v1804 = vadd.f32 %v468, %v1360
        %v1805 = vadd.f32 %v469, %v1363
        %v1806 = vadd.f32 %v470, %v1368
        %v1807 = vadd.f32 %v471, %v1371
        %v1808 = vadd.f32 %v472, %v1376
        %v1809 = vadd.f32 %v473, %v1379
        %v1810 = vadd.f32 %v474, %v1384
        %v1811 = vadd.f32 %v475, %v1387
        %v1812 = vadd.f32 %v476, %v1392
        %v1813 = vadd.f32 %v477, %v1395
        %v1814 = vadd.f32 %v478, %v1400
        %v1815 = vadd.f32 %v479, %v1403
        %v1816 = vadd.f32 %v480, %v1408
        %v1817 = vadd.f32 %v481, %v1411
        %v1818 = vadd.f32 %v482, %v1416
        %v1819 = vadd.f32 %v483, %v1419
        %v1820 = vadd.f32 %v484, %v1424
        %v1821 = vadd.f32 %v485, %v1427
        %v1822 = vadd.f32 %v486, %v1432
        %v1823 = vadd.f32 %v487, %v1435
        %v1824 = vadd.f32 %v488, %v1440
        %v1825 = vadd.f32 %v489, %v1443
        %v1826 = vadd.f32 %v490, %v1448
        %v1827 = vadd.f32 %v491, %v1451
        %v1828 = vadd.f32 %v492, %v1456
        %v1829 = vadd.f32 %v493, %v1459
        %v1830 = vadd.f32 %v494, %v1464
        %v1831 = vadd.f32 %v495, %v1467
        %v1832 = vadd.f32 %v496, %v1472
        %v1833 = vadd.f32 %v497, %v1475
        %v1834 = vadd.f32 %v498, %v1480
        %v1835 = vadd.f32 %v499, %v1483
        %v1836 = vadd.f32 %v500, %v1488
        %v1837 = vadd.f32 %v501, %v1491
        %v1838 = vadd.f32 %v502, %v1496
        %v1839 = vadd.f32 %v503, %v1499
        %v1840 = vadd.f32 %v504, %v1504
        %v1841 = vadd.f32 %v505, %v1507
        %v1842 = vadd.f32 %v506, %v1512
        %v1843 = vadd.f32 %v507, %v1515
        %v1844 = vadd.f32 %v508, %v1520
        %v1845 = vadd.f32 %v509, %v1523
        %v1846 = vadd.f32 %v510, %v1528
        %v1847 = vadd.f32 %v511, %v1531
        %v1848 = vadd.f32 %v512, %v1536
        %v1849 = vadd.f32 %v513, %v1539
        %v1850 = vadd.f32 %v514, %v1544
        %v1851 = vadd.f32 %v515, %v1547
        %v1852 = vadd.f32 %v516, %v1552
        %v1853 = vadd.f32 %v517, %v1555
        %v1854 = vadd.f32 %v518, %v1560
        %v1855 = vadd.f32 %v519, %v1563
        %v1856 = vadd.f32 %v520, %v1568
        %v1857 = vadd.f32 %v521, %v1571
        %v1858 = vadd.f32 %v522, %v1576
        %v1859 = vadd.f32 %v523, %v1579
        %v1860 = vadd.f32 %v524, %v1584
        %v1861 = vadd.f32 %v525, %v1587
        %v1862 = vadd.f32 %v526, %v1592
        %v1863 = vadd.f32 %v527, %v1595
        %v1864 = vadd.f32 %v528, %v1600
        %v1865 = vadd.f32 %v529, %v1603
        %v1866 = vadd.f32 %v530, %v1608
        %v1867 = vadd.f32 %v531, %v1611
        %v1868 = vadd.f32 %v532, %v1616
        %v1869 = vadd.f32 %v533, %v1619
        %v1870 = vadd.f32 %v534, %v1624
        %v1871 = vadd.f32 %v535, %v1627
        %v1872 = vadd.f32 %v536, %v1632
        %v1873 = vadd.f32 %v537, %v1635
        %v1874 = vadd.f32 %v538, %v1640
        %v1875 = vadd.f32 %v539, %v1643
        %v1876 = vadd.f32 %v540, %v1648
        %v1877 = vadd.f32 %v541, %v1651
        %v1878 = vadd.f32 %v542, %v1656
        %v1879 = vadd.f32 %v543, %v1659
        %v1880 = vadd.f32 %v544, %v1664
        %v1881 = vadd.f32 %v545, %v1667
        %v1882 = vadd.f32 %v546, %v1672
        %v1883 = vadd.f32 %v547, %v1675
        %v1884 = vadd.f32 %v548, %v1680
        %v1885 = vadd.f32 %v549, %v1683
        %v1886 = vadd.f32 %v550, %v1688
        %v1887 = vadd.f32 %v551, %v1691
        %v1888 = vadd.f32 %v552, %v1696
        %v1889 = vadd.f32 %v553, %v1699
        %v1890 = vadd.f32 %v554, %v1704
        %v1891 = vadd.f32 %v555, %v1707
        %v1892 = vadd.f32 %v556, %v1712
        %v1893 = vadd.f32 %v557, %v1715
        %v1894 = vadd.f32 %v558, %v1720
        %v1895 = vadd.f32 %v559, %v1723
        %v1896 = vadd.f32 %v560, %v1728
        %v1897 = vadd.f32 %v561, %v1731
        %v1898 = vadd.f32 %v562, %v1736
        %v1899 = vadd.f32 %v563, %v1739
        %v1900 = vadd.f32 %v564, %v1744
        %v1901 = vadd.f32 %v565, %v1747
        %v1902 = vadd.f32 %v566, %v1752
        %v1903 = vadd.f32 %v567, %v1755
        %v1904 = vadd.f32 %v568, %v1760
        %v1905 = vadd.f32 %v569, %v1763
        %v1906 = vadd.f32 %v570, %v1768
        %v1907 = vadd.f32 %v571, %v1771
        %v1908 = vadd.f32 %v572, %v1776
        %v1909 = vadd.f32 %v573, %v1779
        %vm1910 = vcmask 523264
        %1911 = vst.msk [vmem:[#allocation2] sm:$0xff] %vm1910, %v1782
        %1912 = vst.msk [vmem:[#allocation2 + $0x8] sm:$0xff] %vm1910, %v1783
        %1913 = vst.msk [vmem:[#allocation2 + $0x10] sm:$0xff] %vm1910, %v1784
        %1914 = vst.msk [vmem:[#allocation2 + $0x18] sm:$0xff] %vm1910, %v1785
        %1915 = vst.msk [vmem:[#allocation2 + $0x20] sm:$0xff] %vm1910, %v1786
        %1916 = vst.msk [vmem:[#allocation2 + $0x28] sm:$0xff] %vm1910, %v1787
        %1917 = vst.msk [vmem:[#allocation2 + $0x30] sm:$0xff] %vm1910, %v1788
        %1918 = vst.msk [vmem:[#allocation2 + $0x38] sm:$0xff] %vm1910, %v1789
        %1919 = vst.msk [vmem:[#allocation2 + $0x40] sm:$0xff] %vm1910, %v1790
        %1920 = vst.msk [vmem:[#allocation2 + $0x48] sm:$0xff] %vm1910, %v1791
        %1921 = vst.msk [vmem:[#allocation2 + $0x50] sm:$0xff] %vm1910, %v1792
        %1922 = vst.msk [vmem:[#allocation2 + $0x58] sm:$0xff] %vm1910, %v1793
        %1923 = vst.msk [vmem:[#allocation2 + $0x60] sm:$0xff] %vm1910, %v1794
        %1924 = vst.msk [vmem:[#allocation2 + $0x68] sm:$0xff] %vm1910, %v1795
        %1925 = vst.msk [vmem:[#allocation2 + $0x70] sm:$0xff] %vm1910, %v1796
        %1926 = vst.msk [vmem:[#allocation2 + $0x78] sm:$0xff] %vm1910, %v1797
        %1927 = vst.msk [vmem:[#allocation2 + $0x80] sm:$0xff] %vm1910, %v1798
        %1928 = vst.msk [vmem:[#allocation2 + $0x88] sm:$0xff] %vm1910, %v1799
        %1929 = vst.msk [vmem:[#allocation2 + $0x90] sm:$0xff] %vm1910, %v1800
        %1930 = vst.msk [vmem:[#allocation2 + $0x98] sm:$0xff] %vm1910, %v1801
        %1931 = vst.msk [vmem:[#allocation2 + $0xa0] sm:$0xff] %vm1910, %v1802
        %1932 = vst.msk [vmem:[#allocation2 + $0xa8] sm:$0xff] %vm1910, %v1803
        %1933 = vst.msk [vmem:[#allocation2 + $0xb0] sm:$0xff] %vm1910, %v1804
        %1934 = vst.msk [vmem:[#allocation2 + $0xb8] sm:$0xff] %vm1910, %v1805
        %1935 = vst.msk [vmem:[#allocation2 + $0xc0] sm:$0xff] %vm1910, %v1806
        %1936 = vst.msk [vmem:[#allocation2 + $0xc8] sm:$0xff] %vm1910, %v1807
        %1937 = vst.msk [vmem:[#allocation2 + $0xd0] sm:$0xff] %vm1910, %v1808
        %1938 = vst.msk [vmem:[#allocation2 + $0xd8] sm:$0xff] %vm1910, %v1809
        %1939 = vst.msk [vmem:[#allocation2 + $0xe0] sm:$0xff] %vm1910, %v1810
        %1940 = vst.msk [vmem:[#allocation2 + $0xe8] sm:$0xff] %vm1910, %v1811
        %1941 = vst.msk [vmem:[#allocation2 + $0xf0] sm:$0xff] %vm1910, %v1812
        %1942 = vst.msk [vmem:[#allocation2 + $0xf8] sm:$0xff] %vm1910, %v1813
        %1943 = vst.msk [vmem:[#allocation2 + $0x100] sm:$0xff] %vm1910, %v1814
        %1944 = vst.msk [vmem:[#allocation2 + $0x108] sm:$0xff] %vm1910, %v1815
        %1945 = vst.msk [vmem:[#allocation2 + $0x110] sm:$0xff] %vm1910, %v1816
        %1946 = vst.msk [vmem:[#allocation2 + $0x118] sm:$0xff] %vm1910, %v1817
        %1947 = vst.msk [vmem:[#allocation2 + $0x120] sm:$0xff] %vm1910, %v1818
        %1948 = vst.msk [vmem:[#allocation2 + $0x128] sm:$0xff] %vm1910, %v1819
        %1949 = vst.msk [vmem:[#allocation2 + $0x130] sm:$0xff] %vm1910, %v1820
        %1950 = vst.msk [vmem:[#allocation2 + $0x138] sm:$0xff] %vm1910, %v1821
        %1951 = vst.msk [vmem:[#allocation2 + $0x140] sm:$0xff] %vm1910, %v1822
        %1952 = vst.msk [vmem:[#allocation2 + $0x148] sm:$0xff] %vm1910, %v1823
        %1953 = vst.msk [vmem:[#allocation2 + $0x150] sm:$0xff] %vm1910, %v1824
        %1954 = vst.msk [vmem:[#allocation2 + $0x158] sm:$0xff] %vm1910, %v1825
        %1955 = vst.msk [vmem:[#allocation2 + $0x160] sm:$0xff] %vm1910, %v1826
        %1956 = vst.msk [vmem:[#allocation2 + $0x168] sm:$0xff] %vm1910, %v1827
        %1957 = vst.msk [vmem:[#allocation2 + $0x170] sm:$0xff] %vm1910, %v1828
        %1958 = vst.msk [vmem:[#allocation2 + $0x178] sm:$0xff] %vm1910, %v1829
        %1959 = vst.msk [vmem:[#allocation2 + $0x180] sm:$0xff] %vm1910, %v1830
        %1960 = vst.msk [vmem:[#allocation2 + $0x188] sm:$0xff] %vm1910, %v1831
        %1961 = vst.msk [vmem:[#allocation2 + $0x190] sm:$0xff] %vm1910, %v1832
        %1962 = vst.msk [vmem:[#allocation2 + $0x198] sm:$0xff] %vm1910, %v1833
        %1963 = vst.msk [vmem:[#allocation2 + $0x1a0] sm:$0xff] %vm1910, %v1834
        %1964 = vst.msk [vmem:[#allocation2 + $0x1a8] sm:$0xff] %vm1910, %v1835
        %1965 = vst.msk [vmem:[#allocation2 + $0x1b0] sm:$0xff] %vm1910, %v1836
        %1966 = vst.msk [vmem:[#allocation2 + $0x1b8] sm:$0xff] %vm1910, %v1837
        %1967 = vst.msk [vmem:[#allocation2 + $0x1c0] sm:$0xff] %vm1910, %v1838
        %1968 = vst.msk [vmem:[#allocation2 + $0x1c8] sm:$0xff] %vm1910, %v1839
        %1969 = vst.msk [vmem:[#allocation2 + $0x1d0] sm:$0xff] %vm1910, %v1840
        %1970 = vst.msk [vmem:[#allocation2 + $0x1d8] sm:$0xff] %vm1910, %v1841
        %1971 = vst.msk [vmem:[#allocation2 + $0x1e0] sm:$0xff] %vm1910, %v1842
        %1972 = vst.msk [vmem:[#allocation2 + $0x1e8] sm:$0xff] %vm1910, %v1843
        %1973 = vst.msk [vmem:[#allocation2 + $0x1f0] sm:$0xff] %vm1910, %v1844
        %1974 = vst.msk [vmem:[#allocation2 + $0x1f8] sm:$0xff] %vm1910, %v1845
        %1975 = vst.msk [vmem:[#allocation2 + $0x200] sm:$0xff] %vm1910, %v1846
        %1976 = vst.msk [vmem:[#allocation2 + $0x208] sm:$0xff] %vm1910, %v1847
        %1977 = vst.msk [vmem:[#allocation2 + $0x210] sm:$0xff] %vm1910, %v1848
        %1978 = vst.msk [vmem:[#allocation2 + $0x218] sm:$0xff] %vm1910, %v1849
        %1979 = vst.msk [vmem:[#allocation2 + $0x220] sm:$0xff] %vm1910, %v1850
        %1980 = vst.msk [vmem:[#allocation2 + $0x228] sm:$0xff] %vm1910, %v1851
        %1981 = vst.msk [vmem:[#allocation2 + $0x230] sm:$0xff] %vm1910, %v1852
        %1982 = vst.msk [vmem:[#allocation2 + $0x238] sm:$0xff] %vm1910, %v1853
        %1983 = vst.msk [vmem:[#allocation2 + $0x240] sm:$0xff] %vm1910, %v1854
        %1984 = vst.msk [vmem:[#allocation2 + $0x248] sm:$0xff] %vm1910, %v1855
        %1985 = vst.msk [vmem:[#allocation2 + $0x250] sm:$0xff] %vm1910, %v1856
        %1986 = vst.msk [vmem:[#allocation2 + $0x258] sm:$0xff] %vm1910, %v1857
        %1987 = vst.msk [vmem:[#allocation2 + $0x260] sm:$0xff] %vm1910, %v1858
        %1988 = vst.msk [vmem:[#allocation2 + $0x268] sm:$0xff] %vm1910, %v1859
        %1989 = vst.msk [vmem:[#allocation2 + $0x270] sm:$0xff] %vm1910, %v1860
        %1990 = vst.msk [vmem:[#allocation2 + $0x278] sm:$0xff] %vm1910, %v1861
        %1991 = vst.msk [vmem:[#allocation2 + $0x280] sm:$0xff] %vm1910, %v1862
        %1992 = vst.msk [vmem:[#allocation2 + $0x288] sm:$0xff] %vm1910, %v1863
        %1993 = vst.msk [vmem:[#allocation2 + $0x290] sm:$0xff] %vm1910, %v1864
        %1994 = vst.msk [vmem:[#allocation2 + $0x298] sm:$0xff] %vm1910, %v1865
        %1995 = vst.msk [vmem:[#allocation2 + $0x2a0] sm:$0xff] %vm1910, %v1866
        %1996 = vst.msk [vmem:[#allocation2 + $0x2a8] sm:$0xff] %vm1910, %v1867
        %1997 = vst.msk [vmem:[#allocation2 + $0x2b0] sm:$0xff] %vm1910, %v1868
        %1998 = vst.msk [vmem:[#allocation2 + $0x2b8] sm:$0xff] %vm1910, %v1869
        %1999 = vst.msk [vmem:[#allocation2 + $0x2c0] sm:$0xff] %vm1910, %v1870
        %2000 = vst.msk [vmem:[#allocation2 + $0x2c8] sm:$0xff] %vm1910, %v1871
        %2001 = vst.msk [vmem:[#allocation2 + $0x2d0] sm:$0xff] %vm1910, %v1872
        %2002 = vst.msk [vmem:[#allocation2 + $0x2d8] sm:$0xff] %vm1910, %v1873
        %2003 = vst.msk [vmem:[#allocation2 + $0x2e0] sm:$0xff] %vm1910, %v1874
        %2004 = vst.msk [vmem:[#allocation2 + $0x2e8] sm:$0xff] %vm1910, %v1875
        %2005 = vst.msk [vmem:[#allocation2 + $0x2f0] sm:$0xff] %vm1910, %v1876
        %2006 = vst.msk [vmem:[#allocation2 + $0x2f8] sm:$0xff] %vm1910, %v1877
        %2007 = vst.msk [vmem:[#allocation2 + $0x300] sm:$0xff] %vm1910, %v1878
        %2008 = vst.msk [vmem:[#allocation2 + $0x308] sm:$0xff] %vm1910, %v1879
        %2009 = vst.msk [vmem:[#allocation2 + $0x310] sm:$0xff] %vm1910, %v1880
        %2010 = vst.msk [vmem:[#allocation2 + $0x318] sm:$0xff] %vm1910, %v1881
        %2011 = vst.msk [vmem:[#allocation2 + $0x320] sm:$0xff] %vm1910, %v1882
        %2012 = vst.msk [vmem:[#allocation2 + $0x328] sm:$0xff] %vm1910, %v1883
        %2013 = vst.msk [vmem:[#allocation2 + $0x330] sm:$0xff] %vm1910, %v1884
        %2014 = vst.msk [vmem:[#allocation2 + $0x338] sm:$0xff] %vm1910, %v1885
        %2015 = vst.msk [vmem:[#allocation2 + $0x340] sm:$0xff] %vm1910, %v1886
        %2016 = vst.msk [vmem:[#allocation2 + $0x348] sm:$0xff] %vm1910, %v1887
        %2017 = vst.msk [vmem:[#allocation2 + $0x350] sm:$0xff] %vm1910, %v1888
        %2018 = vst.msk [vmem:[#allocation2 + $0x358] sm:$0xff] %vm1910, %v1889
        %2019 = vst.msk [vmem:[#allocation2 + $0x360] sm:$0xff] %vm1910, %v1890
        %2020 = vst.msk [vmem:[#allocation2 + $0x368] sm:$0xff] %vm1910, %v1891
        %2021 = vst.msk [vmem:[#allocation2 + $0x370] sm:$0xff] %vm1910, %v1892
        %2022 = vst.msk [vmem:[#allocation2 + $0x378] sm:$0xff] %vm1910, %v1893
        %2023 = vst.msk [vmem:[#allocation2 + $0x380] sm:$0xff] %vm1910, %v1894
        %2024 = vst.msk [vmem:[#allocation2 + $0x388] sm:$0xff] %vm1910, %v1895
        %2025 = vst.msk [vmem:[#allocation2 + $0x390] sm:$0xff] %vm1910, %v1896
        %2026 = vst.msk [vmem:[#allocation2 + $0x398] sm:$0xff] %vm1910, %v1897
        %2027 = vst.msk [vmem:[#allocation2 + $0x3a0] sm:$0xff] %vm1910, %v1898
        %2028 = vst.msk [vmem:[#allocation2 + $0x3a8] sm:$0xff] %vm1910, %v1899
        %2029 = vst.msk [vmem:[#allocation2 + $0x3b0] sm:$0xff] %vm1910, %v1900
        %2030 = vst.msk [vmem:[#allocation2 + $0x3b8] sm:$0xff] %vm1910, %v1901
        %2031 = vst.msk [vmem:[#allocation2 + $0x3c0] sm:$0xff] %vm1910, %v1902
        %2032 = vst.msk [vmem:[#allocation2 + $0x3c8] sm:$0xff] %vm1910, %v1903
        %2033 = vst.msk [vmem:[#allocation2 + $0x3d0] sm:$0xff] %vm1910, %v1904
        %2034 = vst.msk [vmem:[#allocation2 + $0x3d8] sm:$0xff] %vm1910, %v1905
        %2035 = vst.msk [vmem:[#allocation2 + $0x3e0] sm:$0xff] %vm1910, %v1906
        %2036 = vst.msk [vmem:[#allocation2 + $0x3e8] sm:$0xff] %vm1910, %v1907
        %2037 = vst.msk [vmem:[#allocation2 + $0x3f0] sm:$0xff] %vm1910, %v1908
        %2038 = vst.msk [vmem:[#allocation2 + $0x3f8] sm:$0xff] %vm1910, %v1909
        // Predicated region
        $region41: #{conv2d_bn_act.1} parent=35 // pred_check
          %p2039 = pneg %p313
        $region42: #{conv2d_bn_act.1} parent=35 // pred_check_branch
          %2041 = sbr.rel (%p2039) target = $region44
        $region43: #{conv2d_bn_act.1} parent=35 // pred_region
          %v2042 = vld [vmem:[#allocation2] sm:$0xff]
          %v2043 = vld [vmem:[#allocation2 + $0x8] sm:$0xff]
          %v2044 = vld [vmem:[#allocation2 + $0x10] sm:$0xff]
          %v2045 = vld [vmem:[#allocation2 + $0x18] sm:$0xff]
          %v2046 = vld [vmem:[#allocation2 + $0x20] sm:$0xff]
          %v2047 = vld [vmem:[#allocation2 + $0x28] sm:$0xff]
          %v2048 = vld [vmem:[#allocation2 + $0x30] sm:$0xff]
          %v2049 = vld [vmem:[#allocation2 + $0x38] sm:$0xff]
          %v2050 = vld [vmem:[#allocation2 + $0x40] sm:$0xff]
          %v2051 = vld [vmem:[#allocation2 + $0x48] sm:$0xff]
          %v2052 = vld [vmem:[#allocation2 + $0x50] sm:$0xff]
          %v2053 = vld [vmem:[#allocation2 + $0x58] sm:$0xff]
          %v2054 = vld [vmem:[#allocation2 + $0x60] sm:$0xff]
          %v2055 = vld [vmem:[#allocation2 + $0x68] sm:$0xff]
          %v2056 = vld [vmem:[#allocation2 + $0x70] sm:$0xff]
          %v2057 = vld [vmem:[#allocation2 + $0x78] sm:$0xff]
          %v2058 = vld [vmem:[#allocation2 + $0x80] sm:$0xff]
          %v2059 = vld [vmem:[#allocation2 + $0x88] sm:$0xff]
          %v2060 = vld [vmem:[#allocation2 + $0x90] sm:$0xff]
          %v2061 = vld [vmem:[#allocation2 + $0x98] sm:$0xff]
          %v2062 = vld [vmem:[#allocation2 + $0xa0] sm:$0xff]
          %v2063 = vld [vmem:[#allocation2 + $0xa8] sm:$0xff]
          %v2064 = vld [vmem:[#allocation2 + $0xb0] sm:$0xff]
          %v2065 = vld [vmem:[#allocation2 + $0xb8] sm:$0xff]
          %v2066 = vld [vmem:[#allocation2 + $0xc0] sm:$0xff]
          %v2067 = vld [vmem:[#allocation2 + $0xc8] sm:$0xff]
          %v2068 = vld [vmem:[#allocation2 + $0xd0] sm:$0xff]
          %v2069 = vld [vmem:[#allocation2 + $0xd8] sm:$0xff]
          %v2070 = vld [vmem:[#allocation2 + $0xe0] sm:$0xff]
          %v2071 = vld [vmem:[#allocation2 + $0xe8] sm:$0xff]
          %v2072 = vld [vmem:[#allocation2 + $0xf0] sm:$0xff]
          %v2073 = vld [vmem:[#allocation2 + $0xf8] sm:$0xff]
          %v2074 = vld [vmem:[#allocation2 + $0x100] sm:$0xff]
          %v2075 = vld [vmem:[#allocation2 + $0x108] sm:$0xff]
          %v2076 = vld [vmem:[#allocation2 + $0x110] sm:$0xff]
          %v2077 = vld [vmem:[#allocation2 + $0x118] sm:$0xff]
          %v2078 = vld [vmem:[#allocation2 + $0x120] sm:$0xff]
          %v2079 = vld [vmem:[#allocation2 + $0x128] sm:$0xff]
          %v2080 = vld [vmem:[#allocation2 + $0x130] sm:$0xff]
          %v2081 = vld [vmem:[#allocation2 + $0x138] sm:$0xff]
          %v2082 = vld [vmem:[#allocation2 + $0x140] sm:$0xff]
          %v2083 = vld [vmem:[#allocation2 + $0x148] sm:$0xff]
          %v2084 = vld [vmem:[#allocation2 + $0x150] sm:$0xff]
          %v2085 = vld [vmem:[#allocation2 + $0x158] sm:$0xff]
          %v2086 = vld [vmem:[#allocation2 + $0x160] sm:$0xff]
          %v2087 = vld [vmem:[#allocation2 + $0x168] sm:$0xff]
          %v2088 = vld [vmem:[#allocation2 + $0x170] sm:$0xff]
          %v2089 = vld [vmem:[#allocation2 + $0x178] sm:$0xff]
          %v2090 = vld [vmem:[#allocation2 + $0x180] sm:$0xff]
          %v2091 = vld [vmem:[#allocation2 + $0x188] sm:$0xff]
          %v2092 = vld [vmem:[#allocation2 + $0x190] sm:$0xff]
          %v2093 = vld [vmem:[#allocation2 + $0x198] sm:$0xff]
          %v2094 = vld [vmem:[#allocation2 + $0x1a0] sm:$0xff]
          %v2095 = vld [vmem:[#allocation2 + $0x1a8] sm:$0xff]
          %v2096 = vld [vmem:[#allocation2 + $0x1b0] sm:$0xff]
          %v2097 = vld [vmem:[#allocation2 + $0x1b8] sm:$0xff]
          %v2098 = vld [vmem:[#allocation2 + $0x1c0] sm:$0xff]
          %v2099 = vld [vmem:[#allocation2 + $0x1c8] sm:$0xff]
          %v2100 = vld [vmem:[#allocation2 + $0x1d0] sm:$0xff]
          %v2101 = vld [vmem:[#allocation2 + $0x1d8] sm:$0xff]
          %v2102 = vld [vmem:[#allocation2 + $0x1e0] sm:$0xff]
          %v2103 = vld [vmem:[#allocation2 + $0x1e8] sm:$0xff]
          %v2104 = vld [vmem:[#allocation2 + $0x1f0] sm:$0xff]
          %v2105 = vld [vmem:[#allocation2 + $0x1f8] sm:$0xff]
          %v2106 = vld [vmem:[#allocation2 + $0x200] sm:$0xff]
          %v2107 = vld [vmem:[#allocation2 + $0x208] sm:$0xff]
          %v2108 = vld [vmem:[#allocation2 + $0x210] sm:$0xff]
          %v2109 = vld [vmem:[#allocation2 + $0x218] sm:$0xff]
          %v2110 = vld [vmem:[#allocation2 + $0x220] sm:$0xff]
          %v2111 = vld [vmem:[#allocation2 + $0x228] sm:$0xff]
          %v2112 = vld [vmem:[#allocation2 + $0x230] sm:$0xff]
          %v2113 = vld [vmem:[#allocation2 + $0x238] sm:$0xff]
          %v2114 = vld [vmem:[#allocation2 + $0x240] sm:$0xff]
          %v2115 = vld [vmem:[#allocation2 + $0x248] sm:$0xff]
          %v2116 = vld [vmem:[#allocation2 + $0x250] sm:$0xff]
          %v2117 = vld [vmem:[#allocation2 + $0x258] sm:$0xff]
          %v2118 = vld [vmem:[#allocation2 + $0x260] sm:$0xff]
          %v2119 = vld [vmem:[#allocation2 + $0x268] sm:$0xff]
          %v2120 = vld [vmem:[#allocation2 + $0x270] sm:$0xff]
          %v2121 = vld [vmem:[#allocation2 + $0x278] sm:$0xff]
          %v2122 = vld [vmem:[#allocation2 + $0x280] sm:$0xff]
          %v2123 = vld [vmem:[#allocation2 + $0x288] sm:$0xff]
          %v2124 = vld [vmem:[#allocation2 + $0x290] sm:$0xff]
          %v2125 = vld [vmem:[#allocation2 + $0x298] sm:$0xff]
          %v2126 = vld [vmem:[#allocation2 + $0x2a0] sm:$0xff]
          %v2127 = vld [vmem:[#allocation2 + $0x2a8] sm:$0xff]
          %v2128 = vld [vmem:[#allocation2 + $0x2b0] sm:$0xff]
          %v2129 = vld [vmem:[#allocation2 + $0x2b8] sm:$0xff]
          %v2130 = vld [vmem:[#allocation2 + $0x2c0] sm:$0xff]
          %v2131 = vld [vmem:[#allocation2 + $0x2c8] sm:$0xff]
          %v2132 = vld [vmem:[#allocation2 + $0x2d0] sm:$0xff]
          %v2133 = vld [vmem:[#allocation2 + $0x2d8] sm:$0xff]
          %v2134 = vld [vmem:[#allocation2 + $0x2e0] sm:$0xff]
          %v2135 = vld [vmem:[#allocation2 + $0x2e8] sm:$0xff]
          %v2136 = vld [vmem:[#allocation2 + $0x2f0] sm:$0xff]
          %v2137 = vld [vmem:[#allocation2 + $0x2f8] sm:$0xff]
          %v2138 = vld [vmem:[#allocation2 + $0x300] sm:$0xff]
          %v2139 = vld [vmem:[#allocation2 + $0x308] sm:$0xff]
          %v2140 = vld [vmem:[#allocation2 + $0x310] sm:$0xff]
          %v2141 = vld [vmem:[#allocation2 + $0x318] sm:$0xff]
          %v2142 = vld [vmem:[#allocation2 + $0x320] sm:$0xff]
          %v2143 = vld [vmem:[#allocation2 + $0x328] sm:$0xff]
          %v2144 = vld [vmem:[#allocation2 + $0x330] sm:$0xff]
          %v2145 = vld [vmem:[#allocation2 + $0x338] sm:$0xff]
          %v2146 = vld [vmem:[#allocation2 + $0x340] sm:$0xff]
          %v2147 = vld [vmem:[#allocation2 + $0x348] sm:$0xff]
          %v2148 = vld [vmem:[#allocation2 + $0x350] sm:$0xff]
          %v2149 = vld [vmem:[#allocation2 + $0x358] sm:$0xff]
          %v2150 = vld [vmem:[#allocation2 + $0x360] sm:$0xff]
          %v2151 = vld [vmem:[#allocation2 + $0x368] sm:$0xff]
          %v2152 = vld [vmem:[#allocation2 + $0x370] sm:$0xff]
          %v2153 = vld [vmem:[#allocation2 + $0x378] sm:$0xff]
          %v2154 = vld [vmem:[#allocation2 + $0x380] sm:$0xff]
          %v2155 = vld [vmem:[#allocation2 + $0x388] sm:$0xff]
          %v2156 = vld [vmem:[#allocation2 + $0x390] sm:$0xff]
          %v2157 = vld [vmem:[#allocation2 + $0x398] sm:$0xff]
          %v2158 = vld [vmem:[#allocation2 + $0x3a0] sm:$0xff]
          %v2159 = vld [vmem:[#allocation2 + $0x3a8] sm:$0xff]
          %v2160 = vld [vmem:[#allocation2 + $0x3b0] sm:$0xff]
          %v2161 = vld [vmem:[#allocation2 + $0x3b8] sm:$0xff]
          %v2162 = vld [vmem:[#allocation2 + $0x3c0] sm:$0xff]
          %v2163 = vld [vmem:[#allocation2 + $0x3c8] sm:$0xff]
          %v2164 = vld [vmem:[#allocation2 + $0x3d0] sm:$0xff]
          %v2165 = vld [vmem:[#allocation2 + $0x3d8] sm:$0xff]
          %v2166 = vld [vmem:[#allocation2 + $0x3e0] sm:$0xff]
          %v2167 = vld [vmem:[#allocation2 + $0x3e8] sm:$0xff]
          %v2168 = vld [vmem:[#allocation2 + $0x3f0] sm:$0xff]
          %v2169 = vld [vmem:[#allocation2 + $0x3f8] sm:$0xff]
          %v2170 = vld [vmem:[%s303] sm:$0x1]
          %v2172 = vlaneseq
          %v2173 = vshrl.u32 %v2172, 7
          %v2174 = vsub.s32 0, %v2173
          %v2175 = vrot.slane %v2170, %v2174
          %v2177 = vmul.f32 %v2042, %v2175
          %v2178 = vmul.f32 %v2043, %v2175
          %v2179 = vmul.f32 %v2044, %v2175
          %v2180 = vmul.f32 %v2045, %v2175
          %v2181 = vmul.f32 %v2046, %v2175
          %v2182 = vmul.f32 %v2047, %v2175
          %v2183 = vmul.f32 %v2048, %v2175
          %v2184 = vmul.f32 %v2049, %v2175
          %v2185 = vmul.f32 %v2050, %v2175
          %v2186 = vmul.f32 %v2051, %v2175
          %v2187 = vmul.f32 %v2052, %v2175
          %v2188 = vmul.f32 %v2053, %v2175
          %v2189 = vmul.f32 %v2054, %v2175
          %v2190 = vmul.f32 %v2055, %v2175
          %v2191 = vmul.f32 %v2056, %v2175
          %v2192 = vmul.f32 %v2057, %v2175
          %v2193 = vmul.f32 %v2058, %v2175
          %v2194 = vmul.f32 %v2059, %v2175
          %v2195 = vmul.f32 %v2060, %v2175
          %v2196 = vmul.f32 %v2061, %v2175
          %v2197 = vmul.f32 %v2062, %v2175
          %v2198 = vmul.f32 %v2063, %v2175
          %v2199 = vmul.f32 %v2064, %v2175
          %v2200 = vmul.f32 %v2065, %v2175
          %v2201 = vmul.f32 %v2066, %v2175
          %v2202 = vmul.f32 %v2067, %v2175
          %v2203 = vmul.f32 %v2068, %v2175
          %v2204 = vmul.f32 %v2069, %v2175
          %v2205 = vmul.f32 %v2070, %v2175
          %v2206 = vmul.f32 %v2071, %v2175
          %v2207 = vmul.f32 %v2072, %v2175
          %v2208 = vmul.f32 %v2073, %v2175
          %v2209 = vmul.f32 %v2074, %v2175
          %v2210 = vmul.f32 %v2075, %v2175
          %v2211 = vmul.f32 %v2076, %v2175
          %v2212 = vmul.f32 %v2077, %v2175
          %v2213 = vmul.f32 %v2078, %v2175
          %v2214 = vmul.f32 %v2079, %v2175
          %v2215 = vmul.f32 %v2080, %v2175
          %v2216 = vmul.f32 %v2081, %v2175
          %v2217 = vmul.f32 %v2082, %v2175
          %v2218 = vmul.f32 %v2083, %v2175
          %v2219 = vmul.f32 %v2084, %v2175
          %v2220 = vmul.f32 %v2085, %v2175
          %v2221 = vmul.f32 %v2086, %v2175
          %v2222 = vmul.f32 %v2087, %v2175
          %v2223 = vmul.f32 %v2088, %v2175
          %v2224 = vmul.f32 %v2089, %v2175
          %v2225 = vmul.f32 %v2090, %v2175
          %v2226 = vmul.f32 %v2091, %v2175
          %v2227 = vmul.f32 %v2092, %v2175
          %v2228 = vmul.f32 %v2093, %v2175
          %v2229 = vmul.f32 %v2094, %v2175
          %v2230 = vmul.f32 %v2095, %v2175
          %v2231 = vmul.f32 %v2096, %v2175
          %v2232 = vmul.f32 %v2097, %v2175
          %v2233 = vmul.f32 %v2098, %v2175
          %v2234 = vmul.f32 %v2099, %v2175
          %v2235 = vmul.f32 %v2100, %v2175
          %v2236 = vmul.f32 %v2101, %v2175
          %v2237 = vmul.f32 %v2102, %v2175
          %v2238 = vmul.f32 %v2103, %v2175
          %v2239 = vmul.f32 %v2104, %v2175
          %v2240 = vmul.f32 %v2105, %v2175
          %v2241 = vmul.f32 %v2106, %v2175
          %v2242 = vmul.f32 %v2107, %v2175
          %v2243 = vmul.f32 %v2108, %v2175
          %v2244 = vmul.f32 %v2109, %v2175
          %v2245 = vmul.f32 %v2110, %v2175
          %v2246 = vmul.f32 %v2111, %v2175
          %v2247 = vmul.f32 %v2112, %v2175
          %v2248 = vmul.f32 %v2113, %v2175
          %v2249 = vmul.f32 %v2114, %v2175
          %v2250 = vmul.f32 %v2115, %v2175
          %v2251 = vmul.f32 %v2116, %v2175
          %v2252 = vmul.f32 %v2117, %v2175
          %v2253 = vmul.f32 %v2118, %v2175
          %v2254 = vmul.f32 %v2119, %v2175
          %v2255 = vmul.f32 %v2120, %v2175
          %v2256 = vmul.f32 %v2121, %v2175
          %v2257 = vmul.f32 %v2122, %v2175
          %v2258 = vmul.f32 %v2123, %v2175
          %v2259 = vmul.f32 %v2124, %v2175
          %v2260 = vmul.f32 %v2125, %v2175
          %v2261 = vmul.f32 %v2126, %v2175
          %v2262 = vmul.f32 %v2127, %v2175
          %v2263 = vmul.f32 %v2128, %v2175
          %v2264 = vmul.f32 %v2129, %v2175
          %v2265 = vmul.f32 %v2130, %v2175
          %v2266 = vmul.f32 %v2131, %v2175
          %v2267 = vmul.f32 %v2132, %v2175
          %v2268 = vmul.f32 %v2133, %v2175
          %v2269 = vmul.f32 %v2134, %v2175
          %v2270 = vmul.f32 %v2135, %v2175
          %v2271 = vmul.f32 %v2136, %v2175
          %v2272 = vmul.f32 %v2137, %v2175
          %v2273 = vmul.f32 %v2138, %v2175
          %v2274 = vmul.f32 %v2139, %v2175
          %v2275 = vmul.f32 %v2140, %v2175
          %v2276 = vmul.f32 %v2141, %v2175
          %v2277 = vmul.f32 %v2142, %v2175
          %v2278 = vmul.f32 %v2143, %v2175
          %v2279 = vmul.f32 %v2144, %v2175
          %v2280 = vmul.f32 %v2145, %v2175
          %v2281 = vmul.f32 %v2146, %v2175
          %v2282 = vmul.f32 %v2147, %v2175
          %v2283 = vmul.f32 %v2148, %v2175
          %v2284 = vmul.f32 %v2149, %v2175
          %v2285 = vmul.f32 %v2150, %v2175
          %v2286 = vmul.f32 %v2151, %v2175
          %v2287 = vmul.f32 %v2152, %v2175
          %v2288 = vmul.f32 %v2153, %v2175
          %v2289 = vmul.f32 %v2154, %v2175
          %v2290 = vmul.f32 %v2155, %v2175
          %v2291 = vmul.f32 %v2156, %v2175
          %v2292 = vmul.f32 %v2157, %v2175
          %v2293 = vmul.f32 %v2158, %v2175
          %v2294 = vmul.f32 %v2159, %v2175
          %v2295 = vmul.f32 %v2160, %v2175
          %v2296 = vmul.f32 %v2161, %v2175
          %v2297 = vmul.f32 %v2162, %v2175
          %v2298 = vmul.f32 %v2163, %v2175
          %v2299 = vmul.f32 %v2164, %v2175
          %v2300 = vmul.f32 %v2165, %v2175
          %v2301 = vmul.f32 %v2166, %v2175
          %v2302 = vmul.f32 %v2167, %v2175
          %v2303 = vmul.f32 %v2168, %v2175
          %v2304 = vmul.f32 %v2169, %v2175
          %v2305 = vld [vmem:[%s306] sm:$0x1]
          %v2307 = vlaneseq
          %v2308 = vshrl.u32 %v2307, 7
          %v2309 = vsub.s32 0, %v2308
          %v2310 = vrot.slane %v2305, %v2309
          %v2312 = vadd.f32 %v2177, %v2310
          %v2313 = vadd.f32 %v2178, %v2310
          %v2314 = vadd.f32 %v2179, %v2310
          %v2315 = vadd.f32 %v2180, %v2310
          %v2316 = vadd.f32 %v2181, %v2310
          %v2317 = vadd.f32 %v2182, %v2310
          %v2318 = vadd.f32 %v2183, %v2310
          %v2319 = vadd.f32 %v2184, %v2310
          %v2320 = vadd.f32 %v2185, %v2310
          %v2321 = vadd.f32 %v2186, %v2310
          %v2322 = vadd.f32 %v2187, %v2310
          %v2323 = vadd.f32 %v2188, %v2310
          %v2324 = vadd.f32 %v2189, %v2310
          %v2325 = vadd.f32 %v2190, %v2310
          %v2326 = vadd.f32 %v2191, %v2310
          %v2327 = vadd.f32 %v2192, %v2310
          %v2328 = vadd.f32 %v2193, %v2310
          %v2329 = vadd.f32 %v2194, %v2310
          %v2330 = vadd.f32 %v2195, %v2310
          %v2331 = vadd.f32 %v2196, %v2310
          %v2332 = vadd.f32 %v2197, %v2310
          %v2333 = vadd.f32 %v2198, %v2310
          %v2334 = vadd.f32 %v2199, %v2310
          %v2335 = vadd.f32 %v2200, %v2310
          %v2336 = vadd.f32 %v2201, %v2310
          %v2337 = vadd.f32 %v2202, %v2310
          %v2338 = vadd.f32 %v2203, %v2310
          %v2339 = vadd.f32 %v2204, %v2310
          %v2340 = vadd.f32 %v2205, %v2310
          %v2341 = vadd.f32 %v2206, %v2310
          %v2342 = vadd.f32 %v2207, %v2310
          %v2343 = vadd.f32 %v2208, %v2310
          %v2344 = vadd.f32 %v2209, %v2310
          %v2345 = vadd.f32 %v2210, %v2310
          %v2346 = vadd.f32 %v2211, %v2310
          %v2347 = vadd.f32 %v2212, %v2310
          %v2348 = vadd.f32 %v2213, %v2310
          %v2349 = vadd.f32 %v2214, %v2310
          %v2350 = vadd.f32 %v2215, %v2310
          %v2351 = vadd.f32 %v2216, %v2310
          %v2352 = vadd.f32 %v2217, %v2310
          %v2353 = vadd.f32 %v2218, %v2310
          %v2354 = vadd.f32 %v2219, %v2310
          %v2355 = vadd.f32 %v2220, %v2310
          %v2356 = vadd.f32 %v2221, %v2310
          %v2357 = vadd.f32 %v2222, %v2310
          %v2358 = vadd.f32 %v2223, %v2310
          %v2359 = vadd.f32 %v2224, %v2310
          %v2360 = vadd.f32 %v2225, %v2310
          %v2361 = vadd.f32 %v2226, %v2310
          %v2362 = vadd.f32 %v2227, %v2310
          %v2363 = vadd.f32 %v2228, %v2310
          %v2364 = vadd.f32 %v2229, %v2310
          %v2365 = vadd.f32 %v2230, %v2310
          %v2366 = vadd.f32 %v2231, %v2310
          %v2367 = vadd.f32 %v2232, %v2310
          %v2368 = vadd.f32 %v2233, %v2310
          %v2369 = vadd.f32 %v2234, %v2310
          %v2370 = vadd.f32 %v2235, %v2310
          %v2371 = vadd.f32 %v2236, %v2310
          %v2372 = vadd.f32 %v2237, %v2310
          %v2373 = vadd.f32 %v2238, %v2310
          %v2374 = vadd.f32 %v2239, %v2310
          %v2375 = vadd.f32 %v2240, %v2310
          %v2376 = vadd.f32 %v2241, %v2310
          %v2377 = vadd.f32 %v2242, %v2310
          %v2378 = vadd.f32 %v2243, %v2310
          %v2379 = vadd.f32 %v2244, %v2310
          %v2380 = vadd.f32 %v2245, %v2310
          %v2381 = vadd.f32 %v2246, %v2310
          %v2382 = vadd.f32 %v2247, %v2310
          %v2383 = vadd.f32 %v2248, %v2310
          %v2384 = vadd.f32 %v2249, %v2310
          %v2385 = vadd.f32 %v2250, %v2310
          %v2386 = vadd.f32 %v2251, %v2310
          %v2387 = vadd.f32 %v2252, %v2310
          %v2388 = vadd.f32 %v2253, %v2310
          %v2389 = vadd.f32 %v2254, %v2310
          %v2390 = vadd.f32 %v2255, %v2310
          %v2391 = vadd.f32 %v2256, %v2310
          %v2392 = vadd.f32 %v2257, %v2310
          %v2393 = vadd.f32 %v2258, %v2310
          %v2394 = vadd.f32 %v2259, %v2310
          %v2395 = vadd.f32 %v2260, %v2310
          %v2396 = vadd.f32 %v2261, %v2310
          %v2397 = vadd.f32 %v2262, %v2310
          %v2398 = vadd.f32 %v2263, %v2310
          %v2399 = vadd.f32 %v2264, %v2310
          %v2400 = vadd.f32 %v2265, %v2310
          %v2401 = vadd.f32 %v2266, %v2310
          %v2402 = vadd.f32 %v2267, %v2310
          %v2403 = vadd.f32 %v2268, %v2310
          %v2404 = vadd.f32 %v2269, %v2310
          %v2405 = vadd.f32 %v2270, %v2310
          %v2406 = vadd.f32 %v2271, %v2310
          %v2407 = vadd.f32 %v2272, %v2310
          %v2408 = vadd.f32 %v2273, %v2310
          %v2409 = vadd.f32 %v2274, %v2310
          %v2410 = vadd.f32 %v2275, %v2310
          %v2411 = vadd.f32 %v2276, %v2310
          %v2412 = vadd.f32 %v2277, %v2310
          %v2413 = vadd.f32 %v2278, %v2310
          %v2414 = vadd.f32 %v2279, %v2310
          %v2415 = vadd.f32 %v2280, %v2310
          %v2416 = vadd.f32 %v2281, %v2310
          %v2417 = vadd.f32 %v2282, %v2310
          %v2418 = vadd.f32 %v2283, %v2310
          %v2419 = vadd.f32 %v2284, %v2310
          %v2420 = vadd.f32 %v2285, %v2310
          %v2421 = vadd.f32 %v2286, %v2310
          %v2422 = vadd.f32 %v2287, %v2310
          %v2423 = vadd.f32 %v2288, %v2310
          %v2424 = vadd.f32 %v2289, %v2310
          %v2425 = vadd.f32 %v2290, %v2310
          %v2426 = vadd.f32 %v2291, %v2310
          %v2427 = vadd.f32 %v2292, %v2310
          %v2428 = vadd.f32 %v2293, %v2310
          %v2429 = vadd.f32 %v2294, %v2310
          %v2430 = vadd.f32 %v2295, %v2310
          %v2431 = vadd.f32 %v2296, %v2310
          %v2432 = vadd.f32 %v2297, %v2310
          %v2433 = vadd.f32 %v2298, %v2310
          %v2434 = vadd.f32 %v2299, %v2310
          %v2435 = vadd.f32 %v2300, %v2310
          %v2436 = vadd.f32 %v2301, %v2310
          %v2437 = vadd.f32 %v2302, %v2310
          %v2438 = vadd.f32 %v2303, %v2310
          %v2439 = vadd.f32 %v2304, %v2310
          %v2440 = vmax.f32 %v2312, 0.0
          %v2441 = vmax.f32 %v2313, 0.0
          %v2442 = vmax.f32 %v2314, 0.0
          %v2443 = vmax.f32 %v2315, 0.0
          %v2444 = vmax.f32 %v2316, 0.0
          %v2445 = vmax.f32 %v2317, 0.0
          %v2446 = vmax.f32 %v2318, 0.0
          %v2447 = vmax.f32 %v2319, 0.0
          %v2448 = vmax.f32 %v2320, 0.0
          %v2449 = vmax.f32 %v2321, 0.0
          %v2450 = vmax.f32 %v2322, 0.0
          %v2451 = vmax.f32 %v2323, 0.0
          %v2452 = vmax.f32 %v2324, 0.0
          %v2453 = vmax.f32 %v2325, 0.0
          %v2454 = vmax.f32 %v2326, 0.0
          %v2455 = vmax.f32 %v2327, 0.0
          %v2456 = vmax.f32 %v2328, 0.0
          %v2457 = vmax.f32 %v2329, 0.0
          %v2458 = vmax.f32 %v2330, 0.0
          %v2459 = vmax.f32 %v2331, 0.0
          %v2460 = vmax.f32 %v2332, 0.0
          %v2461 = vmax.f32 %v2333, 0.0
          %v2462 = vmax.f32 %v2334, 0.0
          %v2463 = vmax.f32 %v2335, 0.0
          %v2464 = vmax.f32 %v2336, 0.0
          %v2465 = vmax.f32 %v2337, 0.0
          %v2466 = vmax.f32 %v2338, 0.0
          %v2467 = vmax.f32 %v2339, 0.0
          %v2468 = vmax.f32 %v2340, 0.0
          %v2469 = vmax.f32 %v2341, 0.0
          %v2470 = vmax.f32 %v2342, 0.0
          %v2471 = vmax.f32 %v2343, 0.0
          %v2472 = vmax.f32 %v2344, 0.0
          %v2473 = vmax.f32 %v2345, 0.0
          %v2474 = vmax.f32 %v2346, 0.0
          %v2475 = vmax.f32 %v2347, 0.0
          %v2476 = vmax.f32 %v2348, 0.0
          %v2477 = vmax.f32 %v2349, 0.0
          %v2478 = vmax.f32 %v2350, 0.0
          %v2479 = vmax.f32 %v2351, 0.0
          %v2480 = vmax.f32 %v2352, 0.0
          %v2481 = vmax.f32 %v2353, 0.0
          %v2482 = vmax.f32 %v2354, 0.0
          %v2483 = vmax.f32 %v2355, 0.0
          %v2484 = vmax.f32 %v2356, 0.0
          %v2485 = vmax.f32 %v2357, 0.0
          %v2486 = vmax.f32 %v2358, 0.0
          %v2487 = vmax.f32 %v2359, 0.0
          %v2488 = vmax.f32 %v2360, 0.0
          %v2489 = vmax.f32 %v2361, 0.0
          %v2490 = vmax.f32 %v2362, 0.0
          %v2491 = vmax.f32 %v2363, 0.0
          %v2492 = vmax.f32 %v2364, 0.0
          %v2493 = vmax.f32 %v2365, 0.0
          %v2494 = vmax.f32 %v2366, 0.0
          %v2495 = vmax.f32 %v2367, 0.0
          %v2496 = vmax.f32 %v2368, 0.0
          %v2497 = vmax.f32 %v2369, 0.0
          %v2498 = vmax.f32 %v2370, 0.0
          %v2499 = vmax.f32 %v2371, 0.0
          %v2500 = vmax.f32 %v2372, 0.0
          %v2501 = vmax.f32 %v2373, 0.0
          %v2502 = vmax.f32 %v2374, 0.0
          %v2503 = vmax.f32 %v2375, 0.0
          %v2504 = vmax.f32 %v2376, 0.0
          %v2505 = vmax.f32 %v2377, 0.0
          %v2506 = vmax.f32 %v2378, 0.0
          %v2507 = vmax.f32 %v2379, 0.0
          %v2508 = vmax.f32 %v2380, 0.0
          %v2509 = vmax.f32 %v2381, 0.0
          %v2510 = vmax.f32 %v2382, 0.0
          %v2511 = vmax.f32 %v2383, 0.0
          %v2512 = vmax.f32 %v2384, 0.0
          %v2513 = vmax.f32 %v2385, 0.0
          %v2514 = vmax.f32 %v2386, 0.0
          %v2515 = vmax.f32 %v2387, 0.0
          %v2516 = vmax.f32 %v2388, 0.0
          %v2517 = vmax.f32 %v2389, 0.0
          %v2518 = vmax.f32 %v2390, 0.0
          %v2519 = vmax.f32 %v2391, 0.0
          %v2520 = vmax.f32 %v2392, 0.0
          %v2521 = vmax.f32 %v2393, 0.0
          %v2522 = vmax.f32 %v2394, 0.0
          %v2523 = vmax.f32 %v2395, 0.0
          %v2524 = vmax.f32 %v2396, 0.0
          %v2525 = vmax.f32 %v2397, 0.0
          %v2526 = vmax.f32 %v2398, 0.0
          %v2527 = vmax.f32 %v2399, 0.0
          %v2528 = vmax.f32 %v2400, 0.0
          %v2529 = vmax.f32 %v2401, 0.0
          %v2530 = vmax.f32 %v2402, 0.0
          %v2531 = vmax.f32 %v2403, 0.0
          %v2532 = vmax.f32 %v2404, 0.0
          %v2533 = vmax.f32 %v2405, 0.0
          %v2534 = vmax.f32 %v2406, 0.0
          %v2535 = vmax.f32 %v2407, 0.0
          %v2536 = vmax.f32 %v2408, 0.0
          %v2537 = vmax.f32 %v2409, 0.0
          %v2538 = vmax.f32 %v2410, 0.0
          %v2539 = vmax.f32 %v2411, 0.0
          %v2540 = vmax.f32 %v2412, 0.0
          %v2541 = vmax.f32 %v2413, 0.0
          %v2542 = vmax.f32 %v2414, 0.0
          %v2543 = vmax.f32 %v2415, 0.0
          %v2544 = vmax.f32 %v2416, 0.0
          %v2545 = vmax.f32 %v2417, 0.0
          %v2546 = vmax.f32 %v2418, 0.0
          %v2547 = vmax.f32 %v2419, 0.0
          %v2548 = vmax.f32 %v2420, 0.0
          %v2549 = vmax.f32 %v2421, 0.0
          %v2550 = vmax.f32 %v2422, 0.0
          %v2551 = vmax.f32 %v2423, 0.0
          %v2552 = vmax.f32 %v2424, 0.0
          %v2553 = vmax.f32 %v2425, 0.0
          %v2554 = vmax.f32 %v2426, 0.0
          %v2555 = vmax.f32 %v2427, 0.0
          %v2556 = vmax.f32 %v2428, 0.0
          %v2557 = vmax.f32 %v2429, 0.0
          %v2558 = vmax.f32 %v2430, 0.0
          %v2559 = vmax.f32 %v2431, 0.0
          %v2560 = vmax.f32 %v2432, 0.0
          %v2561 = vmax.f32 %v2433, 0.0
          %v2562 = vmax.f32 %v2434, 0.0
          %v2563 = vmax.f32 %v2435, 0.0
          %v2564 = vmax.f32 %v2436, 0.0
          %v2565 = vmax.f32 %v2437, 0.0
          %v2566 = vmax.f32 %v2438, 0.0
          %v2567 = vmax.f32 %v2439, 0.0
          %v2568 = vpack.c.bf16 %v2441, %v2440
          %v2569 = vpack.c.bf16 %v2443, %v2442
          %v2570 = vpack.c.bf16 %v2445, %v2444
          %v2571 = vpack.c.bf16 %v2447, %v2446
          %v2572 = vpack.c.bf16 %v2449, %v2448
          %v2573 = vpack.c.bf16 %v2451, %v2450
          %v2574 = vpack.c.bf16 %v2453, %v2452
          %v2575 = vpack.c.bf16 %v2455, %v2454
          %v2576 = vpack.c.bf16 %v2457, %v2456
          %v2577 = vpack.c.bf16 %v2459, %v2458
          %v2578 = vpack.c.bf16 %v2461, %v2460
          %v2579 = vpack.c.bf16 %v2463, %v2462
          %v2580 = vpack.c.bf16 %v2465, %v2464
          %v2581 = vpack.c.bf16 %v2467, %v2466
          %v2582 = vpack.c.bf16 %v2469, %v2468
          %v2583 = vpack.c.bf16 %v2471, %v2470
          %v2584 = vpack.c.bf16 %v2473, %v2472
          %v2585 = vpack.c.bf16 %v2475, %v2474
          %v2586 = vpack.c.bf16 %v2477, %v2476
          %v2587 = vpack.c.bf16 %v2479, %v2478
          %v2588 = vpack.c.bf16 %v2481, %v2480
          %v2589 = vpack.c.bf16 %v2483, %v2482
          %v2590 = vpack.c.bf16 %v2485, %v2484
          %v2591 = vpack.c.bf16 %v2487, %v2486
          %v2592 = vpack.c.bf16 %v2489, %v2488
          %v2593 = vpack.c.bf16 %v2491, %v2490
          %v2594 = vpack.c.bf16 %v2493, %v2492
          %v2595 = vpack.c.bf16 %v2495, %v2494
          %v2596 = vpack.c.bf16 %v2497, %v2496
          %v2597 = vpack.c.bf16 %v2499, %v2498
          %v2598 = vpack.c.bf16 %v2501, %v2500
          %v2599 = vpack.c.bf16 %v2503, %v2502
          %v2600 = vpack.c.bf16 %v2505, %v2504
          %v2601 = vpack.c.bf16 %v2507, %v2506
          %v2602 = vpack.c.bf16 %v2509, %v2508
          %v2603 = vpack.c.bf16 %v2511, %v2510
          %v2604 = vpack.c.bf16 %v2513, %v2512
          %v2605 = vpack.c.bf16 %v2515, %v2514
          %v2606 = vpack.c.bf16 %v2517, %v2516
          %v2607 = vpack.c.bf16 %v2519, %v2518
          %v2608 = vpack.c.bf16 %v2521, %v2520
          %v2609 = vpack.c.bf16 %v2523, %v2522
          %v2610 = vpack.c.bf16 %v2525, %v2524
          %v2611 = vpack.c.bf16 %v2527, %v2526
          %v2612 = vpack.c.bf16 %v2529, %v2528
          %v2613 = vpack.c.bf16 %v2531, %v2530
          %v2614 = vpack.c.bf16 %v2533, %v2532
          %v2615 = vpack.c.bf16 %v2535, %v2534
          %v2616 = vpack.c.bf16 %v2537, %v2536
          %v2617 = vpack.c.bf16 %v2539, %v2538
          %v2618 = vpack.c.bf16 %v2541, %v2540
          %v2619 = vpack.c.bf16 %v2543, %v2542
          %v2620 = vpack.c.bf16 %v2545, %v2544
          %v2621 = vpack.c.bf16 %v2547, %v2546
          %v2622 = vpack.c.bf16 %v2549, %v2548
          %v2623 = vpack.c.bf16 %v2551, %v2550
          %v2624 = vpack.c.bf16 %v2553, %v2552
          %v2625 = vpack.c.bf16 %v2555, %v2554
          %v2626 = vpack.c.bf16 %v2557, %v2556
          %v2627 = vpack.c.bf16 %v2559, %v2558
          %v2628 = vpack.c.bf16 %v2561, %v2560
          %v2629 = vpack.c.bf16 %v2563, %v2562
          %v2630 = vpack.c.bf16 %v2565, %v2564
          %v2631 = vpack.c.bf16 %v2567, %v2566
          %v2696 = vunpack.c.l.b16 %v2568
          %v2697 = vunpack.c.h.b16 %v2568
          %v2698 = vunpack.c.l.b16 %v2569
          %v2699 = vunpack.c.h.b16 %v2569
          %v2700 = vunpack.c.l.b16 %v2570
          %v2701 = vunpack.c.h.b16 %v2570
          %v2702 = vunpack.c.l.b16 %v2571
          %v2703 = vunpack.c.h.b16 %v2571
          %v2704 = vunpack.c.l.b16 %v2572
          %v2705 = vunpack.c.h.b16 %v2572
          %v2706 = vunpack.c.l.b16 %v2573
          %v2707 = vunpack.c.h.b16 %v2573
          %v2708 = vunpack.c.l.b16 %v2574
          %v2709 = vunpack.c.h.b16 %v2574
          %v2710 = vunpack.c.l.b16 %v2575
          %v2711 = vunpack.c.h.b16 %v2575
          %v2712 = vunpack.c.l.b16 %v2576
          %v2713 = vunpack.c.h.b16 %v2576
          %v2714 = vunpack.c.l.b16 %v2577
          %v2715 = vunpack.c.h.b16 %v2577
          %v2716 = vunpack.c.l.b16 %v2578
          %v2717 = vunpack.c.h.b16 %v2578
          %v2718 = vunpack.c.l.b16 %v2579
          %v2719 = vunpack.c.h.b16 %v2579
          %v2720 = vunpack.c.l.b16 %v2580
          %v2721 = vunpack.c.h.b16 %v2580
          %v2722 = vunpack.c.l.b16 %v2581
          %v2723 = vunpack.c.h.b16 %v2581
          %v2724 = vunpack.c.l.b16 %v2582
          %v2725 = vunpack.c.h.b16 %v2582
          %v2726 = vunpack.c.l.b16 %v2583
          %v2727 = vunpack.c.h.b16 %v2583
          %v2728 = vunpack.c.l.b16 %v2584
          %v2729 = vunpack.c.h.b16 %v2584
          %v2730 = vunpack.c.l.b16 %v2585
          %v2731 = vunpack.c.h.b16 %v2585
          %v2732 = vunpack.c.l.b16 %v2586
          %v2733 = vunpack.c.h.b16 %v2586
          %v2734 = vunpack.c.l.b16 %v2587
          %v2735 = vunpack.c.h.b16 %v2587
          %v2736 = vunpack.c.l.b16 %v2588
          %v2737 = vunpack.c.h.b16 %v2588
          %v2738 = vunpack.c.l.b16 %v2589
          %v2739 = vunpack.c.h.b16 %v2589
          %v2740 = vunpack.c.l.b16 %v2590
          %v2741 = vunpack.c.h.b16 %v2590
          %v2742 = vunpack.c.l.b16 %v2591
          %v2743 = vunpack.c.h.b16 %v2591
          %v2744 = vunpack.c.l.b16 %v2592
          %v2745 = vunpack.c.h.b16 %v2592
          %v2746 = vunpack.c.l.b16 %v2593
          %v2747 = vunpack.c.h.b16 %v2593
          %v2748 = vunpack.c.l.b16 %v2594
          %v2749 = vunpack.c.h.b16 %v2594
          %v2750 = vunpack.c.l.b16 %v2595
          %v2751 = vunpack.c.h.b16 %v2595
          %v2752 = vunpack.c.l.b16 %v2596
          %v2753 = vunpack.c.h.b16 %v2596
          %v2754 = vunpack.c.l.b16 %v2597
          %v2755 = vunpack.c.h.b16 %v2597
          %v2756 = vunpack.c.l.b16 %v2598
          %v2757 = vunpack.c.h.b16 %v2598
          %v2758 = vunpack.c.l.b16 %v2599
          %v2759 = vunpack.c.h.b16 %v2599
          %v2760 = vunpack.c.l.b16 %v2600
          %v2761 = vunpack.c.h.b16 %v2600
          %v2762 = vunpack.c.l.b16 %v2601
          %v2763 = vunpack.c.h.b16 %v2601
          %v2764 = vunpack.c.l.b16 %v2602
          %v2765 = vunpack.c.h.b16 %v2602
          %v2766 = vunpack.c.l.b16 %v2603
          %v2767 = vunpack.c.h.b16 %v2603
          %v2768 = vunpack.c.l.b16 %v2604
          %v2769 = vunpack.c.h.b16 %v2604
          %v2770 = vunpack.c.l.b16 %v2605
          %v2771 = vunpack.c.h.b16 %v2605
          %v2772 = vunpack.c.l.b16 %v2606
          %v2773 = vunpack.c.h.b16 %v2606
          %v2774 = vunpack.c.l.b16 %v2607
          %v2775 = vunpack.c.h.b16 %v2607
          %v2776 = vunpack.c.l.b16 %v2608
          %v2777 = vunpack.c.h.b16 %v2608
          %v2778 = vunpack.c.l.b16 %v2609
          %v2779 = vunpack.c.h.b16 %v2609
          %v2780 = vunpack.c.l.b16 %v2610
          %v2781 = vunpack.c.h.b16 %v2610
          %v2782 = vunpack.c.l.b16 %v2611
          %v2783 = vunpack.c.h.b16 %v2611
          %v2784 = vunpack.c.l.b16 %v2612
          %v2785 = vunpack.c.h.b16 %v2612
          %v2786 = vunpack.c.l.b16 %v2613
          %v2787 = vunpack.c.h.b16 %v2613
          %v2788 = vunpack.c.l.b16 %v2614
          %v2789 = vunpack.c.h.b16 %v2614
          %v2790 = vunpack.c.l.b16 %v2615
          %v2791 = vunpack.c.h.b16 %v2615
          %v2792 = vunpack.c.l.b16 %v2616
          %v2793 = vunpack.c.h.b16 %v2616
          %v2794 = vunpack.c.l.b16 %v2617
          %v2795 = vunpack.c.h.b16 %v2617
          %v2796 = vunpack.c.l.b16 %v2618
          %v2797 = vunpack.c.h.b16 %v2618
          %v2798 = vunpack.c.l.b16 %v2619
          %v2799 = vunpack.c.h.b16 %v2619
          %v2800 = vunpack.c.l.b16 %v2620
          %v2801 = vunpack.c.h.b16 %v2620
          %v2802 = vunpack.c.l.b16 %v2621
          %v2803 = vunpack.c.h.b16 %v2621
          %v2804 = vunpack.c.l.b16 %v2622
          %v2805 = vunpack.c.h.b16 %v2622
          %v2806 = vunpack.c.l.b16 %v2623
          %v2807 = vunpack.c.h.b16 %v2623
          %v2808 = vunpack.c.l.b16 %v2624
          %v2809 = vunpack.c.h.b16 %v2624
          %v2810 = vunpack.c.l.b16 %v2625
          %v2811 = vunpack.c.h.b16 %v2625
          %v2812 = vunpack.c.l.b16 %v2626
          %v2813 = vunpack.c.h.b16 %v2626
          %v2814 = vunpack.c.l.b16 %v2627
          %v2815 = vunpack.c.h.b16 %v2627
          %v2816 = vunpack.c.l.b16 %v2628
          %v2817 = vunpack.c.h.b16 %v2628
          %v2818 = vunpack.c.l.b16 %v2629
          %v2819 = vunpack.c.h.b16 %v2629
          %v2820 = vunpack.c.l.b16 %v2630
          %v2821 = vunpack.c.h.b16 %v2630
          %v2822 = vunpack.c.l.b16 %v2631
          %v2823 = vunpack.c.h.b16 %v2631
          %v2824 = vpack.c.b16 %v2696, %v2696
          %v2825 = vpack.c.b16 %v2697, %v2697
          %v2826 = vpack.c.b16 %v2698, %v2698
          %v2827 = vpack.c.b16 %v2699, %v2699
          %v2828 = vpack.c.b16 %v2700, %v2700
          %v2829 = vpack.c.b16 %v2701, %v2701
          %v2830 = vpack.c.b16 %v2702, %v2702
          %v2831 = vpack.c.b16 %v2703, %v2703
          %v2832 = vpack.c.b16 %v2704, %v2704
          %v2833 = vpack.c.b16 %v2705, %v2705
          %v2834 = vpack.c.b16 %v2706, %v2706
          %v2835 = vpack.c.b16 %v2707, %v2707
          %v2836 = vpack.c.b16 %v2708, %v2708
          %v2837 = vpack.c.b16 %v2709, %v2709
          %v2838 = vpack.c.b16 %v2710, %v2710
          %v2839 = vpack.c.b16 %v2711, %v2711
          %v2840 = vpack.c.b16 %v2712, %v2712
          %v2841 = vpack.c.b16 %v2713, %v2713
          %v2842 = vpack.c.b16 %v2714, %v2714
          %v2843 = vpack.c.b16 %v2715, %v2715
          %v2844 = vpack.c.b16 %v2716, %v2716
          %v2845 = vpack.c.b16 %v2717, %v2717
          %v2846 = vpack.c.b16 %v2718, %v2718
          %v2847 = vpack.c.b16 %v2719, %v2719
          %v2848 = vpack.c.b16 %v2720, %v2720
          %v2849 = vpack.c.b16 %v2721, %v2721
          %v2850 = vpack.c.b16 %v2722, %v2722
          %v2851 = vpack.c.b16 %v2723, %v2723
          %v2852 = vpack.c.b16 %v2724, %v2724
          %v2853 = vpack.c.b16 %v2725, %v2725
          %v2854 = vpack.c.b16 %v2726, %v2726
          %v2855 = vpack.c.b16 %v2727, %v2727
          %v2856 = vpack.c.b16 %v2728, %v2728
          %v2857 = vpack.c.b16 %v2729, %v2729
          %v2858 = vpack.c.b16 %v2730, %v2730
          %v2859 = vpack.c.b16 %v2731, %v2731
          %v2860 = vpack.c.b16 %v2732, %v2732
          %v2861 = vpack.c.b16 %v2733, %v2733
          %v2862 = vpack.c.b16 %v2734, %v2734
          %v2863 = vpack.c.b16 %v2735, %v2735
          %v2864 = vpack.c.b16 %v2736, %v2736
          %v2865 = vpack.c.b16 %v2737, %v2737
          %v2866 = vpack.c.b16 %v2738, %v2738
          %v2867 = vpack.c.b16 %v2739, %v2739
          %v2868 = vpack.c.b16 %v2740, %v2740
          %v2869 = vpack.c.b16 %v2741, %v2741
          %v2870 = vpack.c.b16 %v2742, %v2742
          %v2871 = vpack.c.b16 %v2743, %v2743
          %v2872 = vpack.c.b16 %v2744, %v2744
          %v2873 = vpack.c.b16 %v2745, %v2745
          %v2874 = vpack.c.b16 %v2746, %v2746
          %v2875 = vpack.c.b16 %v2747, %v2747
          %v2876 = vpack.c.b16 %v2748, %v2748
          %v2877 = vpack.c.b16 %v2749, %v2749
          %v2878 = vpack.c.b16 %v2750, %v2750
          %v2879 = vpack.c.b16 %v2751, %v2751
          %v2880 = vpack.c.b16 %v2752, %v2752
          %v2881 = vpack.c.b16 %v2753, %v2753
          %v2882 = vpack.c.b16 %v2754, %v2754
          %v2883 = vpack.c.b16 %v2755, %v2755
          %v2884 = vpack.c.b16 %v2756, %v2756
          %v2885 = vpack.c.b16 %v2757, %v2757
          %v2886 = vpack.c.b16 %v2758, %v2758
          %v2887 = vpack.c.b16 %v2759, %v2759
          %v2888 = vpack.c.b16 %v2760, %v2760
          %v2889 = vpack.c.b16 %v2761, %v2761
          %v2890 = vpack.c.b16 %v2762, %v2762
          %v2891 = vpack.c.b16 %v2763, %v2763
          %v2892 = vpack.c.b16 %v2764, %v2764
          %v2893 = vpack.c.b16 %v2765, %v2765
          %v2894 = vpack.c.b16 %v2766, %v2766
          %v2895 = vpack.c.b16 %v2767, %v2767
          %v2896 = vpack.c.b16 %v2768, %v2768
          %v2897 = vpack.c.b16 %v2769, %v2769
          %v2898 = vpack.c.b16 %v2770, %v2770
          %v2899 = vpack.c.b16 %v2771, %v2771
          %v2900 = vpack.c.b16 %v2772, %v2772
          %v2901 = vpack.c.b16 %v2773, %v2773
          %v2902 = vpack.c.b16 %v2774, %v2774
          %v2903 = vpack.c.b16 %v2775, %v2775
          %v2904 = vpack.c.b16 %v2776, %v2776
          %v2905 = vpack.c.b16 %v2777, %v2777
          %v2906 = vpack.c.b16 %v2778, %v2778
          %v2907 = vpack.c.b16 %v2779, %v2779
          %v2908 = vpack.c.b16 %v2780, %v2780
          %v2909 = vpack.c.b16 %v2781, %v2781
          %v2910 = vpack.c.b16 %v2782, %v2782
          %v2911 = vpack.c.b16 %v2783, %v2783
          %v2912 = vpack.c.b16 %v2784, %v2784
          %v2913 = vpack.c.b16 %v2785, %v2785
          %v2914 = vpack.c.b16 %v2786, %v2786
          %v2915 = vpack.c.b16 %v2787, %v2787
          %v2916 = vpack.c.b16 %v2788, %v2788
          %v2917 = vpack.c.b16 %v2789, %v2789
          %v2918 = vpack.c.b16 %v2790, %v2790
          %v2919 = vpack.c.b16 %v2791, %v2791
          %v2920 = vpack.c.b16 %v2792, %v2792
          %v2921 = vpack.c.b16 %v2793, %v2793
          %v2922 = vpack.c.b16 %v2794, %v2794
          %v2923 = vpack.c.b16 %v2795, %v2795
          %v2924 = vpack.c.b16 %v2796, %v2796
          %v2925 = vpack.c.b16 %v2797, %v2797
          %v2926 = vpack.c.b16 %v2798, %v2798
          %v2927 = vpack.c.b16 %v2799, %v2799
          %v2928 = vpack.c.b16 %v2800, %v2800
          %v2929 = vpack.c.b16 %v2801, %v2801
          %v2930 = vpack.c.b16 %v2802, %v2802
          %v2931 = vpack.c.b16 %v2803, %v2803
          %v2932 = vpack.c.b16 %v2804, %v2804
          %v2933 = vpack.c.b16 %v2805, %v2805
          %v2934 = vpack.c.b16 %v2806, %v2806
          %v2935 = vpack.c.b16 %v2807, %v2807
          %v2936 = vpack.c.b16 %v2808, %v2808
          %v2937 = vpack.c.b16 %v2809, %v2809
          %v2938 = vpack.c.b16 %v2810, %v2810
          %v2939 = vpack.c.b16 %v2811, %v2811
          %v2940 = vpack.c.b16 %v2812, %v2812
          %v2941 = vpack.c.b16 %v2813, %v2813
          %v2942 = vpack.c.b16 %v2814, %v2814
          %v2943 = vpack.c.b16 %v2815, %v2815
          %v2944 = vpack.c.b16 %v2816, %v2816
          %v2945 = vpack.c.b16 %v2817, %v2817
          %v2946 = vpack.c.b16 %v2818, %v2818
          %v2947 = vpack.c.b16 %v2819, %v2819
          %v2948 = vpack.c.b16 %v2820, %v2820
          %v2949 = vpack.c.b16 %v2821, %v2821
          %v2950 = vpack.c.b16 %v2822, %v2822
          %v2951 = vpack.c.b16 %v2823, %v2823
          %vm3080 = vcmask 519168
          %3081 = vst.msk [vmem:[%s274] sm:$0xf] %vm3080, %v2824
          %3082 = vst.msk [vmem:[%s274 + $0x4] sm:$0xf] %vm3080, %v2825
          %3083 = vst.msk [vmem:[%s274 + $0x8] sm:$0xf] %vm3080, %v2826
          %3084 = vst.msk [vmem:[%s274 + $0xc] sm:$0xf] %vm3080, %v2827
          %3085 = vst.msk [vmem:[%s274 + $0x10] sm:$0xf] %vm3080, %v2828
          %3086 = vst.msk [vmem:[%s274 + $0x14] sm:$0xf] %vm3080, %v2829
          %3087 = vst.msk [vmem:[%s274 + $0x18] sm:$0xf] %vm3080, %v2830
          %3088 = vst.msk [vmem:[%s274 + $0x1c] sm:$0xf] %vm3080, %v2831
          %3089 = vst.msk [vmem:[%s274 + $0x20] sm:$0xf] %vm3080, %v2832
          %3090 = vst.msk [vmem:[%s274 + $0x24] sm:$0xf] %vm3080, %v2833
          %3091 = vst.msk [vmem:[%s274 + $0x28] sm:$0xf] %vm3080, %v2834
          %3092 = vst.msk [vmem:[%s274 + $0x2c] sm:$0xf] %vm3080, %v2835
          %3093 = vst.msk [vmem:[%s274 + $0x30] sm:$0xf] %vm3080, %v2836
          %3094 = vst.msk [vmem:[%s274 + $0x34] sm:$0xf] %vm3080, %v2837
          %3095 = vst.msk [vmem:[%s274 + $0x38] sm:$0xf] %vm3080, %v2838
          %3096 = vst.msk [vmem:[%s274 + $0x3c] sm:$0xf] %vm3080, %v2839
          %3097 = vst.msk [vmem:[%s274 + $0x40] sm:$0xf] %vm3080, %v2840
          %3098 = vst.msk [vmem:[%s274 + $0x44] sm:$0xf] %vm3080, %v2841
          %3099 = vst.msk [vmem:[%s274 + $0x48] sm:$0xf] %vm3080, %v2842
          %3100 = vst.msk [vmem:[%s274 + $0x4c] sm:$0xf] %vm3080, %v2843
          %3101 = vst.msk [vmem:[%s274 + $0x50] sm:$0xf] %vm3080, %v2844
          %3102 = vst.msk [vmem:[%s274 + $0x54] sm:$0xf] %vm3080, %v2845
          %3103 = vst.msk [vmem:[%s274 + $0x58] sm:$0xf] %vm3080, %v2846
          %3104 = vst.msk [vmem:[%s274 + $0x5c] sm:$0xf] %vm3080, %v2847
          %3105 = vst.msk [vmem:[%s274 + $0x60] sm:$0xf] %vm3080, %v2848
          %3106 = vst.msk [vmem:[%s274 + $0x64] sm:$0xf] %vm3080, %v2849
          %3107 = vst.msk [vmem:[%s274 + $0x68] sm:$0xf] %vm3080, %v2850
          %3108 = vst.msk [vmem:[%s274 + $0x6c] sm:$0xf] %vm3080, %v2851
          %3109 = vst.msk [vmem:[%s274 + $0x70] sm:$0xf] %vm3080, %v2852
          %3110 = vst.msk [vmem:[%s274 + $0x74] sm:$0xf] %vm3080, %v2853
          %3111 = vst.msk [vmem:[%s274 + $0x78] sm:$0xf] %vm3080, %v2854
          %3112 = vst.msk [vmem:[%s274 + $0x7c] sm:$0xf] %vm3080, %v2855
          %3113 = vst.msk [vmem:[%s274 + $0x80] sm:$0xf] %vm3080, %v2856
          %3114 = vst.msk [vmem:[%s274 + $0x84] sm:$0xf] %vm3080, %v2857
          %3115 = vst.msk [vmem:[%s274 + $0x88] sm:$0xf] %vm3080, %v2858
          %3116 = vst.msk [vmem:[%s274 + $0x8c] sm:$0xf] %vm3080, %v2859
          %3117 = vst.msk [vmem:[%s274 + $0x90] sm:$0xf] %vm3080, %v2860
          %3118 = vst.msk [vmem:[%s274 + $0x94] sm:$0xf] %vm3080, %v2861
          %3119 = vst.msk [vmem:[%s274 + $0x98] sm:$0xf] %vm3080, %v2862
          %3120 = vst.msk [vmem:[%s274 + $0x9c] sm:$0xf] %vm3080, %v2863
          %3121 = vst.msk [vmem:[%s274 + $0xa0] sm:$0xf] %vm3080, %v2864
          %3122 = vst.msk [vmem:[%s274 + $0xa4] sm:$0xf] %vm3080, %v2865
          %3123 = vst.msk [vmem:[%s274 + $0xa8] sm:$0xf] %vm3080, %v2866
          %3124 = vst.msk [vmem:[%s274 + $0xac] sm:$0xf] %vm3080, %v2867
          %3125 = vst.msk [vmem:[%s274 + $0xb0] sm:$0xf] %vm3080, %v2868
          %3126 = vst.msk [vmem:[%s274 + $0xb4] sm:$0xf] %vm3080, %v2869
          %3127 = vst.msk [vmem:[%s274 + $0xb8] sm:$0xf] %vm3080, %v2870
          %3128 = vst.msk [vmem:[%s274 + $0xbc] sm:$0xf] %vm3080, %v2871
          %3129 = vst.msk [vmem:[%s274 + $0xc0] sm:$0xf] %vm3080, %v2872
          %3130 = vst.msk [vmem:[%s274 + $0xc4] sm:$0xf] %vm3080, %v2873
          %3131 = vst.msk [vmem:[%s274 + $0xc8] sm:$0xf] %vm3080, %v2874
          %3132 = vst.msk [vmem:[%s274 + $0xcc] sm:$0xf] %vm3080, %v2875
          %3133 = vst.msk [vmem:[%s274 + $0xd0] sm:$0xf] %vm3080, %v2876
          %3134 = vst.msk [vmem:[%s274 + $0xd4] sm:$0xf] %vm3080, %v2877
          %3135 = vst.msk [vmem:[%s274 + $0xd8] sm:$0xf] %vm3080, %v2878
          %3136 = vst.msk [vmem:[%s274 + $0xdc] sm:$0xf] %vm3080, %v2879
          %3137 = vst.msk [vmem:[%s274 + $0xe0] sm:$0xf] %vm3080, %v2880
          %3138 = vst.msk [vmem:[%s274 + $0xe4] sm:$0xf] %vm3080, %v2881
          %3139 = vst.msk [vmem:[%s274 + $0xe8] sm:$0xf] %vm3080, %v2882
          %3140 = vst.msk [vmem:[%s274 + $0xec] sm:$0xf] %vm3080, %v2883
          %3141 = vst.msk [vmem:[%s274 + $0xf0] sm:$0xf] %vm3080, %v2884
          %3142 = vst.msk [vmem:[%s274 + $0xf4] sm:$0xf] %vm3080, %v2885
          %3143 = vst.msk [vmem:[%s274 + $0xf8] sm:$0xf] %vm3080, %v2886
          %3144 = vst.msk [vmem:[%s274 + $0xfc] sm:$0xf] %vm3080, %v2887
          %3145 = vst.msk [vmem:[%s274 + $0x100] sm:$0xf] %vm3080, %v2888
          %3146 = vst.msk [vmem:[%s274 + $0x104] sm:$0xf] %vm3080, %v2889
          %3147 = vst.msk [vmem:[%s274 + $0x108] sm:$0xf] %vm3080, %v2890
          %3148 = vst.msk [vmem:[%s274 + $0x10c] sm:$0xf] %vm3080, %v2891
          %3149 = vst.msk [vmem:[%s274 + $0x110] sm:$0xf] %vm3080, %v2892
          %3150 = vst.msk [vmem:[%s274 + $0x114] sm:$0xf] %vm3080, %v2893
          %3151 = vst.msk [vmem:[%s274 + $0x118] sm:$0xf] %vm3080, %v2894
          %3152 = vst.msk [vmem:[%s274 + $0x11c] sm:$0xf] %vm3080, %v2895
          %3153 = vst.msk [vmem:[%s274 + $0x120] sm:$0xf] %vm3080, %v2896
          %3154 = vst.msk [vmem:[%s274 + $0x124] sm:$0xf] %vm3080, %v2897
          %3155 = vst.msk [vmem:[%s274 + $0x128] sm:$0xf] %vm3080, %v2898
          %3156 = vst.msk [vmem:[%s274 + $0x12c] sm:$0xf] %vm3080, %v2899
          %3157 = vst.msk [vmem:[%s274 + $0x130] sm:$0xf] %vm3080, %v2900
          %3158 = vst.msk [vmem:[%s274 + $0x134] sm:$0xf] %vm3080, %v2901
          %3159 = vst.msk [vmem:[%s274 + $0x138] sm:$0xf] %vm3080, %v2902
          %3160 = vst.msk [vmem:[%s274 + $0x13c] sm:$0xf] %vm3080, %v2903
          %3161 = vst.msk [vmem:[%s274 + $0x140] sm:$0xf] %vm3080, %v2904
          %3162 = vst.msk [vmem:[%s274 + $0x144] sm:$0xf] %vm3080, %v2905
          %3163 = vst.msk [vmem:[%s274 + $0x148] sm:$0xf] %vm3080, %v2906
          %3164 = vst.msk [vmem:[%s274 + $0x14c] sm:$0xf] %vm3080, %v2907
          %3165 = vst.msk [vmem:[%s274 + $0x150] sm:$0xf] %vm3080, %v2908
          %3166 = vst.msk [vmem:[%s274 + $0x154] sm:$0xf] %vm3080, %v2909
          %3167 = vst.msk [vmem:[%s274 + $0x158] sm:$0xf] %vm3080, %v2910
          %3168 = vst.msk [vmem:[%s274 + $0x15c] sm:$0xf] %vm3080, %v2911
          %3169 = vst.msk [vmem:[%s274 + $0x160] sm:$0xf] %vm3080, %v2912
          %3170 = vst.msk [vmem:[%s274 + $0x164] sm:$0xf] %vm3080, %v2913
          %3171 = vst.msk [vmem:[%s274 + $0x168] sm:$0xf] %vm3080, %v2914
          %3172 = vst.msk [vmem:[%s274 + $0x16c] sm:$0xf] %vm3080, %v2915
          %3173 = vst.msk [vmem:[%s274 + $0x170] sm:$0xf] %vm3080, %v2916
          %3174 = vst.msk [vmem:[%s274 + $0x174] sm:$0xf] %vm3080, %v2917
          %3175 = vst.msk [vmem:[%s274 + $0x178] sm:$0xf] %vm3080, %v2918
          %3176 = vst.msk [vmem:[%s274 + $0x17c] sm:$0xf] %vm3080, %v2919
          %3177 = vst.msk [vmem:[%s274 + $0x180] sm:$0xf] %vm3080, %v2920
          %3178 = vst.msk [vmem:[%s274 + $0x184] sm:$0xf] %vm3080, %v2921
          %3179 = vst.msk [vmem:[%s274 + $0x188] sm:$0xf] %vm3080, %v2922
          %3180 = vst.msk [vmem:[%s274 + $0x18c] sm:$0xf] %vm3080, %v2923
          %3181 = vst.msk [vmem:[%s274 + $0x190] sm:$0xf] %vm3080, %v2924
          %3182 = vst.msk [vmem:[%s274 + $0x194] sm:$0xf] %vm3080, %v2925
          %3183 = vst.msk [vmem:[%s274 + $0x198] sm:$0xf] %vm3080, %v2926
          %3184 = vst.msk [vmem:[%s274 + $0x19c] sm:$0xf] %vm3080, %v2927
          %3185 = vst.msk [vmem:[%s274 + $0x1a0] sm:$0xf] %vm3080, %v2928
          %3186 = vst.msk [vmem:[%s274 + $0x1a4] sm:$0xf] %vm3080, %v2929
          %3187 = vst.msk [vmem:[%s274 + $0x1a8] sm:$0xf] %vm3080, %v2930
          %3188 = vst.msk [vmem:[%s274 + $0x1ac] sm:$0xf] %vm3080, %v2931
          %3189 = vst.msk [vmem:[%s274 + $0x1b0] sm:$0xf] %vm3080, %v2932
          %3190 = vst.msk [vmem:[%s274 + $0x1b4] sm:$0xf] %vm3080, %v2933
          %3191 = vst.msk [vmem:[%s274 + $0x1b8] sm:$0xf] %vm3080, %v2934
          %3192 = vst.msk [vmem:[%s274 + $0x1bc] sm:$0xf] %vm3080, %v2935
          %3193 = vst.msk [vmem:[%s274 + $0x1c0] sm:$0xf] %vm3080, %v2936
          %3194 = vst.msk [vmem:[%s274 + $0x1c4] sm:$0xf] %vm3080, %v2937
          %3195 = vst.msk [vmem:[%s274 + $0x1c8] sm:$0xf] %vm3080, %v2938
          %3196 = vst.msk [vmem:[%s274 + $0x1cc] sm:$0xf] %vm3080, %v2939
          %3197 = vst.msk [vmem:[%s274 + $0x1d0] sm:$0xf] %vm3080, %v2940
          %3198 = vst.msk [vmem:[%s274 + $0x1d4] sm:$0xf] %vm3080, %v2941
          %3199 = vst.msk [vmem:[%s274 + $0x1d8] sm:$0xf] %vm3080, %v2942
          %3200 = vst.msk [vmem:[%s274 + $0x1dc] sm:$0xf] %vm3080, %v2943
          %3201 = vst.msk [vmem:[%s274 + $0x1e0] sm:$0xf] %vm3080, %v2944
          %3202 = vst.msk [vmem:[%s274 + $0x1e4] sm:$0xf] %vm3080, %v2945
          %3203 = vst.msk [vmem:[%s274 + $0x1e8] sm:$0xf] %vm3080, %v2946
          %3204 = vst.msk [vmem:[%s274 + $0x1ec] sm:$0xf] %vm3080, %v2947
          %3205 = vst.msk [vmem:[%s274 + $0x1f0] sm:$0xf] %vm3080, %v2948
          %3206 = vst.msk [vmem:[%s274 + $0x1f4] sm:$0xf] %vm3080, %v2949
          %3207 = vst.msk [vmem:[%s274 + $0x1f8] sm:$0xf] %vm3080, %v2950
          %3208 = vst.msk [vmem:[%s274 + $0x1fc] sm:$0xf] %vm3080, %v2951
        $region44: #{conv2d_bn_act.1} parent=35 // pred_fallthru
          _
        %s3209 = sand.u32 %s152, 1
        %s3210 = sand.u32 %s152, 1
        %s3211 = smul.addr %s3210, 512
        %s3212 = scalar_lea.vmem [#allocation3], %s3211
        // Predicated region
        $region45: #{conv2d_bn_act.1} parent=35 // pred_check
          %p3213 = pneg %p162
        $region46: #{conv2d_bn_act.1} parent=35 // pred_check_branch
          %3215 = sbr.rel (%p3213) target = $region48
        $region47: #{conv2d_bn_act.1} parent=35 // pred_region
          %s3216 = smul.u32 128, %s20
          %s3217 = ssub.s32 3136, %s3216
          %p3218 = scmp.lt.s32.totalorder %s3217, 128
          %s3219 = scalar_select %p3218, %s3217, 128
          %s3220 = smul.u32 64, %s3219
          %p3221 = scmp.ne.s32.totalorder 0, %s3220
          %s3222 = sadd.s32 %s21, %s3216
          %s3223 = smul.addr %s3222, 4
          %s3224 = scalar_lea.vmem %s4, %s3223
          // Predicated region
          $region49: #{conv2d_bn_act.1} parent=47 // pred_check
            %p3225 = pneg %p3221
          $region50: #{conv2d_bn_act.1} parent=47 // pred_check_branch
            %3227 = sbr.rel (%p3225) target = $region52
          $region51: #{conv2d_bn_act.1} parent=47 // pred_region
            // Predicated region
            $region53: #{conv2d_bn_act.1} parent=51 // pred_check
              _
            $region54: #{conv2d_bn_act.1} parent=51 // pred_check_branch
              %3229 = sbr.rel target = $region56
            $region55: #{conv2d_bn_act.1} parent=51 // pred_region
              // Predicated region
              $region75: #{conv2d_bn_act.1} parent=55 // pred_check
                _
              $region76: #{conv2d_bn_act.1} parent=55 // pred_check_branch
                %3405 = sbr.rel (0) target = $region78
              $region77: #{conv2d_bn_act.1} parent=55 // pred_region
                %s3407 = ssub.s32 16, 1
                %s3408 = sshrl.u32 %s3219, 6
                // While loop
                $region79: #{conv2d_bn_act.1} parent=77 // loop_pre_header
                  _
                $region80: #{conv2d_bn_act.1} parent=77 // loop_header
                  %s3410 = sphi 0, %s3412
                  %p3411 = scmp.ge.s32.totalorder %s3410, %s3408
                  %s3415 = sphi 0, %s3548
                  %s3416 = sphi %s3212, %s3551
                  %s3417 = sphi %s3224, %s3552
                $region81: #{conv2d_bn_act.1} parent=77 // loop_header_branch
                  %3414 = sbr.rel (%p3411) target = $region85
                $region82: #{conv2d_bn_act.1} parent=77 // loop_body
                  %v3418 = vld [vmem:[%s3416] sm:%s3407]
                  %3419 = vst [vmem:[%s3417] sm:%s3407] %v3418
                  %v3420 = vld [vmem:[%s3416 + $0x4] sm:%s3407]
                  %3421 = vst [vmem:[%s3417 + $0x4] sm:%s3407] %v3420
                  %v3422 = vld [vmem:[%s3416 + $0x8] sm:%s3407]
                  %3423 = vst [vmem:[%s3417 + $0x8] sm:%s3407] %v3422
                  %v3424 = vld [vmem:[%s3416 + $0xc] sm:%s3407]
                  %3425 = vst [vmem:[%s3417 + $0xc] sm:%s3407] %v3424
                  %v3426 = vld [vmem:[%s3416 + $0x10] sm:%s3407]
                  %3427 = vst [vmem:[%s3417 + $0x10] sm:%s3407] %v3426
                  %v3428 = vld [vmem:[%s3416 + $0x14] sm:%s3407]
                  %3429 = vst [vmem:[%s3417 + $0x14] sm:%s3407] %v3428
                  %v3430 = vld [vmem:[%s3416 + $0x18] sm:%s3407]
                  %3431 = vst [vmem:[%s3417 + $0x18] sm:%s3407] %v3430
                  %v3432 = vld [vmem:[%s3416 + $0x1c] sm:%s3407]
                  %3433 = vst [vmem:[%s3417 + $0x1c] sm:%s3407] %v3432
                  %v3434 = vld [vmem:[%s3416 + $0x20] sm:%s3407]
                  %3435 = vst [vmem:[%s3417 + $0x20] sm:%s3407] %v3434
                  %v3436 = vld [vmem:[%s3416 + $0x24] sm:%s3407]
                  %3437 = vst [vmem:[%s3417 + $0x24] sm:%s3407] %v3436
                  %v3438 = vld [vmem:[%s3416 + $0x28] sm:%s3407]
                  %3439 = vst [vmem:[%s3417 + $0x28] sm:%s3407] %v3438
                  %v3440 = vld [vmem:[%s3416 + $0x2c] sm:%s3407]
                  %3441 = vst [vmem:[%s3417 + $0x2c] sm:%s3407] %v3440
                  %v3442 = vld [vmem:[%s3416 + $0x30] sm:%s3407]
                  %3443 = vst [vmem:[%s3417 + $0x30] sm:%s3407] %v3442
                  %v3444 = vld [vmem:[%s3416 + $0x34] sm:%s3407]
                  %3445 = vst [vmem:[%s3417 + $0x34] sm:%s3407] %v3444
                  %v3446 = vld [vmem:[%s3416 + $0x38] sm:%s3407]
                  %3447 = vst [vmem:[%s3417 + $0x38] sm:%s3407] %v3446
                  %v3448 = vld [vmem:[%s3416 + $0x3c] sm:%s3407]
                  %3449 = vst [vmem:[%s3417 + $0x3c] sm:%s3407] %v3448
                  %v3450 = vld [vmem:[%s3416 + $0x40] sm:%s3407]
                  %3451 = vst [vmem:[%s3417 + $0x40] sm:%s3407] %v3450
                  %v3452 = vld [vmem:[%s3416 + $0x44] sm:%s3407]
                  %3453 = vst [vmem:[%s3417 + $0x44] sm:%s3407] %v3452
                  %v3454 = vld [vmem:[%s3416 + $0x48] sm:%s3407]
                  %3455 = vst [vmem:[%s3417 + $0x48] sm:%s3407] %v3454
                  %v3456 = vld [vmem:[%s3416 + $0x4c] sm:%s3407]
                  %3457 = vst [vmem:[%s3417 + $0x4c] sm:%s3407] %v3456
                  %v3458 = vld [vmem:[%s3416 + $0x50] sm:%s3407]
                  %3459 = vst [vmem:[%s3417 + $0x50] sm:%s3407] %v3458
                  %v3460 = vld [vmem:[%s3416 + $0x54] sm:%s3407]
                  %3461 = vst [vmem:[%s3417 + $0x54] sm:%s3407] %v3460
                  %v3462 = vld [vmem:[%s3416 + $0x58] sm:%s3407]
                  %3463 = vst [vmem:[%s3417 + $0x58] sm:%s3407] %v3462
                  %v3464 = vld [vmem:[%s3416 + $0x5c] sm:%s3407]
                  %3465 = vst [vmem:[%s3417 + $0x5c] sm:%s3407] %v3464
                  %v3466 = vld [vmem:[%s3416 + $0x60] sm:%s3407]
                  %3467 = vst [vmem:[%s3417 + $0x60] sm:%s3407] %v3466
                  %v3468 = vld [vmem:[%s3416 + $0x64] sm:%s3407]
                  %3469 = vst [vmem:[%s3417 + $0x64] sm:%s3407] %v3468
                  %v3470 = vld [vmem:[%s3416 + $0x68] sm:%s3407]
                  %3471 = vst [vmem:[%s3417 + $0x68] sm:%s3407] %v3470
                  %v3472 = vld [vmem:[%s3416 + $0x6c] sm:%s3407]
                  %3473 = vst [vmem:[%s3417 + $0x6c] sm:%s3407] %v3472
                  %v3474 = vld [vmem:[%s3416 + $0x70] sm:%s3407]
                  %3475 = vst [vmem:[%s3417 + $0x70] sm:%s3407] %v3474
                  %v3476 = vld [vmem:[%s3416 + $0x74] sm:%s3407]
                  %3477 = vst [vmem:[%s3417 + $0x74] sm:%s3407] %v3476
                  %v3478 = vld [vmem:[%s3416 + $0x78] sm:%s3407]
                  %3479 = vst [vmem:[%s3417 + $0x78] sm:%s3407] %v3478
                  %v3480 = vld [vmem:[%s3416 + $0x7c] sm:%s3407]
                  %3481 = vst [vmem:[%s3417 + $0x7c] sm:%s3407] %v3480
                  %v3482 = vld [vmem:[%s3416 + $0x80] sm:%s3407]
                  %3483 = vst [vmem:[%s3417 + $0x80] sm:%s3407] %v3482
                  %v3484 = vld [vmem:[%s3416 + $0x84] sm:%s3407]
                  %3485 = vst [vmem:[%s3417 + $0x84] sm:%s3407] %v3484
                  %v3486 = vld [vmem:[%s3416 + $0x88] sm:%s3407]
                  %3487 = vst [vmem:[%s3417 + $0x88] sm:%s3407] %v3486
                  %v3488 = vld [vmem:[%s3416 + $0x8c] sm:%s3407]
                  %3489 = vst [vmem:[%s3417 + $0x8c] sm:%s3407] %v3488
                  %v3490 = vld [vmem:[%s3416 + $0x90] sm:%s3407]
                  %3491 = vst [vmem:[%s3417 + $0x90] sm:%s3407] %v3490
                  %v3492 = vld [vmem:[%s3416 + $0x94] sm:%s3407]
                  %3493 = vst [vmem:[%s3417 + $0x94] sm:%s3407] %v3492
                  %v3494 = vld [vmem:[%s3416 + $0x98] sm:%s3407]
                  %3495 = vst [vmem:[%s3417 + $0x98] sm:%s3407] %v3494
                  %v3496 = vld [vmem:[%s3416 + $0x9c] sm:%s3407]
                  %3497 = vst [vmem:[%s3417 + $0x9c] sm:%s3407] %v3496
                  %v3498 = vld [vmem:[%s3416 + $0xa0] sm:%s3407]
                  %3499 = vst [vmem:[%s3417 + $0xa0] sm:%s3407] %v3498
                  %v3500 = vld [vmem:[%s3416 + $0xa4] sm:%s3407]
                  %3501 = vst [vmem:[%s3417 + $0xa4] sm:%s3407] %v3500
                  %v3502 = vld [vmem:[%s3416 + $0xa8] sm:%s3407]
                  %3503 = vst [vmem:[%s3417 + $0xa8] sm:%s3407] %v3502
                  %v3504 = vld [vmem:[%s3416 + $0xac] sm:%s3407]
                  %3505 = vst [vmem:[%s3417 + $0xac] sm:%s3407] %v3504
                  %v3506 = vld [vmem:[%s3416 + $0xb0] sm:%s3407]
                  %3507 = vst [vmem:[%s3417 + $0xb0] sm:%s3407] %v3506
                  %v3508 = vld [vmem:[%s3416 + $0xb4] sm:%s3407]
                  %3509 = vst [vmem:[%s3417 + $0xb4] sm:%s3407] %v3508
                  %v3510 = vld [vmem:[%s3416 + $0xb8] sm:%s3407]
                  %3511 = vst [vmem:[%s3417 + $0xb8] sm:%s3407] %v3510
                  %v3512 = vld [vmem:[%s3416 + $0xbc] sm:%s3407]
                  %3513 = vst [vmem:[%s3417 + $0xbc] sm:%s3407] %v3512
                  %v3514 = vld [vmem:[%s3416 + $0xc0] sm:%s3407]
                  %3515 = vst [vmem:[%s3417 + $0xc0] sm:%s3407] %v3514
                  %v3516 = vld [vmem:[%s3416 + $0xc4] sm:%s3407]
                  %3517 = vst [vmem:[%s3417 + $0xc4] sm:%s3407] %v3516
                  %v3518 = vld [vmem:[%s3416 + $0xc8] sm:%s3407]
                  %3519 = vst [vmem:[%s3417 + $0xc8] sm:%s3407] %v3518
                  %v3520 = vld [vmem:[%s3416 + $0xcc] sm:%s3407]
                  %3521 = vst [vmem:[%s3417 + $0xcc] sm:%s3407] %v3520
                  %v3522 = vld [vmem:[%s3416 + $0xd0] sm:%s3407]
                  %3523 = vst [vmem:[%s3417 + $0xd0] sm:%s3407] %v3522
                  %v3524 = vld [vmem:[%s3416 + $0xd4] sm:%s3407]
                  %3525 = vst [vmem:[%s3417 + $0xd4] sm:%s3407] %v3524
                  %v3526 = vld [vmem:[%s3416 + $0xd8] sm:%s3407]
                  %3527 = vst [vmem:[%s3417 + $0xd8] sm:%s3407] %v3526
                  %v3528 = vld [vmem:[%s3416 + $0xdc] sm:%s3407]
                  %3529 = vst [vmem:[%s3417 + $0xdc] sm:%s3407] %v3528
                  %v3530 = vld [vmem:[%s3416 + $0xe0] sm:%s3407]
                  %3531 = vst [vmem:[%s3417 + $0xe0] sm:%s3407] %v3530
                  %v3532 = vld [vmem:[%s3416 + $0xe4] sm:%s3407]
                  %3533 = vst [vmem:[%s3417 + $0xe4] sm:%s3407] %v3532
                  %v3534 = vld [vmem:[%s3416 + $0xe8] sm:%s3407]
                  %3535 = vst [vmem:[%s3417 + $0xe8] sm:%s3407] %v3534
                  %v3536 = vld [vmem:[%s3416 + $0xec] sm:%s3407]
                  %3537 = vst [vmem:[%s3417 + $0xec] sm:%s3407] %v3536
                  %v3538 = vld [vmem:[%s3416 + $0xf0] sm:%s3407]
                  %3539 = vst [vmem:[%s3417 + $0xf0] sm:%s3407] %v3538
                  %v3540 = vld [vmem:[%s3416 + $0xf4] sm:%s3407]
                  %3541 = vst [vmem:[%s3417 + $0xf4] sm:%s3407] %v3540
                  %v3542 = vld [vmem:[%s3416 + $0xf8] sm:%s3407]
                  %3543 = vst [vmem:[%s3417 + $0xf8] sm:%s3407] %v3542
                  %v3544 = vld [vmem:[%s3416 + $0xfc] sm:%s3407]
                  %3545 = vst [vmem:[%s3417 + $0xfc] sm:%s3407] %v3544
                  %s3546 = sadd.s32 1, %s3415
                  %p3547 = scmp.ge.s32.totalorder %s3546, %s3408
                  %s3548 = scalar_select %p3547, 0, %s3546
                  %s3549 = smul.u32 %s3548, 256
                  %s3550 = smul.u32 %s3548, 256
                  %s3551 = scalar_lea.vmem %s3212, %s3549 [#allocation3]
                  %s3552 = scalar_lea.vmem %s3224, %s3550
                $region83: #{conv2d_bn_act.1} parent=77 // loop_footer
                  %s3412 = sadd.s32 %s3410, 1
                $region84: #{conv2d_bn_act.1} parent=77 // loop_footer_branch
                  %3409 = sbr.rel target = $region80
                $region85: #{conv2d_bn_act.1} parent=77 // loop_exit
                  _
                %s3553 = sshrl.u32 %s3219, 6
                %s3554 = sand.u32 %s3219, 63
                %s3555 = smul.u32 %s3553, 64
                %s3556 = smul.u32 4, %s3555
                %s3557 = scalar_lea.vmem %s3212, %s3556 [#allocation3]
                %s3558 = smul.u32 4, %s3555
                %s3559 = scalar_lea.vmem %s3224, %s3558
                // While loop
                $region86: #{conv2d_bn_act.1} parent=77 // loop_pre_header
                  _
                $region87: #{conv2d_bn_act.1} parent=77 // loop_header
                  %s3561 = sphi 0, %s3563
                  %p3562 = scmp.ge.s32.totalorder %s3561, %s3554
                  %s3566 = sphi 0, %s3573
                  %s3567 = sphi %s3557, %s3576
                  %s3568 = sphi %s3559, %s3577
                $region88: #{conv2d_bn_act.1} parent=77 // loop_header_branch
                  %3565 = sbr.rel (%p3562) target = $region92
                $region89: #{conv2d_bn_act.1} parent=77 // loop_body
                  %v3569 = vld [vmem:[%s3567] sm:%s3407]
                  %3570 = vst [vmem:[%s3568] sm:%s3407] %v3569
                  %s3571 = sadd.s32 1, %s3566
                  %p3572 = scmp.ge.s32.totalorder %s3571, %s3554
                  %s3573 = scalar_select %p3572, 0, %s3571
                  %s3574 = smul.u32 %s3573, 4
                  %s3575 = smul.u32 %s3573, 4
                  %s3576 = scalar_lea.vmem %s3557, %s3574 [#allocation3]
                  %s3577 = scalar_lea.vmem %s3559, %s3575
                $region90: #{conv2d_bn_act.1} parent=77 // loop_footer
                  %s3563 = sadd.s32 %s3561, 1
                $region91: #{conv2d_bn_act.1} parent=77 // loop_footer_branch
                  %3560 = sbr.rel target = $region87
                $region92: #{conv2d_bn_act.1} parent=77 // loop_exit
                  _
              $region78: #{conv2d_bn_act.1} parent=55 // pred_fallthru
                _
            $region56: #{conv2d_bn_act.1} parent=51 // pred_fallthru
              _
            // Predicated region
            $region57: #{conv2d_bn_act.1} parent=51 // pred_check
              _
            $region58: #{conv2d_bn_act.1} parent=51 // pred_check_branch
              %3231 = sbr.rel (0) target = $region60
            $region59: #{conv2d_bn_act.1} parent=51 // pred_region
              %s3233 = ssub.s32 16, 1
              %s3234 = sshrl.u32 %s3219, 6
              // While loop
              $region61: #{conv2d_bn_act.1} parent=59 // loop_pre_header
                _
              $region62: #{conv2d_bn_act.1} parent=59 // loop_header
                %s3236 = sphi 0, %s3238
                %p3237 = scmp.ge.s32.totalorder %s3236, %s3234
                %s3241 = sphi 0, %s3374
                %s3242 = sphi %s3212, %s3377
                %s3243 = sphi %s3224, %s3378
              $region63: #{conv2d_bn_act.1} parent=59 // loop_header_branch
                %3240 = sbr.rel (%p3237) target = $region67
              $region64: #{conv2d_bn_act.1} parent=59 // loop_body
                %v3244 = vld [vmem:[%s3242] sm:%s3233]
                %3245 = vst [vmem:[%s3243] sm:%s3233] %v3244
                %v3246 = vld [vmem:[%s3242 + $0x4] sm:%s3233]
                %3247 = vst [vmem:[%s3243 + $0x4] sm:%s3233] %v3246
                %v3248 = vld [vmem:[%s3242 + $0x8] sm:%s3233]
                %3249 = vst [vmem:[%s3243 + $0x8] sm:%s3233] %v3248
                %v3250 = vld [vmem:[%s3242 + $0xc] sm:%s3233]
                %3251 = vst [vmem:[%s3243 + $0xc] sm:%s3233] %v3250
                %v3252 = vld [vmem:[%s3242 + $0x10] sm:%s3233]
                %3253 = vst [vmem:[%s3243 + $0x10] sm:%s3233] %v3252
                %v3254 = vld [vmem:[%s3242 + $0x14] sm:%s3233]
                %3255 = vst [vmem:[%s3243 + $0x14] sm:%s3233] %v3254
                %v3256 = vld [vmem:[%s3242 + $0x18] sm:%s3233]
                %3257 = vst [vmem:[%s3243 + $0x18] sm:%s3233] %v3256
                %v3258 = vld [vmem:[%s3242 + $0x1c] sm:%s3233]
                %3259 = vst [vmem:[%s3243 + $0x1c] sm:%s3233] %v3258
                %v3260 = vld [vmem:[%s3242 + $0x20] sm:%s3233]
                %3261 = vst [vmem:[%s3243 + $0x20] sm:%s3233] %v3260
                %v3262 = vld [vmem:[%s3242 + $0x24] sm:%s3233]
                %3263 = vst [vmem:[%s3243 + $0x24] sm:%s3233] %v3262
                %v3264 = vld [vmem:[%s3242 + $0x28] sm:%s3233]
                %3265 = vst [vmem:[%s3243 + $0x28] sm:%s3233] %v3264
                %v3266 = vld [vmem:[%s3242 + $0x2c] sm:%s3233]
                %3267 = vst [vmem:[%s3243 + $0x2c] sm:%s3233] %v3266
                %v3268 = vld [vmem:[%s3242 + $0x30] sm:%s3233]
                %3269 = vst [vmem:[%s3243 + $0x30] sm:%s3233] %v3268
                %v3270 = vld [vmem:[%s3242 + $0x34] sm:%s3233]
                %3271 = vst [vmem:[%s3243 + $0x34] sm:%s3233] %v3270
                %v3272 = vld [vmem:[%s3242 + $0x38] sm:%s3233]
                %3273 = vst [vmem:[%s3243 + $0x38] sm:%s3233] %v3272
                %v3274 = vld [vmem:[%s3242 + $0x3c] sm:%s3233]
                %3275 = vst [vmem:[%s3243 + $0x3c] sm:%s3233] %v3274
                %v3276 = vld [vmem:[%s3242 + $0x40] sm:%s3233]
                %3277 = vst [vmem:[%s3243 + $0x40] sm:%s3233] %v3276
                %v3278 = vld [vmem:[%s3242 + $0x44] sm:%s3233]
                %3279 = vst [vmem:[%s3243 + $0x44] sm:%s3233] %v3278
                %v3280 = vld [vmem:[%s3242 + $0x48] sm:%s3233]
                %3281 = vst [vmem:[%s3243 + $0x48] sm:%s3233] %v3280
                %v3282 = vld [vmem:[%s3242 + $0x4c] sm:%s3233]
                %3283 = vst [vmem:[%s3243 + $0x4c] sm:%s3233] %v3282
                %v3284 = vld [vmem:[%s3242 + $0x50] sm:%s3233]
                %3285 = vst [vmem:[%s3243 + $0x50] sm:%s3233] %v3284
                %v3286 = vld [vmem:[%s3242 + $0x54] sm:%s3233]
                %3287 = vst [vmem:[%s3243 + $0x54] sm:%s3233] %v3286
                %v3288 = vld [vmem:[%s3242 + $0x58] sm:%s3233]
                %3289 = vst [vmem:[%s3243 + $0x58] sm:%s3233] %v3288
                %v3290 = vld [vmem:[%s3242 + $0x5c] sm:%s3233]
                %3291 = vst [vmem:[%s3243 + $0x5c] sm:%s3233] %v3290
                %v3292 = vld [vmem:[%s3242 + $0x60] sm:%s3233]
                %3293 = vst [vmem:[%s3243 + $0x60] sm:%s3233] %v3292
                %v3294 = vld [vmem:[%s3242 + $0x64] sm:%s3233]
                %3295 = vst [vmem:[%s3243 + $0x64] sm:%s3233] %v3294
                %v3296 = vld [vmem:[%s3242 + $0x68] sm:%s3233]
                %3297 = vst [vmem:[%s3243 + $0x68] sm:%s3233] %v3296
                %v3298 = vld [vmem:[%s3242 + $0x6c] sm:%s3233]
                %3299 = vst [vmem:[%s3243 + $0x6c] sm:%s3233] %v3298
                %v3300 = vld [vmem:[%s3242 + $0x70] sm:%s3233]
                %3301 = vst [vmem:[%s3243 + $0x70] sm:%s3233] %v3300
                %v3302 = vld [vmem:[%s3242 + $0x74] sm:%s3233]
                %3303 = vst [vmem:[%s3243 + $0x74] sm:%s3233] %v3302
                %v3304 = vld [vmem:[%s3242 + $0x78] sm:%s3233]
                %3305 = vst [vmem:[%s3243 + $0x78] sm:%s3233] %v3304
                %v3306 = vld [vmem:[%s3242 + $0x7c] sm:%s3233]
                %3307 = vst [vmem:[%s3243 + $0x7c] sm:%s3233] %v3306
                %v3308 = vld [vmem:[%s3242 + $0x80] sm:%s3233]
                %3309 = vst [vmem:[%s3243 + $0x80] sm:%s3233] %v3308
                %v3310 = vld [vmem:[%s3242 + $0x84] sm:%s3233]
                %3311 = vst [vmem:[%s3243 + $0x84] sm:%s3233] %v3310
                %v3312 = vld [vmem:[%s3242 + $0x88] sm:%s3233]
                %3313 = vst [vmem:[%s3243 + $0x88] sm:%s3233] %v3312
                %v3314 = vld [vmem:[%s3242 + $0x8c] sm:%s3233]
                %3315 = vst [vmem:[%s3243 + $0x8c] sm:%s3233] %v3314
                %v3316 = vld [vmem:[%s3242 + $0x90] sm:%s3233]
                %3317 = vst [vmem:[%s3243 + $0x90] sm:%s3233] %v3316
                %v3318 = vld [vmem:[%s3242 + $0x94] sm:%s3233]
                %3319 = vst [vmem:[%s3243 + $0x94] sm:%s3233] %v3318
                %v3320 = vld [vmem:[%s3242 + $0x98] sm:%s3233]
                %3321 = vst [vmem:[%s3243 + $0x98] sm:%s3233] %v3320
                %v3322 = vld [vmem:[%s3242 + $0x9c] sm:%s3233]
                %3323 = vst [vmem:[%s3243 + $0x9c] sm:%s3233] %v3322
                %v3324 = vld [vmem:[%s3242 + $0xa0] sm:%s3233]
                %3325 = vst [vmem:[%s3243 + $0xa0] sm:%s3233] %v3324
                %v3326 = vld [vmem:[%s3242 + $0xa4] sm:%s3233]
                %3327 = vst [vmem:[%s3243 + $0xa4] sm:%s3233] %v3326
                %v3328 = vld [vmem:[%s3242 + $0xa8] sm:%s3233]
                %3329 = vst [vmem:[%s3243 + $0xa8] sm:%s3233] %v3328
                %v3330 = vld [vmem:[%s3242 + $0xac] sm:%s3233]
                %3331 = vst [vmem:[%s3243 + $0xac] sm:%s3233] %v3330
                %v3332 = vld [vmem:[%s3242 + $0xb0] sm:%s3233]
                %3333 = vst [vmem:[%s3243 + $0xb0] sm:%s3233] %v3332
                %v3334 = vld [vmem:[%s3242 + $0xb4] sm:%s3233]
                %3335 = vst [vmem:[%s3243 + $0xb4] sm:%s3233] %v3334
                %v3336 = vld [vmem:[%s3242 + $0xb8] sm:%s3233]
                %3337 = vst [vmem:[%s3243 + $0xb8] sm:%s3233] %v3336
                %v3338 = vld [vmem:[%s3242 + $0xbc] sm:%s3233]
                %3339 = vst [vmem:[%s3243 + $0xbc] sm:%s3233] %v3338
                %v3340 = vld [vmem:[%s3242 + $0xc0] sm:%s3233]
                %3341 = vst [vmem:[%s3243 + $0xc0] sm:%s3233] %v3340
                %v3342 = vld [vmem:[%s3242 + $0xc4] sm:%s3233]
                %3343 = vst [vmem:[%s3243 + $0xc4] sm:%s3233] %v3342
                %v3344 = vld [vmem:[%s3242 + $0xc8] sm:%s3233]
                %3345 = vst [vmem:[%s3243 + $0xc8] sm:%s3233] %v3344
                %v3346 = vld [vmem:[%s3242 + $0xcc] sm:%s3233]
                %3347 = vst [vmem:[%s3243 + $0xcc] sm:%s3233] %v3346
                %v3348 = vld [vmem:[%s3242 + $0xd0] sm:%s3233]
                %3349 = vst [vmem:[%s3243 + $0xd0] sm:%s3233] %v3348
                %v3350 = vld [vmem:[%s3242 + $0xd4] sm:%s3233]
                %3351 = vst [vmem:[%s3243 + $0xd4] sm:%s3233] %v3350
                %v3352 = vld [vmem:[%s3242 + $0xd8] sm:%s3233]
                %3353 = vst [vmem:[%s3243 + $0xd8] sm:%s3233] %v3352
                %v3354 = vld [vmem:[%s3242 + $0xdc] sm:%s3233]
                %3355 = vst [vmem:[%s3243 + $0xdc] sm:%s3233] %v3354
                %v3356 = vld [vmem:[%s3242 + $0xe0] sm:%s3233]
                %3357 = vst [vmem:[%s3243 + $0xe0] sm:%s3233] %v3356
                %v3358 = vld [vmem:[%s3242 + $0xe4] sm:%s3233]
                %3359 = vst [vmem:[%s3243 + $0xe4] sm:%s3233] %v3358
                %v3360 = vld [vmem:[%s3242 + $0xe8] sm:%s3233]
                %3361 = vst [vmem:[%s3243 + $0xe8] sm:%s3233] %v3360
                %v3362 = vld [vmem:[%s3242 + $0xec] sm:%s3233]
                %3363 = vst [vmem:[%s3243 + $0xec] sm:%s3233] %v3362
                %v3364 = vld [vmem:[%s3242 + $0xf0] sm:%s3233]
                %3365 = vst [vmem:[%s3243 + $0xf0] sm:%s3233] %v3364
                %v3366 = vld [vmem:[%s3242 + $0xf4] sm:%s3233]
                %3367 = vst [vmem:[%s3243 + $0xf4] sm:%s3233] %v3366
                %v3368 = vld [vmem:[%s3242 + $0xf8] sm:%s3233]
                %3369 = vst [vmem:[%s3243 + $0xf8] sm:%s3233] %v3368
                %v3370 = vld [vmem:[%s3242 + $0xfc] sm:%s3233]
                %3371 = vst [vmem:[%s3243 + $0xfc] sm:%s3233] %v3370
                %s3372 = sadd.s32 1, %s3241
                %p3373 = scmp.ge.s32.totalorder %s3372, %s3234
                %s3374 = scalar_select %p3373, 0, %s3372
                %s3375 = smul.u32 %s3374, 256
                %s3376 = smul.u32 %s3374, 256
                %s3377 = scalar_lea.vmem %s3212, %s3375 [#allocation3]
                %s3378 = scalar_lea.vmem %s3224, %s3376
              $region65: #{conv2d_bn_act.1} parent=59 // loop_footer
                %s3238 = sadd.s32 %s3236, 1
              $region66: #{conv2d_bn_act.1} parent=59 // loop_footer_branch
                %3235 = sbr.rel target = $region62
              $region67: #{conv2d_bn_act.1} parent=59 // loop_exit
                _
              %s3379 = sshrl.u32 %s3219, 6
              %s3380 = sand.u32 %s3219, 63
              %s3381 = smul.u32 %s3379, 64
              %s3382 = smul.u32 4, %s3381
              %s3383 = scalar_lea.vmem %s3212, %s3382 [#allocation3]
              %s3384 = smul.u32 4, %s3381
              %s3385 = scalar_lea.vmem %s3224, %s3384
              // While loop
              $region68: #{conv2d_bn_act.1} parent=59 // loop_pre_header
                _
              $region69: #{conv2d_bn_act.1} parent=59 // loop_header
                %s3387 = sphi 0, %s3389
                %p3388 = scmp.ge.s32.totalorder %s3387, %s3380
                %s3392 = sphi 0, %s3399
                %s3393 = sphi %s3383, %s3402
                %s3394 = sphi %s3385, %s3403
              $region70: #{conv2d_bn_act.1} parent=59 // loop_header_branch
                %3391 = sbr.rel (%p3388) target = $region74
              $region71: #{conv2d_bn_act.1} parent=59 // loop_body
                %v3395 = vld [vmem:[%s3393] sm:%s3233]
                %3396 = vst [vmem:[%s3394] sm:%s3233] %v3395
                %s3397 = sadd.s32 1, %s3392
                %p3398 = scmp.ge.s32.totalorder %s3397, %s3380
                %s3399 = scalar_select %p3398, 0, %s3397
                %s3400 = smul.u32 %s3399, 4
                %s3401 = smul.u32 %s3399, 4
                %s3402 = scalar_lea.vmem %s3383, %s3400 [#allocation3]
                %s3403 = scalar_lea.vmem %s3385, %s3401
              $region72: #{conv2d_bn_act.1} parent=59 // loop_footer
                %s3389 = sadd.s32 %s3387, 1
              $region73: #{conv2d_bn_act.1} parent=59 // loop_footer_branch
                %3386 = sbr.rel target = $region69
              $region74: #{conv2d_bn_act.1} parent=59 // loop_exit
                _
            $region60: #{conv2d_bn_act.1} parent=51 // pred_fallthru
              _
          $region52: #{conv2d_bn_act.1} parent=47 // pred_fallthru
            _
          %3578 = vnop
        $region48: #{conv2d_bn_act.1} parent=35 // pred_fallthru
          _
      $region36: #{conv2d_bn_act.1} parent=5 // pred_fallthru
        _
      %p3579 = scmp.le.s32.totalorder 2, %s10
      // Predicated region
      $region93: #{conv2d_bn_act.1} parent=5 // pred_check
        %p3580 = pneg %p3579
      $region94: #{conv2d_bn_act.1} parent=5 // pred_check_branch
        %3582 = sbr.rel (%p3580) target = $region96
      $region95: #{conv2d_bn_act.1} parent=5 // pred_region
        %s3583 = ssub.s32 %s10, 2
        // Predicated region
        $region97: #{conv2d_bn_act.1} parent=95 // pred_check
          %p3584 = pneg %p168
        $region98: #{conv2d_bn_act.1} parent=95 // pred_check_branch
          %3586 = sbr.rel (%p3584) target = $region100
        $region99: #{conv2d_bn_act.1} parent=95 // pred_region
          %s3587 = sand.u32 %s153, 1
          %s3588 = sand.u32 %s153, 1
          %s3589 = smul.addr %s3588, 512
          %s3590 = scalar_lea.vmem [#allocation3], %s3589
        $region100: #{conv2d_bn_act.1} parent=95 // pred_fallthru
          _
      $region96: #{conv2d_bn_act.1} parent=5 // pred_fallthru
        _
    $region6: #{conv2d_bn_act.1} parent=1 // loop_footer
      %s14 = sadd.s32 1, %s10
    $region7: #{conv2d_bn_act.1} parent=1 // loop_footer_branch
      %9 = sbr.rel target = $region3
    $region8: #{conv2d_bn_act.1} parent=1 // loop_exit
      _

</llo_original>
